<compile_context>
chip_gen: v5e
topology: v5e:2x2
jax: 0.10.0
libtpu: 0.0.40
codegen_flags: <defaults>
</compile_context>

<pallas_src>
import math

import jax
import jax.numpy as jnp
from jax import lax
from jax.experimental import pallas as pl
from jax.experimental.pallas import tpu as pltpu  # noqa: F401  (imported for completeness)

# ---- small, deterministic hyper-parameters (consistent with HybridModel defaults) ----
B = 2                 # batch
S = 8                 # seq_len
F = 4                 # input_dim
D = 64                # d_model
NHEAD = 4
HD = D // NHEAD       # head dim = 16
DFF = 2048            # nn.TransformerEncoderLayer default dim_feedforward
LSTM_H = 32
NLAYERS = 2
LN_EPS = 1e-5
NEG_INF = -1e30       # masked-score fill (avoid -inf -> NaN corner cases)


# --------------------------- in-kernel helpers --------------------------------

def _add_layernorm(x, res, gamma, beta):
    y = x + res
    mu = jnp.mean(y, axis=-1, keepdims=True)
    var = jnp.mean(jnp.square(y - mu), axis=-1, keepdims=True)   # biased, like torch
    return (y - mu) * lax.rsqrt(var + LN_EPS) * gamma + beta


# --------------------------- fused forward kernel -----------------------------

def _fused_forward_kernel(
    x_ref,                             # (S*B, F) f32, time-major rows: row = t*B + b
    emb_w_ref, emb_b_ref,              # (F, D) bf16, (1, D) f32
    in_w_ref, in_b_ref,                # (NL, D, 3D) bf16, (NL, 1, 3D) f32
    out_w_ref, out_b_ref,              # (NL, D, D) bf16,  (NL, 1, D) f32
    ln1_g_ref, ln1_b_ref,              # (NL, 1, D) f32
    ff1_w_ref, ff1_b_ref,              # (NL, D, DFF) bf16, (NL, 1, DFF) f32
    ff2_w_ref, ff2_b_ref,              # (NL, DFF, D) bf16, (NL, 1, D) f32
    wih_ref, lstm_b_ref, whh_ref,      # (D, 4H) bf16, (1, 4H) f32, (H, 4H) bf16
    ln2_g_ref, ln2_b_ref,              # (placed later in call order below — see wrapper)
    fc_w_ref, fc_b_ref,                # (H, 1) bf16, (1, 1) f32
    o_ref,                             # (B, 1) f32
):
    # NOTE: argument order must match the `weights` tuple in hybrid_forward.
    del ln2_g_ref  # placeholder names fixed below (see real signature ordering)


# Real kernel (explicit, correct argument order — kept separate from the docstring-ish stub
# above to avoid any confusion; this is the function actually passed to pallas_call).
def _kernel(
    x_ref,
    emb_w_ref, emb_b_ref,
    in_w_ref, in_b_ref,
    out_w_ref, out_b_ref,
    ln1_g_ref, ln1_b_ref,
    ff1_w_ref, ff1_b_ref,
    ff2_w_ref, ff2_b_ref,
    ln2_g_ref, ln2_b_ref,
    wih_ref, lstm_b_ref, whh_ref,
    fc_w_ref, fc_b_ref,
    o_ref,
):
    N = S * B
    scale = 1.0 / math.sqrt(HD)
    bf16 = jnp.bfloat16

    # static batch-membership mask (time-major rows: batch id = row % B)
    row_b = lax.broadcasted_iota(jnp.int32, (N, N), 0) % B
    col_b = lax.broadcasted_iota(jnp.int32, (N, N), 1) % B
    same_batch = row_b == col_b                                            # (N, N) bool

    # ---- embedding ----
    h = (jnp.dot(x_ref[...].astype(bf16), emb_w_ref[...],
                 preferred_element_type=jnp.float32) + emb_b_ref[...])     # (N, D) f32

    # ---- transformer encoder layers (post-norm, ReLU FF, eval-mode dropout = identity) ----
    for li in range(NLAYERS):
        qkv = (jnp.dot(h.astype(bf16), in_w_ref[li],
                       preferred_element_type=jnp.float32) + in_b_ref[li])  # (N, 3D) f32
        heads = []
        for hh in range(NHEAD):
            q = qkv[:, hh * HD:(hh + 1) * HD].astype(bf16)                 # (N, HD)
            k = qkv[:, D + hh * HD:D + (hh + 1) * HD].astype(bf16)
            v = qkv[:, 2 * D + hh * HD:2 * D + (hh + 1) * HD].astype(bf16)
            # contract on the last dim of both operands (no explicit k.T transpose)
            s = lax.dot_general(q, k, (((1,), (1,)), ((), ())),
                                preferred_element_type=jnp.float32) * scale  # (N, N) f32
            s = jnp.where(same_batch, s, NEG_INF)                          # block-diag softmax
            m = jnp.max(s, axis=-1, keepdims=True)
            p = jnp.exp(s - m)
            p = p * pl.reciprocal(jnp.sum(p, axis=-1, keepdims=True), approx=True)
            heads.append(jnp.dot(p.astype(bf16), v,
                                 preferred_element_type=jnp.float32))       # (N, HD) f32
        attn = jnp.concatenate(heads, axis=-1)                             # (N, D) f32
        attn = (jnp.dot(attn.astype(bf16), out_w_ref[li],
                        preferred_element_type=jnp.float32) + out_b_ref[li])
        h = _add_layernorm(h, attn, ln1_g_ref[li], ln1_b_ref[li])

        ff = (jnp.dot(h.astype(bf16), ff1_w_ref[li],
                      preferred_element_type=jnp.float32) + ff1_b_ref[li])  # (N, DFF)
        ff = jnp.maximum(ff, 0.0)
        ff = (jnp.dot(ff.astype(bf16), ff2_w_ref[li],
                      preferred_element_type=jnp.float32) + ff2_b_ref[li])  # (N, D)
        h = _add_layernorm(h, ff, ln2_g_ref[li], ln2_b_ref[li])

    # ---- LSTM (single layer, batched over B, time-major sequence) ----
    gx = (jnp.dot(h.astype(bf16), wih_ref[...],
                  preferred_element_type=jnp.float32) + lstm_b_ref[...])    # (N, 4H) f32
    whh = whh_ref[...]                                                      # (H, 4H) bf16
    hc = jnp.zeros((B, LSTM_H), jnp.float32)
    cc = jnp.zeros((B, LSTM_H), jnp.float32)
    for t in range(S):                                   # statically unrolled recurrence
        g = gx[t * B:(t + 1) * B, :] + jnp.dot(hc.astype(bf16), whh,
                                               preferred_element_type=jnp.float32)  # (B, 4H)
        sg = jax.nn.sigmoid(g)                           # single 128-lane EUP logistic
        i_g = sg[:, 0 * LSTM_H:1 * LSTM_H]               # PyTorch gate order: i, f, g, o
        f_g = sg[:, 1 * LSTM_H:2 * LSTM_H]
        o_g = sg[:, 3 * LSTM_H:4 * LSTM_H]
        g_g = jnp.tanh(g[:, 2 * LSTM_H:3 * LSTM_H])
        cc = f_g * cc + i_g * g_g
        hc = o_g * jnp.tanh(cc)

    # ---- final fc on h_n[-1] ----
    y = (jnp.dot(hc.astype(bf16), fc_w_ref[...],
                 preferred_element_type=jnp.float32) + fc_b_ref[...])       # (B, 1)
    o_ref[...] = y


# --------------------------- wrapper -------------------------------------------

def hybrid_forward(params, x):
    Bb, Ss, Ff = x.shape
    # time-major row layout: row = t*B + b  (tiny reshape, done once in XLA)
    x_tm = jnp.transpose(x, (1, 0, 2)).reshape(Ss * Bb, Ff)

    weights = (
        params["emb_w"], params["emb_b"],
        params["in_w"], params["in_b"],
        params["out_w"], params["out_b"],
        params["ln1_g"], params["ln1_b"],
        params["ff1_w"], params["ff1_b"],
        params["ff2_w"], params["ff2_b"],
        params["ln2_g"], params["ln2_b"],
        params["lstm_wih"], params["lstm_b"], params["lstm_whh"],
        params["fc_w"], params["fc_b"],
    )

    # ---- advisory cost estimate (latency-dominated custom call) ----
    N = Ss * Bb
    flops = 2 * N * Ff * D                                        # embed
    flops += NLAYERS * (2 * N * D * 3 * D)                        # qkv
    flops += NLAYERS * NHEAD * (2 * N * N * HD) * 2               # scores + PV
    flops += NLAYERS * (2 * N * D * D)                            # out-proj
    flops += NLAYERS * (2 * N * D * DFF + 2 * N * DFF * D)        # FFN
    flops += 2 * N * D * 4 * LSTM_H                               # lstm input
    flops += Ss * (2 * Bb * LSTM_H * 4 * LSTM_H)                  # lstm recurrence
    flops += 2 * Bb * LSTM_H                                      # fc
    transc = NLAYERS * NHEAD * N * N + Ss * Bb * (4 * LSTM_H + 2 * LSTM_H)
    bytes_acc = sum(int(w.size) * w.dtype.itemsize for w in weights)
    bytes_acc += int(x_tm.size) * 4 + Bb * 4

    out = pl.pallas_call(
        _kernel,
        out_shape=jax.ShapeDtypeStruct((Bb, 1), jnp.float32),
        cost_estimate=pl.CostEstimate(flops=int(flops),
                                      transcendentals=int(transc),
                                      bytes_accessed=int(bytes_acc)),
    )(x_tm, *weights)
    return out


# --------------------------- parameters ----------------------------------------

def init_params(key):
    keys = jax.random.split(key, 8)

    def lin(k, fan_in, fan_out):
        k1, k2 = jax.random.split(k)
        bound = 1.0 / math.sqrt(fan_in)
        w = jax.random.uniform(k1, (fan_in, fan_out), jnp.float32, -bound, bound)
        b = jax.random.uniform(k2, (fan_out,), jnp.float32, -bound, bound)
        return w, b

    emb_w, emb_b = lin(keys[0], F, D)

    in_ws, in_bs, out_ws, out_bs = [], [], [], []
    ff1_ws, ff1_bs, ff2_ws, ff2_bs = [], [], [], []
    for li in range(NLAYERS):
        lk = jax.random.split(keys[1 + li], 4)
        w, b_ = lin(lk[0], D, 3 * D);   in_ws.append(w);  in_bs.append(b_.reshape(1, 3 * D))
        w, b_ = lin(lk[1], D, D);       out_ws.append(w); out_bs.append(b_.reshape(1, D))
        w, b_ = lin(lk[2], D, DFF);     ff1_ws.append(w); ff1_bs.append(b_.reshape(1, DFF))
        w, b_ = lin(lk[3], DFF, D);     ff2_ws.append(w); ff2_bs.append(b_.reshape(1, D))

    lk = jax.random.split(keys[1 + NLAYERS], 2)
    wih, bih = lin(lk[0], D, 4 * LSTM_H)
    whh, bhh = lin(lk[1], LSTM_H, 4 * LSTM_H)

    fc_w, fc_b = lin(keys[2 + NLAYERS], LSTM_H, 1)

    bf = lambda a: a.astype(jnp.bfloat16)    # matmul weights in bf16 (accum stays f32)
    ones = jnp.ones((NLAYERS, 1, D), jnp.float32)
    zeros = jnp.zeros((NLAYERS, 1, D), jnp.float32)

    return dict(
        emb_w=bf(emb_w), emb_b=emb_b.reshape(1, D),
        in_w=bf(jnp.stack(in_ws)), in_b=jnp.stack(in_bs),
        out_w=bf(jnp.stack(out_ws)), out_b=jnp.stack(out_bs),
        ln1_g=ones, ln1_b=zeros,
        ff1_w=bf(jnp.stack(ff1_ws)), ff1_b=jnp.stack(ff1_bs),
        ff2_w=bf(jnp.stack(ff2_ws)), ff2_b=jnp.stack(ff2_bs),
        ln2_g=ones, ln2_b=zeros,
        lstm_wih=bf(wih), lstm_b=(bih + bhh).reshape(1, 4 * LSTM_H), lstm_whh=bf(whh),
        fc_w=bf(fc_w), fc_b=fc_b.reshape(1, 1),
    )


# --------------------------- main ----------------------------------------------

if __name__ == "__main__":
    key = jax.random.PRNGKey(0)
    kp, kx = jax.random.split(key)
    params = init_params(kp)
    x = jax.random.normal(kx, (B, S, F), jnp.float32)

    fwd = jax.jit(hybrid_forward)
    out = fwd(params, x)
    jax.block_until_ready(out)

    assert out.shape == (B, 1), out.shape
    assert bool(jnp.all(jnp.isfinite(out)))
    print("KERNEL_OK")
</pallas_src>

<mosaic_0001>
module attributes {stable_mosaic.version = 11 : i64} {
  func.func @_kernel(%arg0: memref<16x4xf32, #tpu.memory_space<vmem>>, %arg1: memref<4x64xbf16, #tpu.memory_space<vmem>>, %arg2: memref<1x64xf32, #tpu.memory_space<vmem>>, %arg3: memref<2x64x192xbf16, #tpu.memory_space<vmem>>, %arg4: memref<2x1x192xf32, #tpu.memory_space<vmem>>, %arg5: memref<2x64x64xbf16, #tpu.memory_space<vmem>>, %arg6: memref<2x1x64xf32, #tpu.memory_space<vmem>>, %arg7: memref<2x1x64xf32, #tpu.memory_space<vmem>>, %arg8: memref<2x1x64xf32, #tpu.memory_space<vmem>>, %arg9: memref<2x64x2048xbf16, #tpu.memory_space<vmem>>, %arg10: memref<2x1x2048xf32, #tpu.memory_space<vmem>>, %arg11: memref<2x2048x64xbf16, #tpu.memory_space<vmem>>, %arg12: memref<2x1x64xf32, #tpu.memory_space<vmem>>, %arg13: memref<2x1x64xf32, #tpu.memory_space<vmem>>, %arg14: memref<2x1x64xf32, #tpu.memory_space<vmem>>, %arg15: memref<64x128xbf16, #tpu.memory_space<vmem>>, %arg16: memref<1x128xf32, #tpu.memory_space<vmem>>, %arg17: memref<32x128xbf16, #tpu.memory_space<vmem>>, %arg18: memref<32x1xbf16, #tpu.memory_space<vmem>>, %arg19: memref<1x1xf32, #tpu.memory_space<vmem>>, %arg20: memref<2x1xf32, #tpu.memory_space<vmem>>) attributes {dimension_semantics = [], scalar_prefetch = 0 : i64, scratch_operands = 0 : i64, tpu.core_type = #tpu.core_type<tc>} {
    %0 = tpu.iota {dimensions = array<i32: 0>} : vector<16x16xi32>
    %c2_i32 = arith.constant 2 : i32
    %c0_i32 = arith.constant 0 : i32
    %1 = arith.cmpi eq, %c2_i32, %c0_i32 : i32
    %c1_i32 = arith.constant 1 : i32
    %2 = arith.select %1, %c1_i32, %c2_i32 : i32
    %3 = vector.broadcast %2 : i32 to vector<16x16xi32>
    %4 = arith.remsi %0, %3 : vector<16x16xi32>
    %c0_i32_0 = arith.constant 0 : i32
    %5 = vector.broadcast %c0_i32_0 : i32 to vector<16x16xi32>
    %6 = arith.cmpi ne, %4, %5 : vector<16x16xi32>
    %c0_i32_1 = arith.constant 0 : i32
    %7 = vector.broadcast %c0_i32_1 : i32 to vector<16x16xi32>
    %8 = arith.cmpi slt, %4, %7 : vector<16x16xi32>
    %c0_i32_2 = arith.constant 0 : i32
    %9 = arith.cmpi slt, %2, %c0_i32_2 : i32
    %10 = vector.broadcast %9 : i1 to vector<16x16xi1>
    %11 = vector.broadcast %10 : vector<16x16xi1> to vector<16x16xi1>
    %12 = arith.xori %8, %11 : vector<16x16xi1>
    %13 = arith.andi %12, %6 : vector<16x16xi1>
    %14 = vector.broadcast %2 : i32 to vector<16x16xi32>
    %15 = arith.addi %4, %14 : vector<16x16xi32>
    %16 = arith.select %13, %15, %4 : vector<16x16xi1>, vector<16x16xi32>
    %17 = tpu.iota {dimensions = array<i32: 1>} : vector<16x16xi32>
    %c2_i32_3 = arith.constant 2 : i32
    %c0_i32_4 = arith.constant 0 : i32
    %18 = arith.cmpi eq, %c2_i32_3, %c0_i32_4 : i32
    %c1_i32_5 = arith.constant 1 : i32
    %19 = arith.select %18, %c1_i32_5, %c2_i32_3 : i32
    %20 = vector.broadcast %19 : i32 to vector<16x16xi32>
    %21 = arith.remsi %17, %20 : vector<16x16xi32>
    %c0_i32_6 = arith.constant 0 : i32
    %22 = vector.broadcast %c0_i32_6 : i32 to vector<16x16xi32>
    %23 = arith.cmpi ne, %21, %22 : vector<16x16xi32>
    %c0_i32_7 = arith.constant 0 : i32
    %24 = vector.broadcast %c0_i32_7 : i32 to vector<16x16xi32>
    %25 = arith.cmpi slt, %21, %24 : vector<16x16xi32>
    %c0_i32_8 = arith.constant 0 : i32
    %26 = arith.cmpi slt, %19, %c0_i32_8 : i32
    %27 = vector.broadcast %26 : i1 to vector<16x16xi1>
    %28 = vector.broadcast %27 : vector<16x16xi1> to vector<16x16xi1>
    %29 = arith.xori %25, %28 : vector<16x16xi1>
    %30 = arith.andi %29, %23 : vector<16x16xi1>
    %31 = vector.broadcast %19 : i32 to vector<16x16xi32>
    %32 = arith.addi %21, %31 : vector<16x16xi32>
    %33 = arith.select %30, %32, %21 : vector<16x16xi1>, vector<16x16xi32>
    %34 = arith.cmpi eq, %16, %33 : vector<16x16xi32>
    %c0 = arith.constant 0 : index
    %c0_9 = arith.constant 0 : index
    %35 = vector.load %arg0[%c0, %c0_9] : memref<16x4xf32, #tpu.memory_space<vmem>>, vector<16x4xf32>
    %36 = arith.truncf %35 : vector<16x4xf32> to vector<16x4xbf16>
    %c0_10 = arith.constant 0 : index
    %c0_11 = arith.constant 0 : index
    %37 = vector.load %arg1[%c0_10, %c0_11] : memref<4x64xbf16, #tpu.memory_space<vmem>>, vector<4x64xbf16>
    %cst = arith.constant dense<0.000000e+00> : vector<16x64xf32>
    %38 = tpu.matmul %36, %37, %cst {dimension_numbers = #tpu.dot_dimension_numbers<[1], [0], [0], [1], [0, 0, 1, 1], [], []>} : vector<16x4xbf16>, vector<4x64xbf16>, vector<16x64xf32> -> vector<16x64xf32>
    %c0_12 = arith.constant 0 : index
    %c0_13 = arith.constant 0 : index
    %39 = vector.load %arg2[%c0_12, %c0_13] : memref<1x64xf32, #tpu.memory_space<vmem>>, vector<1x64xf32>
    %40 = vector.broadcast %39 : vector<1x64xf32> to vector<16x64xf32>
    %41 = arith.addf %38, %40 : vector<16x64xf32>
    %42 = arith.truncf %41 : vector<16x64xf32> to vector<16x64xbf16>
    %c0_14 = arith.constant 0 : index
    %c0_15 = arith.constant 0 : index
    %c0_16 = arith.constant 0 : index
    %43 = vector.load %arg3[%c0_14, %c0_15, %c0_16] : memref<2x64x192xbf16, #tpu.memory_space<vmem>>, vector<1x64x192xbf16>
    %44 = vector.shape_cast %43 : vector<1x64x192xbf16> to vector<64x192xbf16>
    %cst_17 = arith.constant dense<0.000000e+00> : vector<16x192xf32>
    %45 = tpu.matmul %42, %44, %cst_17 {dimension_numbers = #tpu.dot_dimension_numbers<[1], [0], [0], [1], [0, 0, 1, 1], [], []>} : vector<16x64xbf16>, vector<64x192xbf16>, vector<16x192xf32> -> vector<16x192xf32>
    %c0_18 = arith.constant 0 : index
    %c0_19 = arith.constant 0 : index
    %c0_20 = arith.constant 0 : index
    %46 = vector.load %arg4[%c0_18, %c0_19, %c0_20] : memref<2x1x192xf32, #tpu.memory_space<vmem>>, vector<1x1x192xf32>
    %47 = vector.shape_cast %46 : vector<1x1x192xf32> to vector<1x192xf32>
    %48 = vector.broadcast %47 : vector<1x192xf32> to vector<16x192xf32>
    %49 = arith.addf %45, %48 : vector<16x192xf32>
    %50 = vector.extract_strided_slice %49 {offsets = [0, 0], sizes = [16, 16], strides = [1, 1]} : vector<16x192xf32> to vector<16x16xf32>
    %51 = arith.truncf %50 : vector<16x16xf32> to vector<16x16xbf16>
    %52 = vector.extract_strided_slice %49 {offsets = [0, 64], sizes = [16, 16], strides = [1, 1]} : vector<16x192xf32> to vector<16x16xf32>
    %53 = arith.truncf %52 : vector<16x16xf32> to vector<16x16xbf16>
    %54 = vector.extract_strided_slice %49 {offsets = [0, 128], sizes = [16, 16], strides = [1, 1]} : vector<16x192xf32> to vector<16x16xf32>
    %55 = arith.truncf %54 : vector<16x16xf32> to vector<16x16xbf16>
    %cst_21 = arith.constant dense<0.000000e+00> : vector<16x16xf32>
    %56 = tpu.matmul %51, %53, %cst_21 {dimension_numbers = #tpu.dot_dimension_numbers<[1], [1], [0], [0], [0, 0, 1, 0], [], []>} : vector<16x16xbf16>, vector<16x16xbf16>, vector<16x16xf32> -> vector<16x16xf32>
    %cst_22 = arith.constant 2.500000e-01 : f32
    %57 = vector.broadcast %cst_22 : f32 to vector<16x16xf32>
    %58 = arith.mulf %56, %57 : vector<16x16xf32>
    %cst_23 = arith.constant -1.000000e+30 : f32
    %59 = vector.broadcast %cst_23 : f32 to vector<16x16xf32>
    %60 = arith.select %34, %58, %59 : vector<16x16xi1>, vector<16x16xf32>
    %cst_24 = arith.constant dense<0xFF800000> : vector<16xf32>
    %61 = vector.multi_reduction <maximumf>, %60, %cst_24 [1] : vector<16x16xf32> to vector<16xf32>
    %62 = vector.shape_cast %61 : vector<16xf32> to vector<16x1xf32>
    %63 = vector.broadcast %62 : vector<16x1xf32> to vector<16x16xf32>
    %64 = arith.subf %60, %63 : vector<16x16xf32>
    %65 = math.exp %64 : vector<16x16xf32>
    %cst_25 = arith.constant dense<0.000000e+00> : vector<16xf32>
    %66 = vector.multi_reduction <add>, %65, %cst_25 [1] : vector<16x16xf32> to vector<16xf32>
    %67 = vector.shape_cast %66 : vector<16xf32> to vector<16x1xf32>
    %68 = tpu.reciprocal %67 {approx = true} : vector<16x1xf32> -> vector<16x1xf32>
    %69 = vector.broadcast %68 : vector<16x1xf32> to vector<16x16xf32>
    %70 = arith.mulf %65, %69 : vector<16x16xf32>
    %71 = arith.truncf %70 : vector<16x16xf32> to vector<16x16xbf16>
    %cst_26 = arith.constant dense<0.000000e+00> : vector<16x16xf32>
    %72 = tpu.matmul %71, %55, %cst_26 {dimension_numbers = #tpu.dot_dimension_numbers<[1], [0], [0], [1], [0, 0, 1, 1], [], []>} : vector<16x16xbf16>, vector<16x16xbf16>, vector<16x16xf32> -> vector<16x16xf32>
    %73 = vector.extract_strided_slice %49 {offsets = [0, 16], sizes = [16, 16], strides = [1, 1]} : vector<16x192xf32> to vector<16x16xf32>
    %74 = arith.truncf %73 : vector<16x16xf32> to vector<16x16xbf16>
    %75 = vector.extract_strided_slice %49 {offsets = [0, 80], sizes = [16, 16], strides = [1, 1]} : vector<16x192xf32> to vector<16x16xf32>
    %76 = arith.truncf %75 : vector<16x16xf32> to vector<16x16xbf16>
    %77 = vector.extract_strided_slice %49 {offsets = [0, 144], sizes = [16, 16], strides = [1, 1]} : vector<16x192xf32> to vector<16x16xf32>
    %78 = arith.truncf %77 : vector<16x16xf32> to vector<16x16xbf16>
    %cst_27 = arith.constant dense<0.000000e+00> : vector<16x16xf32>
    %79 = tpu.matmul %74, %76, %cst_27 {dimension_numbers = #tpu.dot_dimension_numbers<[1], [1], [0], [0], [0, 0, 1, 0], [], []>} : vector<16x16xbf16>, vector<16x16xbf16>, vector<16x16xf32> -> vector<16x16xf32>
    %cst_28 = arith.constant 2.500000e-01 : f32
    %80 = vector.broadcast %cst_28 : f32 to vector<16x16xf32>
    %81 = arith.mulf %79, %80 : vector<16x16xf32>
    %cst_29 = arith.constant -1.000000e+30 : f32
    %82 = vector.broadcast %cst_29 : f32 to vector<16x16xf32>
    %83 = arith.select %34, %81, %82 : vector<16x16xi1>, vector<16x16xf32>
    %cst_30 = arith.constant dense<0xFF800000> : vector<16xf32>
    %84 = vector.multi_reduction <maximumf>, %83, %cst_30 [1] : vector<16x16xf32> to vector<16xf32>
    %85 = vector.shape_cast %84 : vector<16xf32> to vector<16x1xf32>
    %86 = vector.broadcast %85 : vector<16x1xf32> to vector<16x16xf32>
    %87 = arith.subf %83, %86 : vector<16x16xf32>
    %88 = math.exp %87 : vector<16x16xf32>
    %cst_31 = arith.constant dense<0.000000e+00> : vector<16xf32>
    %89 = vector.multi_reduction <add>, %88, %cst_31 [1] : vector<16x16xf32> to vector<16xf32>
    %90 = vector.shape_cast %89 : vector<16xf32> to vector<16x1xf32>
    %91 = tpu.reciprocal %90 {approx = true} : vector<16x1xf32> -> vector<16x1xf32>
    %92 = vector.broadcast %91 : vector<16x1xf32> to vector<16x16xf32>
    %93 = arith.mulf %88, %92 : vector<16x16xf32>
    %94 = arith.truncf %93 : vector<16x16xf32> to vector<16x16xbf16>
    %cst_32 = arith.constant dense<0.000000e+00> : vector<16x16xf32>
    %95 = tpu.matmul %94, %78, %cst_32 {dimension_numbers = #tpu.dot_dimension_numbers<[1], [0], [0], [1], [0, 0, 1, 1], [], []>} : vector<16x16xbf16>, vector<16x16xbf16>, vector<16x16xf32> -> vector<16x16xf32>
    %96 = vector.extract_strided_slice %49 {offsets = [0, 32], sizes = [16, 16], strides = [1, 1]} : vector<16x192xf32> to vector<16x16xf32>
    %97 = arith.truncf %96 : vector<16x16xf32> to vector<16x16xbf16>
    %98 = vector.extract_strided_slice %49 {offsets = [0, 96], sizes = [16, 16], strides = [1, 1]} : vector<16x192xf32> to vector<16x16xf32>
    %99 = arith.truncf %98 : vector<16x16xf32> to vector<16x16xbf16>
    %100 = vector.extract_strided_slice %49 {offsets = [0, 160], sizes = [16, 16], strides = [1, 1]} : vector<16x192xf32> to vector<16x16xf32>
    %101 = arith.truncf %100 : vector<16x16xf32> to vector<16x16xbf16>
    %cst_33 = arith.constant dense<0.000000e+00> : vector<16x16xf32>
    %102 = tpu.matmul %97, %99, %cst_33 {dimension_numbers = #tpu.dot_dimension_numbers<[1], [1], [0], [0], [0, 0, 1, 0], [], []>} : vector<16x16xbf16>, vector<16x16xbf16>, vector<16x16xf32> -> vector<16x16xf32>
    %cst_34 = arith.constant 2.500000e-01 : f32
    %103 = vector.broadcast %cst_34 : f32 to vector<16x16xf32>
    %104 = arith.mulf %102, %103 : vector<16x16xf32>
    %cst_35 = arith.constant -1.000000e+30 : f32
    %105 = vector.broadcast %cst_35 : f32 to vector<16x16xf32>
    %106 = arith.select %34, %104, %105 : vector<16x16xi1>, vector<16x16xf32>
    %cst_36 = arith.constant dense<0xFF800000> : vector<16xf32>
    %107 = vector.multi_reduction <maximumf>, %106, %cst_36 [1] : vector<16x16xf32> to vector<16xf32>
    %108 = vector.shape_cast %107 : vector<16xf32> to vector<16x1xf32>
    %109 = vector.broadcast %108 : vector<16x1xf32> to vector<16x16xf32>
    %110 = arith.subf %106, %109 : vector<16x16xf32>
    %111 = math.exp %110 : vector<16x16xf32>
    %cst_37 = arith.constant dense<0.000000e+00> : vector<16xf32>
    %112 = vector.multi_reduction <add>, %111, %cst_37 [1] : vector<16x16xf32> to vector<16xf32>
    %113 = vector.shape_cast %112 : vector<16xf32> to vector<16x1xf32>
    %114 = tpu.reciprocal %113 {approx = true} : vector<16x1xf32> -> vector<16x1xf32>
    %115 = vector.broadcast %114 : vector<16x1xf32> to vector<16x16xf32>
    %116 = arith.mulf %111, %115 : vector<16x16xf32>
    %117 = arith.truncf %116 : vector<16x16xf32> to vector<16x16xbf16>
    %cst_38 = arith.constant dense<0.000000e+00> : vector<16x16xf32>
    %118 = tpu.matmul %117, %101, %cst_38 {dimension_numbers = #tpu.dot_dimension_numbers<[1], [0], [0], [1], [0, 0, 1, 1], [], []>} : vector<16x16xbf16>, vector<16x16xbf16>, vector<16x16xf32> -> vector<16x16xf32>
    %119 = vector.extract_strided_slice %49 {offsets = [0, 48], sizes = [16, 16], strides = [1, 1]} : vector<16x192xf32> to vector<16x16xf32>
    %120 = arith.truncf %119 : vector<16x16xf32> to vector<16x16xbf16>
    %121 = vector.extract_strided_slice %49 {offsets = [0, 112], sizes = [16, 16], strides = [1, 1]} : vector<16x192xf32> to vector<16x16xf32>
    %122 = arith.truncf %121 : vector<16x16xf32> to vector<16x16xbf16>
    %123 = vector.extract_strided_slice %49 {offsets = [0, 176], sizes = [16, 16], strides = [1, 1]} : vector<16x192xf32> to vector<16x16xf32>
    %124 = arith.truncf %123 : vector<16x16xf32> to vector<16x16xbf16>
    %cst_39 = arith.constant dense<0.000000e+00> : vector<16x16xf32>
    %125 = tpu.matmul %120, %122, %cst_39 {dimension_numbers = #tpu.dot_dimension_numbers<[1], [1], [0], [0], [0, 0, 1, 0], [], []>} : vector<16x16xbf16>, vector<16x16xbf16>, vector<16x16xf32> -> vector<16x16xf32>
    %cst_40 = arith.constant 2.500000e-01 : f32
    %126 = vector.broadcast %cst_40 : f32 to vector<16x16xf32>
    %127 = arith.mulf %125, %126 : vector<16x16xf32>
    %cst_41 = arith.constant -1.000000e+30 : f32
    %128 = vector.broadcast %cst_41 : f32 to vector<16x16xf32>
    %129 = arith.select %34, %127, %128 : vector<16x16xi1>, vector<16x16xf32>
    %cst_42 = arith.constant dense<0xFF800000> : vector<16xf32>
    %130 = vector.multi_reduction <maximumf>, %129, %cst_42 [1] : vector<16x16xf32> to vector<16xf32>
    %131 = vector.shape_cast %130 : vector<16xf32> to vector<16x1xf32>
    %132 = vector.broadcast %131 : vector<16x1xf32> to vector<16x16xf32>
    %133 = arith.subf %129, %132 : vector<16x16xf32>
    %134 = math.exp %133 : vector<16x16xf32>
    %cst_43 = arith.constant dense<0.000000e+00> : vector<16xf32>
    %135 = vector.multi_reduction <add>, %134, %cst_43 [1] : vector<16x16xf32> to vector<16xf32>
    %136 = vector.shape_cast %135 : vector<16xf32> to vector<16x1xf32>
    %137 = tpu.reciprocal %136 {approx = true} : vector<16x1xf32> -> vector<16x1xf32>
    %138 = vector.broadcast %137 : vector<16x1xf32> to vector<16x16xf32>
    %139 = arith.mulf %134, %138 : vector<16x16xf32>
    %140 = arith.truncf %139 : vector<16x16xf32> to vector<16x16xbf16>
    %cst_44 = arith.constant dense<0.000000e+00> : vector<16x16xf32>
    %141 = tpu.matmul %140, %124, %cst_44 {dimension_numbers = #tpu.dot_dimension_numbers<[1], [0], [0], [1], [0, 0, 1, 1], [], []>} : vector<16x16xbf16>, vector<16x16xbf16>, vector<16x16xf32> -> vector<16x16xf32>
    %142 = tpu.concatenate %72, %95, %118, %141 in 1 : vector<16x16xf32>, vector<16x16xf32>, vector<16x16xf32>, vector<16x16xf32> -> vector<16x64xf32>
    %143 = arith.truncf %142 : vector<16x64xf32> to vector<16x64xbf16>
    %c0_45 = arith.constant 0 : index
    %c0_46 = arith.constant 0 : index
    %c0_47 = arith.constant 0 : index
    %144 = vector.load %arg5[%c0_45, %c0_46, %c0_47] : memref<2x64x64xbf16, #tpu.memory_space<vmem>>, vector<1x64x64xbf16>
    %145 = vector.shape_cast %144 : vector<1x64x64xbf16> to vector<64x64xbf16>
    %cst_48 = arith.constant dense<0.000000e+00> : vector<16x64xf32>
    %146 = tpu.matmul %143, %145, %cst_48 {dimension_numbers = #tpu.dot_dimension_numbers<[1], [0], [0], [1], [0, 0, 1, 1], [], []>} : vector<16x64xbf16>, vector<64x64xbf16>, vector<16x64xf32> -> vector<16x64xf32>
    %c0_49 = arith.constant 0 : index
    %c0_50 = arith.constant 0 : index
    %c0_51 = arith.constant 0 : index
    %147 = vector.load %arg6[%c0_49, %c0_50, %c0_51] : memref<2x1x64xf32, #tpu.memory_space<vmem>>, vector<1x1x64xf32>
    %148 = vector.shape_cast %147 : vector<1x1x64xf32> to vector<1x64xf32>
    %149 = vector.broadcast %148 : vector<1x64xf32> to vector<16x64xf32>
    %150 = arith.addf %146, %149 : vector<16x64xf32>
    %c0_52 = arith.constant 0 : index
    %c0_53 = arith.constant 0 : index
    %c0_54 = arith.constant 0 : index
    %151 = vector.load %arg7[%c0_52, %c0_53, %c0_54] : memref<2x1x64xf32, #tpu.memory_space<vmem>>, vector<1x1x64xf32>
    %152 = vector.shape_cast %151 : vector<1x1x64xf32> to vector<1x64xf32>
    %c0_55 = arith.constant 0 : index
    %c0_56 = arith.constant 0 : index
    %c0_57 = arith.constant 0 : index
    %153 = vector.load %arg8[%c0_55, %c0_56, %c0_57] : memref<2x1x64xf32, #tpu.memory_space<vmem>>, vector<1x1x64xf32>
    %154 = vector.shape_cast %153 : vector<1x1x64xf32> to vector<1x64xf32>
    %155 = arith.addf %41, %150 : vector<16x64xf32>
    %cst_58 = arith.constant dense<0.000000e+00> : vector<16xf32>
    %156 = vector.multi_reduction <add>, %155, %cst_58 [1] : vector<16x64xf32> to vector<16xf32>
    %157 = vector.shape_cast %156 : vector<16xf32> to vector<16x1xf32>
    %cst_59 = arith.constant 6.400000e+01 : f32
    %158 = vector.broadcast %cst_59 : f32 to vector<16x1xf32>
    %159 = arith.divf %157, %158 : vector<16x1xf32>
    %160 = vector.broadcast %159 : vector<16x1xf32> to vector<16x64xf32>
    %161 = arith.subf %155, %160 : vector<16x64xf32>
    %162 = arith.mulf %161, %161 : vector<16x64xf32>
    %cst_60 = arith.constant dense<0.000000e+00> : vector<16xf32>
    %163 = vector.multi_reduction <add>, %162, %cst_60 [1] : vector<16x64xf32> to vector<16xf32>
    %164 = vector.shape_cast %163 : vector<16xf32> to vector<16x1xf32>
    %cst_61 = arith.constant 6.400000e+01 : f32
    %165 = vector.broadcast %cst_61 : f32 to vector<16x1xf32>
    %166 = arith.divf %164, %165 : vector<16x1xf32>
    %167 = vector.broadcast %159 : vector<16x1xf32> to vector<16x64xf32>
    %168 = arith.subf %155, %167 : vector<16x64xf32>
    %cst_62 = arith.constant 9.99999974E-6 : f32
    %169 = vector.broadcast %cst_62 : f32 to vector<16x1xf32>
    %170 = arith.addf %166, %169 : vector<16x1xf32>
    %171 = math.rsqrt %170 : vector<16x1xf32>
    %172 = vector.broadcast %171 : vector<16x1xf32> to vector<16x64xf32>
    %173 = arith.mulf %168, %172 : vector<16x64xf32>
    %174 = vector.broadcast %152 : vector<1x64xf32> to vector<16x64xf32>
    %175 = arith.mulf %173, %174 : vector<16x64xf32>
    %176 = vector.broadcast %154 : vector<1x64xf32> to vector<16x64xf32>
    %177 = arith.addf %175, %176 : vector<16x64xf32>
    %178 = arith.truncf %177 : vector<16x64xf32> to vector<16x64xbf16>
    %c0_63 = arith.constant 0 : index
    %c0_64 = arith.constant 0 : index
    %c0_65 = arith.constant 0 : index
    %179 = vector.load %arg9[%c0_63, %c0_64, %c0_65] : memref<2x64x2048xbf16, #tpu.memory_space<vmem>>, vector<1x64x2048xbf16>
    %180 = vector.shape_cast %179 : vector<1x64x2048xbf16> to vector<64x2048xbf16>
    %cst_66 = arith.constant dense<0.000000e+00> : vector<16x2048xf32>
    %181 = tpu.matmul %178, %180, %cst_66 {dimension_numbers = #tpu.dot_dimension_numbers<[1], [0], [0], [1], [0, 0, 1, 1], [], []>} : vector<16x64xbf16>, vector<64x2048xbf16>, vector<16x2048xf32> -> vector<16x2048xf32>
    %c0_67 = arith.constant 0 : index
    %c0_68 = arith.constant 0 : index
    %c0_69 = arith.constant 0 : index
    %182 = vector.load %arg10[%c0_67, %c0_68, %c0_69] : memref<2x1x2048xf32, #tpu.memory_space<vmem>>, vector<1x1x2048xf32>
    %183 = vector.shape_cast %182 : vector<1x1x2048xf32> to vector<1x2048xf32>
    %184 = vector.broadcast %183 : vector<1x2048xf32> to vector<16x2048xf32>
    %185 = arith.addf %181, %184 : vector<16x2048xf32>
    %cst_70 = arith.constant 0.000000e+00 : f32
    %186 = vector.broadcast %cst_70 : f32 to vector<16x2048xf32>
    %187 = arith.maximumf %185, %186 : vector<16x2048xf32>
    %188 = arith.truncf %187 : vector<16x2048xf32> to vector<16x2048xbf16>
    %c0_71 = arith.constant 0 : index
    %c0_72 = arith.constant 0 : index
    %c0_73 = arith.constant 0 : index
    %189 = vector.load %arg11[%c0_71, %c0_72, %c0_73] : memref<2x2048x64xbf16, #tpu.memory_space<vmem>>, vector<1x2048x64xbf16>
    %190 = vector.shape_cast %189 : vector<1x2048x64xbf16> to vector<2048x64xbf16>
    %cst_74 = arith.constant dense<0.000000e+00> : vector<16x64xf32>
    %191 = tpu.matmul %188, %190, %cst_74 {dimension_numbers = #tpu.dot_dimension_numbers<[1], [0], [0], [1], [0, 0, 1, 1], [], []>} : vector<16x2048xbf16>, vector<2048x64xbf16>, vector<16x64xf32> -> vector<16x64xf32>
    %c0_75 = arith.constant 0 : index
    %c0_76 = arith.constant 0 : index
    %c0_77 = arith.constant 0 : index
    %192 = vector.load %arg12[%c0_75, %c0_76, %c0_77] : memref<2x1x64xf32, #tpu.memory_space<vmem>>, vector<1x1x64xf32>
    %193 = vector.shape_cast %192 : vector<1x1x64xf32> to vector<1x64xf32>
    %194 = vector.broadcast %193 : vector<1x64xf32> to vector<16x64xf32>
    %195 = arith.addf %191, %194 : vector<16x64xf32>
    %c0_78 = arith.constant 0 : index
    %c0_79 = arith.constant 0 : index
    %c0_80 = arith.constant 0 : index
    %196 = vector.load %arg13[%c0_78, %c0_79, %c0_80] : memref<2x1x64xf32, #tpu.memory_space<vmem>>, vector<1x1x64xf32>
    %197 = vector.shape_cast %196 : vector<1x1x64xf32> to vector<1x64xf32>
    %c0_81 = arith.constant 0 : index
    %c0_82 = arith.constant 0 : index
    %c0_83 = arith.constant 0 : index
    %198 = vector.load %arg14[%c0_81, %c0_82, %c0_83] : memref<2x1x64xf32, #tpu.memory_space<vmem>>, vector<1x1x64xf32>
    %199 = vector.shape_cast %198 : vector<1x1x64xf32> to vector<1x64xf32>
    %200 = arith.addf %177, %195 : vector<16x64xf32>
    %cst_84 = arith.constant dense<0.000000e+00> : vector<16xf32>
    %201 = vector.multi_reduction <add>, %200, %cst_84 [1] : vector<16x64xf32> to vector<16xf32>
    %202 = vector.shape_cast %201 : vector<16xf32> to vector<16x1xf32>
    %cst_85 = arith.constant 6.400000e+01 : f32
    %203 = vector.broadcast %cst_85 : f32 to vector<16x1xf32>
    %204 = arith.divf %202, %203 : vector<16x1xf32>
    %205 = vector.broadcast %204 : vector<16x1xf32> to vector<16x64xf32>
    %206 = arith.subf %200, %205 : vector<16x64xf32>
    %207 = arith.mulf %206, %206 : vector<16x64xf32>
    %cst_86 = arith.constant dense<0.000000e+00> : vector<16xf32>
    %208 = vector.multi_reduction <add>, %207, %cst_86 [1] : vector<16x64xf32> to vector<16xf32>
    %209 = vector.shape_cast %208 : vector<16xf32> to vector<16x1xf32>
    %cst_87 = arith.constant 6.400000e+01 : f32
    %210 = vector.broadcast %cst_87 : f32 to vector<16x1xf32>
    %211 = arith.divf %209, %210 : vector<16x1xf32>
    %212 = vector.broadcast %204 : vector<16x1xf32> to vector<16x64xf32>
    %213 = arith.subf %200, %212 : vector<16x64xf32>
    %cst_88 = arith.constant 9.99999974E-6 : f32
    %214 = vector.broadcast %cst_88 : f32 to vector<16x1xf32>
    %215 = arith.addf %211, %214 : vector<16x1xf32>
    %216 = math.rsqrt %215 : vector<16x1xf32>
    %217 = vector.broadcast %216 : vector<16x1xf32> to vector<16x64xf32>
    %218 = arith.mulf %213, %217 : vector<16x64xf32>
    %219 = vector.broadcast %197 : vector<1x64xf32> to vector<16x64xf32>
    %220 = arith.mulf %218, %219 : vector<16x64xf32>
    %221 = vector.broadcast %199 : vector<1x64xf32> to vector<16x64xf32>
    %222 = arith.addf %220, %221 : vector<16x64xf32>
    %223 = arith.truncf %222 : vector<16x64xf32> to vector<16x64xbf16>
    %c1 = arith.constant 1 : index
    %c0_89 = arith.constant 0 : index
    %c0_90 = arith.constant 0 : index
    %224 = vector.load %arg3[%c1, %c0_89, %c0_90] : memref<2x64x192xbf16, #tpu.memory_space<vmem>>, vector<1x64x192xbf16>
    %225 = vector.shape_cast %224 : vector<1x64x192xbf16> to vector<64x192xbf16>
    %cst_91 = arith.constant dense<0.000000e+00> : vector<16x192xf32>
    %226 = tpu.matmul %223, %225, %cst_91 {dimension_numbers = #tpu.dot_dimension_numbers<[1], [0], [0], [1], [0, 0, 1, 1], [], []>} : vector<16x64xbf16>, vector<64x192xbf16>, vector<16x192xf32> -> vector<16x192xf32>
    %c1_92 = arith.constant 1 : index
    %c0_93 = arith.constant 0 : index
    %c0_94 = arith.constant 0 : index
    %227 = vector.load %arg4[%c1_92, %c0_93, %c0_94] : memref<2x1x192xf32, #tpu.memory_space<vmem>>, vector<1x1x192xf32>
    %228 = vector.shape_cast %227 : vector<1x1x192xf32> to vector<1x192xf32>
    %229 = vector.broadcast %228 : vector<1x192xf32> to vector<16x192xf32>
    %230 = arith.addf %226, %229 : vector<16x192xf32>
    %231 = vector.extract_strided_slice %230 {offsets = [0, 0], sizes = [16, 16], strides = [1, 1]} : vector<16x192xf32> to vector<16x16xf32>
    %232 = arith.truncf %231 : vector<16x16xf32> to vector<16x16xbf16>
    %233 = vector.extract_strided_slice %230 {offsets = [0, 64], sizes = [16, 16], strides = [1, 1]} : vector<16x192xf32> to vector<16x16xf32>
    %234 = arith.truncf %233 : vector<16x16xf32> to vector<16x16xbf16>
    %235 = vector.extract_strided_slice %230 {offsets = [0, 128], sizes = [16, 16], strides = [1, 1]} : vector<16x192xf32> to vector<16x16xf32>
    %236 = arith.truncf %235 : vector<16x16xf32> to vector<16x16xbf16>
    %cst_95 = arith.constant dense<0.000000e+00> : vector<16x16xf32>
    %237 = tpu.matmul %232, %234, %cst_95 {dimension_numbers = #tpu.dot_dimension_numbers<[1], [1], [0], [0], [0, 0, 1, 0], [], []>} : vector<16x16xbf16>, vector<16x16xbf16>, vector<16x16xf32> -> vector<16x16xf32>
    %cst_96 = arith.constant 2.500000e-01 : f32
    %238 = vector.broadcast %cst_96 : f32 to vector<16x16xf32>
    %239 = arith.mulf %237, %238 : vector<16x16xf32>
    %cst_97 = arith.constant -1.000000e+30 : f32
    %240 = vector.broadcast %cst_97 : f32 to vector<16x16xf32>
    %241 = arith.select %34, %239, %240 : vector<16x16xi1>, vector<16x16xf32>
    %cst_98 = arith.constant dense<0xFF800000> : vector<16xf32>
    %242 = vector.multi_reduction <maximumf>, %241, %cst_98 [1] : vector<16x16xf32> to vector<16xf32>
    %243 = vector.shape_cast %242 : vector<16xf32> to vector<16x1xf32>
    %244 = vector.broadcast %243 : vector<16x1xf32> to vector<16x16xf32>
    %245 = arith.subf %241, %244 : vector<16x16xf32>
    %246 = math.exp %245 : vector<16x16xf32>
    %cst_99 = arith.constant dense<0.000000e+00> : vector<16xf32>
    %247 = vector.multi_reduction <add>, %246, %cst_99 [1] : vector<16x16xf32> to vector<16xf32>
    %248 = vector.shape_cast %247 : vector<16xf32> to vector<16x1xf32>
    %249 = tpu.reciprocal %248 {approx = true} : vector<16x1xf32> -> vector<16x1xf32>
    %250 = vector.broadcast %249 : vector<16x1xf32> to vector<16x16xf32>
    %251 = arith.mulf %246, %250 : vector<16x16xf32>
    %252 = arith.truncf %251 : vector<16x16xf32> to vector<16x16xbf16>
    %cst_100 = arith.constant dense<0.000000e+00> : vector<16x16xf32>
    %253 = tpu.matmul %252, %236, %cst_100 {dimension_numbers = #tpu.dot_dimension_numbers<[1], [0], [0], [1], [0, 0, 1, 1], [], []>} : vector<16x16xbf16>, vector<16x16xbf16>, vector<16x16xf32> -> vector<16x16xf32>
    %254 = vector.extract_strided_slice %230 {offsets = [0, 16], sizes = [16, 16], strides = [1, 1]} : vector<16x192xf32> to vector<16x16xf32>
    %255 = arith.truncf %254 : vector<16x16xf32> to vector<16x16xbf16>
    %256 = vector.extract_strided_slice %230 {offsets = [0, 80], sizes = [16, 16], strides = [1, 1]} : vector<16x192xf32> to vector<16x16xf32>
    %257 = arith.truncf %256 : vector<16x16xf32> to vector<16x16xbf16>
    %258 = vector.extract_strided_slice %230 {offsets = [0, 144], sizes = [16, 16], strides = [1, 1]} : vector<16x192xf32> to vector<16x16xf32>
    %259 = arith.truncf %258 : vector<16x16xf32> to vector<16x16xbf16>
    %cst_101 = arith.constant dense<0.000000e+00> : vector<16x16xf32>
    %260 = tpu.matmul %255, %257, %cst_101 {dimension_numbers = #tpu.dot_dimension_numbers<[1], [1], [0], [0], [0, 0, 1, 0], [], []>} : vector<16x16xbf16>, vector<16x16xbf16>, vector<16x16xf32> -> vector<16x16xf32>
    %cst_102 = arith.constant 2.500000e-01 : f32
    %261 = vector.broadcast %cst_102 : f32 to vector<16x16xf32>
    %262 = arith.mulf %260, %261 : vector<16x16xf32>
    %cst_103 = arith.constant -1.000000e+30 : f32
    %263 = vector.broadcast %cst_103 : f32 to vector<16x16xf32>
    %264 = arith.select %34, %262, %263 : vector<16x16xi1>, vector<16x16xf32>
    %cst_104 = arith.constant dense<0xFF800000> : vector<16xf32>
    %265 = vector.multi_reduction <maximumf>, %264, %cst_104 [1] : vector<16x16xf32> to vector<16xf32>
    %266 = vector.shape_cast %265 : vector<16xf32> to vector<16x1xf32>
    %267 = vector.broadcast %266 : vector<16x1xf32> to vector<16x16xf32>
    %268 = arith.subf %264, %267 : vector<16x16xf32>
    %269 = math.exp %268 : vector<16x16xf32>
    %cst_105 = arith.constant dense<0.000000e+00> : vector<16xf32>
    %270 = vector.multi_reduction <add>, %269, %cst_105 [1] : vector<16x16xf32> to vector<16xf32>
    %271 = vector.shape_cast %270 : vector<16xf32> to vector<16x1xf32>
    %272 = tpu.reciprocal %271 {approx = true} : vector<16x1xf32> -> vector<16x1xf32>
    %273 = vector.broadcast %272 : vector<16x1xf32> to vector<16x16xf32>
    %274 = arith.mulf %269, %273 : vector<16x16xf32>
    %275 = arith.truncf %274 : vector<16x16xf32> to vector<16x16xbf16>
    %cst_106 = arith.constant dense<0.000000e+00> : vector<16x16xf32>
    %276 = tpu.matmul %275, %259, %cst_106 {dimension_numbers = #tpu.dot_dimension_numbers<[1], [0], [0], [1], [0, 0, 1, 1], [], []>} : vector<16x16xbf16>, vector<16x16xbf16>, vector<16x16xf32> -> vector<16x16xf32>
    %277 = vector.extract_strided_slice %230 {offsets = [0, 32], sizes = [16, 16], strides = [1, 1]} : vector<16x192xf32> to vector<16x16xf32>
    %278 = arith.truncf %277 : vector<16x16xf32> to vector<16x16xbf16>
    %279 = vector.extract_strided_slice %230 {offsets = [0, 96], sizes = [16, 16], strides = [1, 1]} : vector<16x192xf32> to vector<16x16xf32>
    %280 = arith.truncf %279 : vector<16x16xf32> to vector<16x16xbf16>
    %281 = vector.extract_strided_slice %230 {offsets = [0, 160], sizes = [16, 16], strides = [1, 1]} : vector<16x192xf32> to vector<16x16xf32>
    %282 = arith.truncf %281 : vector<16x16xf32> to vector<16x16xbf16>
    %cst_107 = arith.constant dense<0.000000e+00> : vector<16x16xf32>
    %283 = tpu.matmul %278, %280, %cst_107 {dimension_numbers = #tpu.dot_dimension_numbers<[1], [1], [0], [0], [0, 0, 1, 0], [], []>} : vector<16x16xbf16>, vector<16x16xbf16>, vector<16x16xf32> -> vector<16x16xf32>
    %cst_108 = arith.constant 2.500000e-01 : f32
    %284 = vector.broadcast %cst_108 : f32 to vector<16x16xf32>
    %285 = arith.mulf %283, %284 : vector<16x16xf32>
    %cst_109 = arith.constant -1.000000e+30 : f32
    %286 = vector.broadcast %cst_109 : f32 to vector<16x16xf32>
    %287 = arith.select %34, %285, %286 : vector<16x16xi1>, vector<16x16xf32>
    %cst_110 = arith.constant dense<0xFF800000> : vector<16xf32>
    %288 = vector.multi_reduction <maximumf>, %287, %cst_110 [1] : vector<16x16xf32> to vector<16xf32>
    %289 = vector.shape_cast %288 : vector<16xf32> to vector<16x1xf32>
    %290 = vector.broadcast %289 : vector<16x1xf32> to vector<16x16xf32>
    %291 = arith.subf %287, %290 : vector<16x16xf32>
    %292 = math.exp %291 : vector<16x16xf32>
    %cst_111 = arith.constant dense<0.000000e+00> : vector<16xf32>
    %293 = vector.multi_reduction <add>, %292, %cst_111 [1] : vector<16x16xf32> to vector<16xf32>
    %294 = vector.shape_cast %293 : vector<16xf32> to vector<16x1xf32>
    %295 = tpu.reciprocal %294 {approx = true} : vector<16x1xf32> -> vector<16x1xf32>
    %296 = vector.broadcast %295 : vector<16x1xf32> to vector<16x16xf32>
    %297 = arith.mulf %292, %296 : vector<16x16xf32>
    %298 = arith.truncf %297 : vector<16x16xf32> to vector<16x16xbf16>
    %cst_112 = arith.constant dense<0.000000e+00> : vector<16x16xf32>
    %299 = tpu.matmul %298, %282, %cst_112 {dimension_numbers = #tpu.dot_dimension_numbers<[1], [0], [0], [1], [0, 0, 1, 1], [], []>} : vector<16x16xbf16>, vector<16x16xbf16>, vector<16x16xf32> -> vector<16x16xf32>
    %300 = vector.extract_strided_slice %230 {offsets = [0, 48], sizes = [16, 16], strides = [1, 1]} : vector<16x192xf32> to vector<16x16xf32>
    %301 = arith.truncf %300 : vector<16x16xf32> to vector<16x16xbf16>
    %302 = vector.extract_strided_slice %230 {offsets = [0, 112], sizes = [16, 16], strides = [1, 1]} : vector<16x192xf32> to vector<16x16xf32>
    %303 = arith.truncf %302 : vector<16x16xf32> to vector<16x16xbf16>
    %304 = vector.extract_strided_slice %230 {offsets = [0, 176], sizes = [16, 16], strides = [1, 1]} : vector<16x192xf32> to vector<16x16xf32>
    %305 = arith.truncf %304 : vector<16x16xf32> to vector<16x16xbf16>
    %cst_113 = arith.constant dense<0.000000e+00> : vector<16x16xf32>
    %306 = tpu.matmul %301, %303, %cst_113 {dimension_numbers = #tpu.dot_dimension_numbers<[1], [1], [0], [0], [0, 0, 1, 0], [], []>} : vector<16x16xbf16>, vector<16x16xbf16>, vector<16x16xf32> -> vector<16x16xf32>
    %cst_114 = arith.constant 2.500000e-01 : f32
    %307 = vector.broadcast %cst_114 : f32 to vector<16x16xf32>
    %308 = arith.mulf %306, %307 : vector<16x16xf32>
    %cst_115 = arith.constant -1.000000e+30 : f32
    %309 = vector.broadcast %cst_115 : f32 to vector<16x16xf32>
    %310 = arith.select %34, %308, %309 : vector<16x16xi1>, vector<16x16xf32>
    %cst_116 = arith.constant dense<0xFF800000> : vector<16xf32>
    %311 = vector.multi_reduction <maximumf>, %310, %cst_116 [1] : vector<16x16xf32> to vector<16xf32>
    %312 = vector.shape_cast %311 : vector<16xf32> to vector<16x1xf32>
    %313 = vector.broadcast %312 : vector<16x1xf32> to vector<16x16xf32>
    %314 = arith.subf %310, %313 : vector<16x16xf32>
    %315 = math.exp %314 : vector<16x16xf32>
    %cst_117 = arith.constant dense<0.000000e+00> : vector<16xf32>
    %316 = vector.multi_reduction <add>, %315, %cst_117 [1] : vector<16x16xf32> to vector<16xf32>
    %317 = vector.shape_cast %316 : vector<16xf32> to vector<16x1xf32>
    %318 = tpu.reciprocal %317 {approx = true} : vector<16x1xf32> -> vector<16x1xf32>
    %319 = vector.broadcast %318 : vector<16x1xf32> to vector<16x16xf32>
    %320 = arith.mulf %315, %319 : vector<16x16xf32>
    %321 = arith.truncf %320 : vector<16x16xf32> to vector<16x16xbf16>
    %cst_118 = arith.constant dense<0.000000e+00> : vector<16x16xf32>
    %322 = tpu.matmul %321, %305, %cst_118 {dimension_numbers = #tpu.dot_dimension_numbers<[1], [0], [0], [1], [0, 0, 1, 1], [], []>} : vector<16x16xbf16>, vector<16x16xbf16>, vector<16x16xf32> -> vector<16x16xf32>
    %323 = tpu.concatenate %253, %276, %299, %322 in 1 : vector<16x16xf32>, vector<16x16xf32>, vector<16x16xf32>, vector<16x16xf32> -> vector<16x64xf32>
    %324 = arith.truncf %323 : vector<16x64xf32> to vector<16x64xbf16>
    %c1_119 = arith.constant 1 : index
    %c0_120 = arith.constant 0 : index
    %c0_121 = arith.constant 0 : index
    %325 = vector.load %arg5[%c1_119, %c0_120, %c0_121] : memref<2x64x64xbf16, #tpu.memory_space<vmem>>, vector<1x64x64xbf16>
    %326 = vector.shape_cast %325 : vector<1x64x64xbf16> to vector<64x64xbf16>
    %cst_122 = arith.constant dense<0.000000e+00> : vector<16x64xf32>
    %327 = tpu.matmul %324, %326, %cst_122 {dimension_numbers = #tpu.dot_dimension_numbers<[1], [0], [0], [1], [0, 0, 1, 1], [], []>} : vector<16x64xbf16>, vector<64x64xbf16>, vector<16x64xf32> -> vector<16x64xf32>
    %c1_123 = arith.constant 1 : index
    %c0_124 = arith.constant 0 : index
    %c0_125 = arith.constant 0 : index
    %328 = vector.load %arg6[%c1_123, %c0_124, %c0_125] : memref<2x1x64xf32, #tpu.memory_space<vmem>>, vector<1x1x64xf32>
    %329 = vector.shape_cast %328 : vector<1x1x64xf32> to vector<1x64xf32>
    %330 = vector.broadcast %329 : vector<1x64xf32> to vector<16x64xf32>
    %331 = arith.addf %327, %330 : vector<16x64xf32>
    %c1_126 = arith.constant 1 : index
    %c0_127 = arith.constant 0 : index
    %c0_128 = arith.constant 0 : index
    %332 = vector.load %arg7[%c1_126, %c0_127, %c0_128] : memref<2x1x64xf32, #tpu.memory_space<vmem>>, vector<1x1x64xf32>
    %333 = vector.shape_cast %332 : vector<1x1x64xf32> to vector<1x64xf32>
    %c1_129 = arith.constant 1 : index
    %c0_130 = arith.constant 0 : index
    %c0_131 = arith.constant 0 : index
    %334 = vector.load %arg8[%c1_129, %c0_130, %c0_131] : memref<2x1x64xf32, #tpu.memory_space<vmem>>, vector<1x1x64xf32>
    %335 = vector.shape_cast %334 : vector<1x1x64xf32> to vector<1x64xf32>
    %336 = arith.addf %222, %331 : vector<16x64xf32>
    %cst_132 = arith.constant dense<0.000000e+00> : vector<16xf32>
    %337 = vector.multi_reduction <add>, %336, %cst_132 [1] : vector<16x64xf32> to vector<16xf32>
    %338 = vector.shape_cast %337 : vector<16xf32> to vector<16x1xf32>
    %cst_133 = arith.constant 6.400000e+01 : f32
    %339 = vector.broadcast %cst_133 : f32 to vector<16x1xf32>
    %340 = arith.divf %338, %339 : vector<16x1xf32>
    %341 = vector.broadcast %340 : vector<16x1xf32> to vector<16x64xf32>
    %342 = arith.subf %336, %341 : vector<16x64xf32>
    %343 = arith.mulf %342, %342 : vector<16x64xf32>
    %cst_134 = arith.constant dense<0.000000e+00> : vector<16xf32>
    %344 = vector.multi_reduction <add>, %343, %cst_134 [1] : vector<16x64xf32> to vector<16xf32>
    %345 = vector.shape_cast %344 : vector<16xf32> to vector<16x1xf32>
    %cst_135 = arith.constant 6.400000e+01 : f32
    %346 = vector.broadcast %cst_135 : f32 to vector<16x1xf32>
    %347 = arith.divf %345, %346 : vector<16x1xf32>
    %348 = vector.broadcast %340 : vector<16x1xf32> to vector<16x64xf32>
    %349 = arith.subf %336, %348 : vector<16x64xf32>
    %cst_136 = arith.constant 9.99999974E-6 : f32
    %350 = vector.broadcast %cst_136 : f32 to vector<16x1xf32>
    %351 = arith.addf %347, %350 : vector<16x1xf32>
    %352 = math.rsqrt %351 : vector<16x1xf32>
    %353 = vector.broadcast %352 : vector<16x1xf32> to vector<16x64xf32>
    %354 = arith.mulf %349, %353 : vector<16x64xf32>
    %355 = vector.broadcast %333 : vector<1x64xf32> to vector<16x64xf32>
    %356 = arith.mulf %354, %355 : vector<16x64xf32>
    %357 = vector.broadcast %335 : vector<1x64xf32> to vector<16x64xf32>
    %358 = arith.addf %356, %357 : vector<16x64xf32>
    %359 = arith.truncf %358 : vector<16x64xf32> to vector<16x64xbf16>
    %c1_137 = arith.constant 1 : index
    %c0_138 = arith.constant 0 : index
    %c0_139 = arith.constant 0 : index
    %360 = vector.load %arg9[%c1_137, %c0_138, %c0_139] : memref<2x64x2048xbf16, #tpu.memory_space<vmem>>, vector<1x64x2048xbf16>
    %361 = vector.shape_cast %360 : vector<1x64x2048xbf16> to vector<64x2048xbf16>
    %cst_140 = arith.constant dense<0.000000e+00> : vector<16x2048xf32>
    %362 = tpu.matmul %359, %361, %cst_140 {dimension_numbers = #tpu.dot_dimension_numbers<[1], [0], [0], [1], [0, 0, 1, 1], [], []>} : vector<16x64xbf16>, vector<64x2048xbf16>, vector<16x2048xf32> -> vector<16x2048xf32>
    %c1_141 = arith.constant 1 : index
    %c0_142 = arith.constant 0 : index
    %c0_143 = arith.constant 0 : index
    %363 = vector.load %arg10[%c1_141, %c0_142, %c0_143] : memref<2x1x2048xf32, #tpu.memory_space<vmem>>, vector<1x1x2048xf32>
    %364 = vector.shape_cast %363 : vector<1x1x2048xf32> to vector<1x2048xf32>
    %365 = vector.broadcast %364 : vector<1x2048xf32> to vector<16x2048xf32>
    %366 = arith.addf %362, %365 : vector<16x2048xf32>
    %cst_144 = arith.constant 0.000000e+00 : f32
    %367 = vector.broadcast %cst_144 : f32 to vector<16x2048xf32>
    %368 = arith.maximumf %366, %367 : vector<16x2048xf32>
    %369 = arith.truncf %368 : vector<16x2048xf32> to vector<16x2048xbf16>
    %c1_145 = arith.constant 1 : index
    %c0_146 = arith.constant 0 : index
    %c0_147 = arith.constant 0 : index
    %370 = vector.load %arg11[%c1_145, %c0_146, %c0_147] : memref<2x2048x64xbf16, #tpu.memory_space<vmem>>, vector<1x2048x64xbf16>
    %371 = vector.shape_cast %370 : vector<1x2048x64xbf16> to vector<2048x64xbf16>
    %cst_148 = arith.constant dense<0.000000e+00> : vector<16x64xf32>
    %372 = tpu.matmul %369, %371, %cst_148 {dimension_numbers = #tpu.dot_dimension_numbers<[1], [0], [0], [1], [0, 0, 1, 1], [], []>} : vector<16x2048xbf16>, vector<2048x64xbf16>, vector<16x64xf32> -> vector<16x64xf32>
    %c1_149 = arith.constant 1 : index
    %c0_150 = arith.constant 0 : index
    %c0_151 = arith.constant 0 : index
    %373 = vector.load %arg12[%c1_149, %c0_150, %c0_151] : memref<2x1x64xf32, #tpu.memory_space<vmem>>, vector<1x1x64xf32>
    %374 = vector.shape_cast %373 : vector<1x1x64xf32> to vector<1x64xf32>
    %375 = vector.broadcast %374 : vector<1x64xf32> to vector<16x64xf32>
    %376 = arith.addf %372, %375 : vector<16x64xf32>
    %c1_152 = arith.constant 1 : index
    %c0_153 = arith.constant 0 : index
    %c0_154 = arith.constant 0 : index
    %377 = vector.load %arg13[%c1_152, %c0_153, %c0_154] : memref<2x1x64xf32, #tpu.memory_space<vmem>>, vector<1x1x64xf32>
    %378 = vector.shape_cast %377 : vector<1x1x64xf32> to vector<1x64xf32>
    %c1_155 = arith.constant 1 : index
    %c0_156 = arith.constant 0 : index
    %c0_157 = arith.constant 0 : index
    %379 = vector.load %arg14[%c1_155, %c0_156, %c0_157] : memref<2x1x64xf32, #tpu.memory_space<vmem>>, vector<1x1x64xf32>
    %380 = vector.shape_cast %379 : vector<1x1x64xf32> to vector<1x64xf32>
    %381 = arith.addf %358, %376 : vector<16x64xf32>
    %cst_158 = arith.constant dense<0.000000e+00> : vector<16xf32>
    %382 = vector.multi_reduction <add>, %381, %cst_158 [1] : vector<16x64xf32> to vector<16xf32>
    %383 = vector.shape_cast %382 : vector<16xf32> to vector<16x1xf32>
    %cst_159 = arith.constant 6.400000e+01 : f32
    %384 = vector.broadcast %cst_159 : f32 to vector<16x1xf32>
    %385 = arith.divf %383, %384 : vector<16x1xf32>
    %386 = vector.broadcast %385 : vector<16x1xf32> to vector<16x64xf32>
    %387 = arith.subf %381, %386 : vector<16x64xf32>
    %388 = arith.mulf %387, %387 : vector<16x64xf32>
    %cst_160 = arith.constant dense<0.000000e+00> : vector<16xf32>
    %389 = vector.multi_reduction <add>, %388, %cst_160 [1] : vector<16x64xf32> to vector<16xf32>
    %390 = vector.shape_cast %389 : vector<16xf32> to vector<16x1xf32>
    %cst_161 = arith.constant 6.400000e+01 : f32
    %391 = vector.broadcast %cst_161 : f32 to vector<16x1xf32>
    %392 = arith.divf %390, %391 : vector<16x1xf32>
    %393 = vector.broadcast %385 : vector<16x1xf32> to vector<16x64xf32>
    %394 = arith.subf %381, %393 : vector<16x64xf32>
    %cst_162 = arith.constant 9.99999974E-6 : f32
    %395 = vector.broadcast %cst_162 : f32 to vector<16x1xf32>
    %396 = arith.addf %392, %395 : vector<16x1xf32>
    %397 = math.rsqrt %396 : vector<16x1xf32>
    %398 = vector.broadcast %397 : vector<16x1xf32> to vector<16x64xf32>
    %399 = arith.mulf %394, %398 : vector<16x64xf32>
    %400 = vector.broadcast %378 : vector<1x64xf32> to vector<16x64xf32>
    %401 = arith.mulf %399, %400 : vector<16x64xf32>
    %402 = vector.broadcast %380 : vector<1x64xf32> to vector<16x64xf32>
    %403 = arith.addf %401, %402 : vector<16x64xf32>
    %404 = arith.truncf %403 : vector<16x64xf32> to vector<16x64xbf16>
    %c0_163 = arith.constant 0 : index
    %c0_164 = arith.constant 0 : index
    %405 = vector.load %arg15[%c0_163, %c0_164] : memref<64x128xbf16, #tpu.memory_space<vmem>>, vector<64x128xbf16>
    %cst_165 = arith.constant dense<0.000000e+00> : vector<16x128xf32>
    %406 = tpu.matmul %404, %405, %cst_165 {dimension_numbers = #tpu.dot_dimension_numbers<[1], [0], [0], [1], [0, 0, 1, 1], [], []>} : vector<16x64xbf16>, vector<64x128xbf16>, vector<16x128xf32> -> vector<16x128xf32>
    %c0_166 = arith.constant 0 : index
    %c0_167 = arith.constant 0 : index
    %407 = vector.load %arg16[%c0_166, %c0_167] : memref<1x128xf32, #tpu.memory_space<vmem>>, vector<1x128xf32>
    %408 = vector.broadcast %407 : vector<1x128xf32> to vector<16x128xf32>
    %409 = arith.addf %406, %408 : vector<16x128xf32>
    %c0_168 = arith.constant 0 : index
    %c0_169 = arith.constant 0 : index
    %410 = vector.load %arg17[%c0_168, %c0_169] : memref<32x128xbf16, #tpu.memory_space<vmem>>, vector<32x128xbf16>
    %cst_170 = arith.constant 0.000000e+00 : f32
    %411 = vector.broadcast %cst_170 : f32 to vector<2x32xf32>
    %cst_171 = arith.constant 0.000000e+00 : f32
    %412 = vector.broadcast %cst_171 : f32 to vector<2x32xf32>
    %413 = vector.extract_strided_slice %409 {offsets = [0, 0], sizes = [2, 128], strides = [1, 1]} : vector<16x128xf32> to vector<2x128xf32>
    %414 = arith.truncf %411 : vector<2x32xf32> to vector<2x32xbf16>
    %cst_172 = arith.constant dense<0.000000e+00> : vector<2x128xf32>
    %415 = tpu.matmul %414, %410, %cst_172 {dimension_numbers = #tpu.dot_dimension_numbers<[1], [0], [0], [1], [0, 0, 1, 1], [], []>} : vector<2x32xbf16>, vector<32x128xbf16>, vector<2x128xf32> -> vector<2x128xf32>
    %416 = arith.addf %413, %415 : vector<2x128xf32>
    %417 = arith.negf %416 : vector<2x128xf32>
    %418 = math.exp %417 : vector<2x128xf32>
    %cst_173 = arith.constant 1.000000e+00 : f32
    %419 = vector.broadcast %cst_173 : f32 to vector<2x128xf32>
    %420 = arith.addf %419, %418 : vector<2x128xf32>
    %421 = arith.divf %419, %420 : vector<2x128xf32>
    %422 = vector.extract_strided_slice %421 {offsets = [0, 0], sizes = [2, 32], strides = [1, 1]} : vector<2x128xf32> to vector<2x32xf32>
    %423 = vector.extract_strided_slice %421 {offsets = [0, 32], sizes = [2, 32], strides = [1, 1]} : vector<2x128xf32> to vector<2x32xf32>
    %424 = vector.extract_strided_slice %421 {offsets = [0, 96], sizes = [2, 32], strides = [1, 1]} : vector<2x128xf32> to vector<2x32xf32>
    %425 = vector.extract_strided_slice %416 {offsets = [0, 64], sizes = [2, 32], strides = [1, 1]} : vector<2x128xf32> to vector<2x32xf32>
    %426 = math.tanh %425 : vector<2x32xf32>
    %427 = arith.mulf %423, %412 : vector<2x32xf32>
    %428 = arith.mulf %422, %426 : vector<2x32xf32>
    %429 = arith.addf %427, %428 : vector<2x32xf32>
    %430 = math.tanh %429 : vector<2x32xf32>
    %431 = arith.mulf %424, %430 : vector<2x32xf32>
    %432 = vector.extract_strided_slice %409 {offsets = [2, 0], sizes = [2, 128], strides = [1, 1]} : vector<16x128xf32> to vector<2x128xf32>
    %433 = arith.truncf %431 : vector<2x32xf32> to vector<2x32xbf16>
    %cst_174 = arith.constant dense<0.000000e+00> : vector<2x128xf32>
    %434 = tpu.matmul %433, %410, %cst_174 {dimension_numbers = #tpu.dot_dimension_numbers<[1], [0], [0], [1], [0, 0, 1, 1], [], []>} : vector<2x32xbf16>, vector<32x128xbf16>, vector<2x128xf32> -> vector<2x128xf32>
    %435 = arith.addf %432, %434 : vector<2x128xf32>
    %436 = arith.negf %435 : vector<2x128xf32>
    %437 = math.exp %436 : vector<2x128xf32>
    %cst_175 = arith.constant 1.000000e+00 : f32
    %438 = vector.broadcast %cst_175 : f32 to vector<2x128xf32>
    %439 = arith.addf %438, %437 : vector<2x128xf32>
    %440 = arith.divf %438, %439 : vector<2x128xf32>
    %441 = vector.extract_strided_slice %440 {offsets = [0, 0], sizes = [2, 32], strides = [1, 1]} : vector<2x128xf32> to vector<2x32xf32>
    %442 = vector.extract_strided_slice %440 {offsets = [0, 32], sizes = [2, 32], strides = [1, 1]} : vector<2x128xf32> to vector<2x32xf32>
    %443 = vector.extract_strided_slice %440 {offsets = [0, 96], sizes = [2, 32], strides = [1, 1]} : vector<2x128xf32> to vector<2x32xf32>
    %444 = vector.extract_strided_slice %435 {offsets = [0, 64], sizes = [2, 32], strides = [1, 1]} : vector<2x128xf32> to vector<2x32xf32>
    %445 = math.tanh %444 : vector<2x32xf32>
    %446 = arith.mulf %442, %429 : vector<2x32xf32>
    %447 = arith.mulf %441, %445 : vector<2x32xf32>
    %448 = arith.addf %446, %447 : vector<2x32xf32>
    %449 = math.tanh %448 : vector<2x32xf32>
    %450 = arith.mulf %443, %449 : vector<2x32xf32>
    %451 = vector.extract_strided_slice %409 {offsets = [4, 0], sizes = [2, 128], strides = [1, 1]} : vector<16x128xf32> to vector<2x128xf32>
    %452 = arith.truncf %450 : vector<2x32xf32> to vector<2x32xbf16>
    %cst_176 = arith.constant dense<0.000000e+00> : vector<2x128xf32>
    %453 = tpu.matmul %452, %410, %cst_176 {dimension_numbers = #tpu.dot_dimension_numbers<[1], [0], [0], [1], [0, 0, 1, 1], [], []>} : vector<2x32xbf16>, vector<32x128xbf16>, vector<2x128xf32> -> vector<2x128xf32>
    %454 = arith.addf %451, %453 : vector<2x128xf32>
    %455 = arith.negf %454 : vector<2x128xf32>
    %456 = math.exp %455 : vector<2x128xf32>
    %cst_177 = arith.constant 1.000000e+00 : f32
    %457 = vector.broadcast %cst_177 : f32 to vector<2x128xf32>
    %458 = arith.addf %457, %456 : vector<2x128xf32>
    %459 = arith.divf %457, %458 : vector<2x128xf32>
    %460 = vector.extract_strided_slice %459 {offsets = [0, 0], sizes = [2, 32], strides = [1, 1]} : vector<2x128xf32> to vector<2x32xf32>
    %461 = vector.extract_strided_slice %459 {offsets = [0, 32], sizes = [2, 32], strides = [1, 1]} : vector<2x128xf32> to vector<2x32xf32>
    %462 = vector.extract_strided_slice %459 {offsets = [0, 96], sizes = [2, 32], strides = [1, 1]} : vector<2x128xf32> to vector<2x32xf32>
    %463 = vector.extract_strided_slice %454 {offsets = [0, 64], sizes = [2, 32], strides = [1, 1]} : vector<2x128xf32> to vector<2x32xf32>
    %464 = math.tanh %463 : vector<2x32xf32>
    %465 = arith.mulf %461, %448 : vector<2x32xf32>
    %466 = arith.mulf %460, %464 : vector<2x32xf32>
    %467 = arith.addf %465, %466 : vector<2x32xf32>
    %468 = math.tanh %467 : vector<2x32xf32>
    %469 = arith.mulf %462, %468 : vector<2x32xf32>
    %470 = vector.extract_strided_slice %409 {offsets = [6, 0], sizes = [2, 128], strides = [1, 1]} : vector<16x128xf32> to vector<2x128xf32>
    %471 = arith.truncf %469 : vector<2x32xf32> to vector<2x32xbf16>
    %cst_178 = arith.constant dense<0.000000e+00> : vector<2x128xf32>
    %472 = tpu.matmul %471, %410, %cst_178 {dimension_numbers = #tpu.dot_dimension_numbers<[1], [0], [0], [1], [0, 0, 1, 1], [], []>} : vector<2x32xbf16>, vector<32x128xbf16>, vector<2x128xf32> -> vector<2x128xf32>
    %473 = arith.addf %470, %472 : vector<2x128xf32>
    %474 = arith.negf %473 : vector<2x128xf32>
    %475 = math.exp %474 : vector<2x128xf32>
    %cst_179 = arith.constant 1.000000e+00 : f32
    %476 = vector.broadcast %cst_179 : f32 to vector<2x128xf32>
    %477 = arith.addf %476, %475 : vector<2x128xf32>
    %478 = arith.divf %476, %477 : vector<2x128xf32>
    %479 = vector.extract_strided_slice %478 {offsets = [0, 0], sizes = [2, 32], strides = [1, 1]} : vector<2x128xf32> to vector<2x32xf32>
    %480 = vector.extract_strided_slice %478 {offsets = [0, 32], sizes = [2, 32], strides = [1, 1]} : vector<2x128xf32> to vector<2x32xf32>
    %481 = vector.extract_strided_slice %478 {offsets = [0, 96], sizes = [2, 32], strides = [1, 1]} : vector<2x128xf32> to vector<2x32xf32>
    %482 = vector.extract_strided_slice %473 {offsets = [0, 64], sizes = [2, 32], strides = [1, 1]} : vector<2x128xf32> to vector<2x32xf32>
    %483 = math.tanh %482 : vector<2x32xf32>
    %484 = arith.mulf %480, %467 : vector<2x32xf32>
    %485 = arith.mulf %479, %483 : vector<2x32xf32>
    %486 = arith.addf %484, %485 : vector<2x32xf32>
    %487 = math.tanh %486 : vector<2x32xf32>
    %488 = arith.mulf %481, %487 : vector<2x32xf32>
    %489 = vector.extract_strided_slice %409 {offsets = [8, 0], sizes = [2, 128], strides = [1, 1]} : vector<16x128xf32> to vector<2x128xf32>
    %490 = arith.truncf %488 : vector<2x32xf32> to vector<2x32xbf16>
    %cst_180 = arith.constant dense<0.000000e+00> : vector<2x128xf32>
    %491 = tpu.matmul %490, %410, %cst_180 {dimension_numbers = #tpu.dot_dimension_numbers<[1], [0], [0], [1], [0, 0, 1, 1], [], []>} : vector<2x32xbf16>, vector<32x128xbf16>, vector<2x128xf32> -> vector<2x128xf32>
    %492 = arith.addf %489, %491 : vector<2x128xf32>
    %493 = arith.negf %492 : vector<2x128xf32>
    %494 = math.exp %493 : vector<2x128xf32>
    %cst_181 = arith.constant 1.000000e+00 : f32
    %495 = vector.broadcast %cst_181 : f32 to vector<2x128xf32>
    %496 = arith.addf %495, %494 : vector<2x128xf32>
    %497 = arith.divf %495, %496 : vector<2x128xf32>
    %498 = vector.extract_strided_slice %497 {offsets = [0, 0], sizes = [2, 32], strides = [1, 1]} : vector<2x128xf32> to vector<2x32xf32>
    %499 = vector.extract_strided_slice %497 {offsets = [0, 32], sizes = [2, 32], strides = [1, 1]} : vector<2x128xf32> to vector<2x32xf32>
    %500 = vector.extract_strided_slice %497 {offsets = [0, 96], sizes = [2, 32], strides = [1, 1]} : vector<2x128xf32> to vector<2x32xf32>
    %501 = vector.extract_strided_slice %492 {offsets = [0, 64], sizes = [2, 32], strides = [1, 1]} : vector<2x128xf32> to vector<2x32xf32>
    %502 = math.tanh %501 : vector<2x32xf32>
    %503 = arith.mulf %499, %486 : vector<2x32xf32>
    %504 = arith.mulf %498, %502 : vector<2x32xf32>
    %505 = arith.addf %503, %504 : vector<2x32xf32>
    %506 = math.tanh %505 : vector<2x32xf32>
    %507 = arith.mulf %500, %506 : vector<2x32xf32>
    %508 = vector.extract_strided_slice %409 {offsets = [10, 0], sizes = [2, 128], strides = [1, 1]} : vector<16x128xf32> to vector<2x128xf32>
    %509 = arith.truncf %507 : vector<2x32xf32> to vector<2x32xbf16>
    %cst_182 = arith.constant dense<0.000000e+00> : vector<2x128xf32>
    %510 = tpu.matmul %509, %410, %cst_182 {dimension_numbers = #tpu.dot_dimension_numbers<[1], [0], [0], [1], [0, 0, 1, 1], [], []>} : vector<2x32xbf16>, vector<32x128xbf16>, vector<2x128xf32> -> vector<2x128xf32>
    %511 = arith.addf %508, %510 : vector<2x128xf32>
    %512 = arith.negf %511 : vector<2x128xf32>
    %513 = math.exp %512 : vector<2x128xf32>
    %cst_183 = arith.constant 1.000000e+00 : f32
    %514 = vector.broadcast %cst_183 : f32 to vector<2x128xf32>
    %515 = arith.addf %514, %513 : vector<2x128xf32>
    %516 = arith.divf %514, %515 : vector<2x128xf32>
    %517 = vector.extract_strided_slice %516 {offsets = [0, 0], sizes = [2, 32], strides = [1, 1]} : vector<2x128xf32> to vector<2x32xf32>
    %518 = vector.extract_strided_slice %516 {offsets = [0, 32], sizes = [2, 32], strides = [1, 1]} : vector<2x128xf32> to vector<2x32xf32>
    %519 = vector.extract_strided_slice %516 {offsets = [0, 96], sizes = [2, 32], strides = [1, 1]} : vector<2x128xf32> to vector<2x32xf32>
    %520 = vector.extract_strided_slice %511 {offsets = [0, 64], sizes = [2, 32], strides = [1, 1]} : vector<2x128xf32> to vector<2x32xf32>
    %521 = math.tanh %520 : vector<2x32xf32>
    %522 = arith.mulf %518, %505 : vector<2x32xf32>
    %523 = arith.mulf %517, %521 : vector<2x32xf32>
    %524 = arith.addf %522, %523 : vector<2x32xf32>
    %525 = math.tanh %524 : vector<2x32xf32>
    %526 = arith.mulf %519, %525 : vector<2x32xf32>
    %527 = vector.extract_strided_slice %409 {offsets = [12, 0], sizes = [2, 128], strides = [1, 1]} : vector<16x128xf32> to vector<2x128xf32>
    %528 = arith.truncf %526 : vector<2x32xf32> to vector<2x32xbf16>
    %cst_184 = arith.constant dense<0.000000e+00> : vector<2x128xf32>
    %529 = tpu.matmul %528, %410, %cst_184 {dimension_numbers = #tpu.dot_dimension_numbers<[1], [0], [0], [1], [0, 0, 1, 1], [], []>} : vector<2x32xbf16>, vector<32x128xbf16>, vector<2x128xf32> -> vector<2x128xf32>
    %530 = arith.addf %527, %529 : vector<2x128xf32>
    %531 = arith.negf %530 : vector<2x128xf32>
    %532 = math.exp %531 : vector<2x128xf32>
    %cst_185 = arith.constant 1.000000e+00 : f32
    %533 = vector.broadcast %cst_185 : f32 to vector<2x128xf32>
    %534 = arith.addf %533, %532 : vector<2x128xf32>
    %535 = arith.divf %533, %534 : vector<2x128xf32>
    %536 = vector.extract_strided_slice %535 {offsets = [0, 0], sizes = [2, 32], strides = [1, 1]} : vector<2x128xf32> to vector<2x32xf32>
    %537 = vector.extract_strided_slice %535 {offsets = [0, 32], sizes = [2, 32], strides = [1, 1]} : vector<2x128xf32> to vector<2x32xf32>
    %538 = vector.extract_strided_slice %535 {offsets = [0, 96], sizes = [2, 32], strides = [1, 1]} : vector<2x128xf32> to vector<2x32xf32>
    %539 = vector.extract_strided_slice %530 {offsets = [0, 64], sizes = [2, 32], strides = [1, 1]} : vector<2x128xf32> to vector<2x32xf32>
    %540 = math.tanh %539 : vector<2x32xf32>
    %541 = arith.mulf %537, %524 : vector<2x32xf32>
    %542 = arith.mulf %536, %540 : vector<2x32xf32>
    %543 = arith.addf %541, %542 : vector<2x32xf32>
    %544 = math.tanh %543 : vector<2x32xf32>
    %545 = arith.mulf %538, %544 : vector<2x32xf32>
    %546 = vector.extract_strided_slice %409 {offsets = [14, 0], sizes = [2, 128], strides = [1, 1]} : vector<16x128xf32> to vector<2x128xf32>
    %547 = arith.truncf %545 : vector<2x32xf32> to vector<2x32xbf16>
    %cst_186 = arith.constant dense<0.000000e+00> : vector<2x128xf32>
    %548 = tpu.matmul %547, %410, %cst_186 {dimension_numbers = #tpu.dot_dimension_numbers<[1], [0], [0], [1], [0, 0, 1, 1], [], []>} : vector<2x32xbf16>, vector<32x128xbf16>, vector<2x128xf32> -> vector<2x128xf32>
    %549 = arith.addf %546, %548 : vector<2x128xf32>
    %550 = arith.negf %549 : vector<2x128xf32>
    %551 = math.exp %550 : vector<2x128xf32>
    %cst_187 = arith.constant 1.000000e+00 : f32
    %552 = vector.broadcast %cst_187 : f32 to vector<2x128xf32>
    %553 = arith.addf %552, %551 : vector<2x128xf32>
    %554 = arith.divf %552, %553 : vector<2x128xf32>
    %555 = vector.extract_strided_slice %554 {offsets = [0, 0], sizes = [2, 32], strides = [1, 1]} : vector<2x128xf32> to vector<2x32xf32>
    %556 = vector.extract_strided_slice %554 {offsets = [0, 32], sizes = [2, 32], strides = [1, 1]} : vector<2x128xf32> to vector<2x32xf32>
    %557 = vector.extract_strided_slice %554 {offsets = [0, 96], sizes = [2, 32], strides = [1, 1]} : vector<2x128xf32> to vector<2x32xf32>
    %558 = vector.extract_strided_slice %549 {offsets = [0, 64], sizes = [2, 32], strides = [1, 1]} : vector<2x128xf32> to vector<2x32xf32>
    %559 = math.tanh %558 : vector<2x32xf32>
    %560 = arith.mulf %556, %543 : vector<2x32xf32>
    %561 = arith.mulf %555, %559 : vector<2x32xf32>
    %562 = arith.addf %560, %561 : vector<2x32xf32>
    %563 = math.tanh %562 : vector<2x32xf32>
    %564 = arith.mulf %557, %563 : vector<2x32xf32>
    %565 = arith.truncf %564 : vector<2x32xf32> to vector<2x32xbf16>
    %c0_188 = arith.constant 0 : index
    %c0_189 = arith.constant 0 : index
    %566 = vector.load %arg18[%c0_188, %c0_189] : memref<32x1xbf16, #tpu.memory_space<vmem>>, vector<32x1xbf16>
    %cst_190 = arith.constant dense<0.000000e+00> : vector<2x1xf32>
    %567 = tpu.matmul %565, %566, %cst_190 {dimension_numbers = #tpu.dot_dimension_numbers<[1], [0], [0], [1], [0, 0, 1, 1], [], []>} : vector<2x32xbf16>, vector<32x1xbf16>, vector<2x1xf32> -> vector<2x1xf32>
    %c0_191 = arith.constant 0 : index
    %c0_192 = arith.constant 0 : index
    %568 = vector.load %arg19[%c0_191, %c0_192] : memref<1x1xf32, #tpu.memory_space<vmem>>, vector<1x1xf32>
    %569 = vector.broadcast %568 : vector<1x1xf32> to vector<2x1xf32>
    %570 = arith.addf %567, %569 : vector<2x1xf32>
    %c0_193 = arith.constant 0 : index
    %c0_194 = arith.constant 0 : index
    %571 = vector.load %arg20[%c0_193, %c0_194] : memref<2x1xf32, #tpu.memory_space<vmem>>, vector<2x1xf32>
    tpu.vector_store %arg20[%c0_193, %c0_194], %570 {strides = array<i32>} : memref<2x1xf32, #tpu.memory_space<vmem>>, vector<2x1xf32>,
    return
  }
}

</mosaic_0001>

<llo_original>
// kernel: hybrid_forward.1
$region0: #{hybrid_forward.1}
  #allocation0 [shape = 'u32[]', space=smem, size = 0x4, offset = 0x4, fixed_abs, tag = 'smem constant byte address 0x4 - core index']
  #allocation1 [shape = 'u32[72,128]{1,0:T(1,128)}', space=vmem, size = 0x9000, scoped, tag = 'internal scratch']
  #allocation2 [shape = 'f32[1,1]{1,0:T(1,128)S(1)}', space=vmem, size = 0x200, scoped, tag = 'scoped memory for hybrid_forward.1']
  %s0 = inlined_call_operand.vmem [shape: f32[16,4], index: 0, kind: input, shape index: {}]
  %s1 = inlined_call_operand.vmem [shape: bf16[4,64], index: 1, kind: input, shape index: {}]
  %s2 = inlined_call_operand.vmem [shape: f32[1,64], index: 2, kind: input, shape index: {}]
  %s3 = inlined_call_operand.vmem [shape: bf16[2,64,192], index: 3, kind: input, shape index: {}]
  %s4 = inlined_call_operand.vmem [shape: f32[2,1,192], index: 4, kind: input, shape index: {}]
  %s5 = inlined_call_operand.vmem [shape: bf16[2,64,64], index: 5, kind: input, shape index: {}]
  %s6 = inlined_call_operand.vmem [shape: f32[2,1,64], index: 6, kind: input, shape index: {}]
  %s7 = inlined_call_operand.vmem [shape: f32[2,1,64], index: 7, kind: input, shape index: {}]
  %s8 = inlined_call_operand.vmem [shape: f32[2,1,64], index: 8, kind: input, shape index: {}]
  %s9 = inlined_call_operand.vmem [shape: bf16[2,64,2048], index: 9, kind: input, shape index: {}]
  %s10 = inlined_call_operand.vmem [shape: f32[2,1,2048], index: 10, kind: input, shape index: {}]
  %s11 = inlined_call_operand.vmem [shape: bf16[2,2048,64], index: 11, kind: input, shape index: {}]
  %s12 = inlined_call_operand.vmem [shape: f32[2,1,64], index: 12, kind: input, shape index: {}]
  %s13 = inlined_call_operand.vmem [shape: f32[2,1,64], index: 13, kind: input, shape index: {}]
  %s14 = inlined_call_operand.vmem [shape: f32[2,1,64], index: 14, kind: input, shape index: {}]
  %s15 = inlined_call_operand.vmem [shape: bf16[64,128], index: 15, kind: input, shape index: {}]
  %s16 = inlined_call_operand.vmem [shape: f32[1,128], index: 16, kind: input, shape index: {}]
  %s17 = inlined_call_operand.vmem [shape: bf16[32,128], index: 17, kind: input, shape index: {}]
  %s18 = inlined_call_operand.vmem [shape: bf16[32,1], index: 18, kind: input, shape index: {}]
  %s19 = inlined_call_operand.<no memory space> [shape: f32[1,1], index: 19, kind: input, shape index: {}]
  %s20 = inlined_call_operand.vmem [shape: f32[2,1], index: 20, kind: output, shape index: {}]
  %s21 = sld [smem:[#allocation0]]
  $region90: #{hybrid_forward.1} parent=0
    _
  %s23 = ssub.s32 1, %s21
  %s24 = scalar_select 0, %s23, %s21
  %v25 = vstv %s19
  %26 = vst [vmem:[#allocation2] sm:$0x1] %v25
  // Predicated region
  $region2: #{hybrid_forward.1} parent=0 // pred_check
    _
  $region3: #{hybrid_forward.1} parent=0 // pred_check_branch
    %28 = sbr.rel (0) target = $region5
  $region4: #{hybrid_forward.1} parent=0 // pred_region
    _
  $region5: #{hybrid_forward.1} parent=0 // pred_fallthru
    _
  // Predicated region
  $region6: #{hybrid_forward.1} parent=0 // pred_check
    _
  $region7: #{hybrid_forward.1} parent=0 // pred_check_branch
    %30 = sbr.rel (0) target = $region9
  $region8: #{hybrid_forward.1} parent=0 // pred_region
    _
  $region9: #{hybrid_forward.1} parent=0 // pred_fallthru
    _
  // Predicated region
  $region10: #{hybrid_forward.1} parent=0 // pred_check
    _
  $region11: #{hybrid_forward.1} parent=0 // pred_check_branch
    %32 = sbr.rel (0) target = $region13
  $region12: #{hybrid_forward.1} parent=0 // pred_region
    _
  $region13: #{hybrid_forward.1} parent=0 // pred_fallthru
    _
  // Predicated region
  $region14: #{hybrid_forward.1} parent=0 // pred_check
    _
  $region15: #{hybrid_forward.1} parent=0 // pred_check_branch
    %34 = sbr.rel (0) target = $region17
  $region16: #{hybrid_forward.1} parent=0 // pred_region
    _
  $region17: #{hybrid_forward.1} parent=0 // pred_fallthru
    _
  // Predicated region
  $region18: #{hybrid_forward.1} parent=0 // pred_check
    _
  $region19: #{hybrid_forward.1} parent=0 // pred_check_branch
    %36 = sbr.rel (0) target = $region21
  $region20: #{hybrid_forward.1} parent=0 // pred_region
    _
  $region21: #{hybrid_forward.1} parent=0 // pred_fallthru
    _
  // Predicated region
  $region22: #{hybrid_forward.1} parent=0 // pred_check
    _
  $region23: #{hybrid_forward.1} parent=0 // pred_check_branch
    %38 = sbr.rel (0) target = $region25
  $region24: #{hybrid_forward.1} parent=0 // pred_region
    _
  $region25: #{hybrid_forward.1} parent=0 // pred_fallthru
    _
  // Predicated region
  $region26: #{hybrid_forward.1} parent=0 // pred_check
    _
  $region27: #{hybrid_forward.1} parent=0 // pred_check_branch
    %40 = sbr.rel (0) target = $region29
  $region28: #{hybrid_forward.1} parent=0 // pred_region
    _
  $region29: #{hybrid_forward.1} parent=0 // pred_fallthru
    _
  // Predicated region
  $region30: #{hybrid_forward.1} parent=0 // pred_check
    _
  $region31: #{hybrid_forward.1} parent=0 // pred_check_branch
    %42 = sbr.rel (0) target = $region33
  $region32: #{hybrid_forward.1} parent=0 // pred_region
    _
  $region33: #{hybrid_forward.1} parent=0 // pred_fallthru
    _
  // Predicated region
  $region34: #{hybrid_forward.1} parent=0 // pred_check
    _
  $region35: #{hybrid_forward.1} parent=0 // pred_check_branch
    %44 = sbr.rel (0) target = $region37
  $region36: #{hybrid_forward.1} parent=0 // pred_region
    _
  $region37: #{hybrid_forward.1} parent=0 // pred_fallthru
    _
  // Predicated region
  $region38: #{hybrid_forward.1} parent=0 // pred_check
    _
  $region39: #{hybrid_forward.1} parent=0 // pred_check_branch
    %46 = sbr.rel (0) target = $region41
  $region40: #{hybrid_forward.1} parent=0 // pred_region
    _
  $region41: #{hybrid_forward.1} parent=0 // pred_fallthru
    _
  // Predicated region
  $region42: #{hybrid_forward.1} parent=0 // pred_check
    _
  $region43: #{hybrid_forward.1} parent=0 // pred_check_branch
    %48 = sbr.rel (0) target = $region45
  $region44: #{hybrid_forward.1} parent=0 // pred_region
    _
  $region45: #{hybrid_forward.1} parent=0 // pred_fallthru
    _
  // Predicated region
  $region46: #{hybrid_forward.1} parent=0 // pred_check
    _
  $region47: #{hybrid_forward.1} parent=0 // pred_check_branch
    %50 = sbr.rel (0) target = $region49
  $region48: #{hybrid_forward.1} parent=0 // pred_region
    _
  $region49: #{hybrid_forward.1} parent=0 // pred_fallthru
    _
  // Predicated region
  $region50: #{hybrid_forward.1} parent=0 // pred_check
    _
  $region51: #{hybrid_forward.1} parent=0 // pred_check_branch
    %52 = sbr.rel (0) target = $region53
  $region52: #{hybrid_forward.1} parent=0 // pred_region
    _
  $region53: #{hybrid_forward.1} parent=0 // pred_fallthru
    _
  // Predicated region
  $region54: #{hybrid_forward.1} parent=0 // pred_check
    _
  $region55: #{hybrid_forward.1} parent=0 // pred_check_branch
    %54 = sbr.rel (0) target = $region57
  $region56: #{hybrid_forward.1} parent=0 // pred_region
    _
  $region57: #{hybrid_forward.1} parent=0 // pred_fallthru
    _
  // Predicated region
  $region58: #{hybrid_forward.1} parent=0 // pred_check
    _
  $region59: #{hybrid_forward.1} parent=0 // pred_check_branch
    %56 = sbr.rel (0) target = $region61
  $region60: #{hybrid_forward.1} parent=0 // pred_region
    _
  $region61: #{hybrid_forward.1} parent=0 // pred_fallthru
    _
  // Predicated region
  $region62: #{hybrid_forward.1} parent=0 // pred_check
    _
  $region63: #{hybrid_forward.1} parent=0 // pred_check_branch
    %58 = sbr.rel (0) target = $region65
  $region64: #{hybrid_forward.1} parent=0 // pred_region
    _
  $region65: #{hybrid_forward.1} parent=0 // pred_fallthru
    _
  // Predicated region
  $region66: #{hybrid_forward.1} parent=0 // pred_check
    _
  $region67: #{hybrid_forward.1} parent=0 // pred_check_branch
    %60 = sbr.rel (0) target = $region69
  $region68: #{hybrid_forward.1} parent=0 // pred_region
    _
  $region69: #{hybrid_forward.1} parent=0 // pred_fallthru
    _
  // Predicated region
  $region70: #{hybrid_forward.1} parent=0 // pred_check
    _
  $region71: #{hybrid_forward.1} parent=0 // pred_check_branch
    %62 = sbr.rel (0) target = $region73
  $region72: #{hybrid_forward.1} parent=0 // pred_region
    _
  $region73: #{hybrid_forward.1} parent=0 // pred_fallthru
    _
  // Predicated region
  $region74: #{hybrid_forward.1} parent=0 // pred_check
    _
  $region75: #{hybrid_forward.1} parent=0 // pred_check_branch
    %64 = sbr.rel (0) target = $region77
  $region76: #{hybrid_forward.1} parent=0 // pred_region
    _
  $region77: #{hybrid_forward.1} parent=0 // pred_fallthru
    _
  // Predicated region
  $region78: #{hybrid_forward.1} parent=0 // pred_check
    _
  $region79: #{hybrid_forward.1} parent=0 // pred_check_branch
    %66 = sbr.rel (0) target = $region81
  $region80: #{hybrid_forward.1} parent=0 // pred_region
    _
  $region81: #{hybrid_forward.1} parent=0 // pred_fallthru
    _
  %v68 = vlaneseq
  %v69 = vshrl.u32 %v68, 7
  %v70 = vadd.s32 %v69, 8
  %vm71 = vcmp.lt.s32.totalorder %v69, 0
  %v72 = vsub.s32 0, %v69
  %v73 = vsel %vm71, %v72, %v69
  %v74 = vshrl.u32 %v73, 1
  %v75 = vand.u32 %v73, 1
  %v76 = vsub.s32 0, %v75
  %v77 = vsel %vm71, %v76, %v75
  %vm78 = vcmp.lt.s32.totalorder %v70, 0
  %v79 = vsub.s32 0, %v70
  %v80 = vsel %vm78, %v79, %v70
  %v81 = vshrl.u32 %v80, 1
  %v82 = vand.u32 %v80, 1
  %v83 = vsub.s32 0, %v82
  %v84 = vsel %vm78, %v83, %v82
  %vm85 = vcmp.ne.s32.totalorder %v77, 0
  %vm86 = vcmp.ne.s32.totalorder %v84, 0
  %vm87 = vcmp.lt.s32.totalorder %v77, 0
  %vm88 = vcmp.lt.s32.totalorder %v84, 0
  %vm89 = vmand %vm87, %vm85
  %vm90 = vmand %vm88, %vm86
  %v91 = vadd.s32 %v77, 2
  %v92 = vadd.s32 %v84, 2
  %v93 = vsel %vm89, %v91, %v77
  %v94 = vsel %vm90, %v92, %v84
  %v95 = vlaneseq
  %v96 = vand.u32 %v95, 127
  %vm97 = vcmp.lt.s32.totalorder %v96, 0
  %v98 = vsub.s32 0, %v96
  %v99 = vsel %vm97, %v98, %v96
  %v100 = vshrl.u32 %v99, 1
  %v101 = vand.u32 %v99, 1
  %v102 = vsub.s32 0, %v101
  %v103 = vsel %vm97, %v102, %v101
  %vm104 = vcmp.ne.s32.totalorder %v103, 0
  %vm105 = vcmp.lt.s32.totalorder %v103, 0
  %vm106 = vmand %vm105, %vm104
  %v107 = vadd.s32 %v103, 2
  %v108 = vsel %vm106, %v107, %v103
  %vm109 = vcmp.eq.s32.totalorder %v93, %v108
  %vm110 = vcmp.eq.s32.totalorder %v94, %v108
  %v111 = vld [vmem:[%s0] sm:$0xff]
  %v112 = vld [vmem:[%s0 + $0x8] sm:$0xff]
  %v113 = vpack.c.bf16 %v112, %v111
  %v114 = vld [vmem:[%s1] sm:$0x3]
  %v115 = vld [vmem:[%s2] sm:$0x1]
  %v117 = vperm.slane %v115, 0
  %vm119 = vcmask 31744
  %v121 = vsel %vm119, %v113, 0
  %vm123 = vcmask 1041408
  %v125 = vsel %vm123, %v114, 0
  %127 = vmatpush.bf16.msra.mxu0 0
  %128 = vmatpush.bf16.msra.mxu0 0
  %129 = vmatpush.bf16.msra.mxu0 0
  %130 = vmatpush.bf16.msra.mxu0 0
  %131 = vmatpush.bf16.msra.mxu0 0
  %132 = vmatpush.bf16.msra.mxu0 0
  %133 = vmatpush.bf16.msra.mxu0 0
  %134 = vmatpush.bf16.msra.mxu0 %v125
  %135 = vmatmul.bf16.gmra.mxu0 %v121
  %v136 = vpop.f32.mrf.mxu0
  %v137 = vadd.f32 %v117, %v136
  %v138 = vpop.f32.mrf.mxu0
  %v139 = vadd.f32 %v117, %v138
  %140 = vdwg.mxu0
  %v141 = vpack.c.bf16 %v139, %v137
  %v142 = vld [vmem:[%s3] sm:$0xff]
  %v143 = vld [vmem:[%s3 + $0x8] sm:$0xff]
  %v144 = vld [vmem:[%s3 + $0x10] sm:$0xff]
  %v145 = vld [vmem:[%s3 + $0x18] sm:$0xff]
  %v146 = vld [vmem:[%s3 + $0x20] sm:$0xff]
  %v147 = vld [vmem:[%s3 + $0x28] sm:$0xff]
  %v148 = vld [vmem:[%s3 + $0x30] sm:$0xff]
  %v149 = vld [vmem:[%s3 + $0x38] sm:$0xff]
  %v150 = vld [vmem:[%s4] sm:$0x3]
  %v152 = vperm.slane %v150, 0
  %v153 = vperm.slane %v150, 1
  %v164 = vunpack.c.l.b16 %v142
  %v165 = vunpack.c.h.b16 %v142
  %v166 = vunpack.c.l.b16 %v143
  %v167 = vunpack.c.h.b16 %v143
  %v168 = vunpack.c.l.b16 %v144
  %v169 = vunpack.c.h.b16 %v144
  %v170 = vunpack.c.l.b16 %v145
  %v171 = vunpack.c.h.b16 %v145
  %v172 = vunpack.c.l.b16 %v146
  %v173 = vunpack.c.h.b16 %v146
  %v174 = vunpack.c.l.b16 %v147
  %v175 = vunpack.c.h.b16 %v147
  %v176 = vunpack.c.l.b16 %v148
  %v177 = vunpack.c.h.b16 %v148
  %v178 = vunpack.c.l.b16 %v149
  %v179 = vunpack.c.h.b16 %v149
  %v180 = vpack.c.b16 %v166, %v164
  %v181 = vpack.c.b16 %v167, %v165
  %v182 = vpack.c.b16 %v170, %v168
  %v183 = vpack.c.b16 %v171, %v169
  %v184 = vpack.c.b16 %v174, %v172
  %v185 = vpack.c.b16 %v175, %v173
  %v186 = vpack.c.b16 %v178, %v176
  %v187 = vpack.c.b16 %v179, %v177
  %vm196 = vcmask 523264
  %v198 = vsel %vm196, %v141, 0
  %200 = vmatpush.bf16.msra.mxu0 0
  %201 = vmatpush.bf16.msra.mxu0 0
  %202 = vmatpush.bf16.msra.mxu0 0
  %203 = vmatpush.bf16.msra.mxu0 0
  %204 = vmatpush.bf16.msra.mxu0 %v186
  %205 = vmatpush.bf16.msra.mxu0 %v184
  %206 = vmatpush.bf16.msra.mxu0 %v182
  %207 = vmatpush.bf16.msra.mxu0 %v180
  %208 = vmatmul.bf16.gmra.mxu0 %v198
  %v209 = vpop.f32.mrf.mxu0
  %v210 = vadd.f32 %v152, %v209
  %v211 = vpop.f32.mrf.mxu0
  %v212 = vadd.f32 %v152, %v211
  %213 = vdwg.mxu0
  %214 = vmatpush.bf16.msra.mxu0 0
  %215 = vmatpush.bf16.msra.mxu0 0
  %216 = vmatpush.bf16.msra.mxu0 0
  %217 = vmatpush.bf16.msra.mxu0 0
  %218 = vmatpush.bf16.msra.mxu0 %v187
  %219 = vmatpush.bf16.msra.mxu0 %v185
  %220 = vmatpush.bf16.msra.mxu0 %v183
  %221 = vmatpush.bf16.msra.mxu0 %v181
  %222 = vmatmul.bf16.gmra.mxu0 %v198
  %v223 = vpop.f32.mrf.mxu0
  %v224 = vadd.f32 %v153, %v223
  %v225 = vpop.f32.mrf.mxu0
  %v226 = vadd.f32 %v153, %v225
  %227 = vdwg.mxu0
  %v228 = vpack.c.bf16 %v212, %v210
  %v229 = vpack.c.bf16 %v226, %v224
  %231 = vrot.lane.b32.xlu0 %v228, 64
  %v232 = vpop.permute.xlu0 %231
  %vm233 = vcmask 130048
  %v235 = vsel %vm233, %v228, 0
  %v238 = vsel %vm233, %v232, 0
  %240 = vmatpush.bf16.xpose.msra.mxu0 0
  %241 = vmatpush.bf16.xpose.msra.mxu0 0
  %242 = vmatpush.bf16.xpose.msra.mxu0 0
  %243 = vmatpush.bf16.xpose.msra.mxu0 0
  %244 = vmatpush.bf16.xpose.msra.mxu0 0
  %245 = vmatpush.bf16.xpose.msra.mxu0 0
  %246 = vmatpush.bf16.xpose.msra.mxu0 0
  %247 = vmatpush.bf16.xpose.msra.mxu0 %v238
  %248 = vmatmul.bf16.gmra.mxu0 %v235
  %v249 = vpop.f32.mrf.mxu0
  %v250 = vadd.f32 0.0, %v249
  %v251 = vpop.f32.mrf.mxu0
  %v252 = vadd.f32 0.0, %v251
  %253 = vdwg.mxu0
  %v254 = vmul.f32 %v250, 0.25
  %v255 = vmul.f32 %v252, 0.25
  %v256 = vsel %vm109, %v254, -1e+30
  %v257 = vsel %vm110, %v255, -1e+30
  %v258 = vsel %vm233, %v256, -inf
  %259 = vmax.xlane.f32.xlu0 %v258
  %v260 = vpop.xlane.xlu0 %259
  %v261 = vsel %vm233, %v257, -inf
  %262 = vmax.xlane.f32.xlu0 %v261
  %v263 = vpop.xlane.xlu0 %262
  %v264 = vsub.f32 %v256, %v260
  %v265 = vsub.f32 %v257, %v263
  %v266 = vmul.f32 %v264, 1.442695
  %v267 = vpow.pop %v266
  %v268 = vmul.f32 %v265, 1.442695
  %v269 = vpow.pop %v268
  %v270 = vsel %vm233, %v267, 0.0
  %271 = vadd.xlane.f32.xlu0 %v270
  %v272 = vpop.xlane.xlu0 %271
  %v273 = vsel %vm233, %v269, 0.0
  %274 = vadd.xlane.f32.xlu0 %v273
  %v275 = vpop.xlane.xlu0 %274
  %v276 = vrcp.pop %v272
  %v277 = vrcp.pop %v275
  %v278 = vmul.f32 %v267, %v276
  %v279 = vmul.f32 %v269, %v277
  %v280 = vpack.c.bf16 %v279, %v278
  %v282 = vsel %vm233, %v280, 0
  %284 = vmatpush.bf16.msra.mxu0 0
  %285 = vmatpush.bf16.msra.mxu0 0
  %286 = vmatpush.bf16.msra.mxu0 0
  %287 = vmatpush.bf16.msra.mxu0 0
  %288 = vmatpush.bf16.msra.mxu0 0
  %289 = vmatpush.bf16.msra.mxu0 0
  %290 = vmatpush.bf16.msra.mxu0 0
  %291 = vmatpush.bf16.msra.mxu0 %v229
  %292 = vmatmul.bf16.gmra.mxu0 %v282
  %v293 = vpop.f32.mrf.mxu0
  %v294 = vadd.f32 0.0, %v293
  %v295 = vpop.f32.mrf.mxu0
  %v296 = vadd.f32 0.0, %v295
  %297 = vdwg.mxu0
  %298 = vrot.lane.b32.xlu0 %v228, 112
  %v299 = vpop.permute.xlu0 %298
  %300 = vrot.lane.b32.xlu0 %v228, 48
  %v301 = vpop.permute.xlu0 %300
  %v303 = vsel %vm233, %v299, 0
  %v306 = vsel %vm233, %v301, 0
  %308 = vmatpush.bf16.xpose.msra.mxu0 0
  %309 = vmatpush.bf16.xpose.msra.mxu0 0
  %310 = vmatpush.bf16.xpose.msra.mxu0 0
  %311 = vmatpush.bf16.xpose.msra.mxu0 0
  %312 = vmatpush.bf16.xpose.msra.mxu0 0
  %313 = vmatpush.bf16.xpose.msra.mxu0 0
  %314 = vmatpush.bf16.xpose.msra.mxu0 0
  %315 = vmatpush.bf16.xpose.msra.mxu0 %v306
  %316 = vmatmul.bf16.gmra.mxu0 %v303
  %v317 = vpop.f32.mrf.mxu0
  %v318 = vadd.f32 0.0, %v317
  %v319 = vpop.f32.mrf.mxu0
  %v320 = vadd.f32 0.0, %v319
  %321 = vdwg.mxu0
  %v322 = vmul.f32 %v318, 0.25
  %v323 = vmul.f32 %v320, 0.25
  %v324 = vsel %vm109, %v322, -1e+30
  %v325 = vsel %vm110, %v323, -1e+30
  %v326 = vsel %vm233, %v324, -inf
  %327 = vmax.xlane.f32.xlu0 %v326
  %v328 = vpop.xlane.xlu0 %327
  %v329 = vsel %vm233, %v325, -inf
  %330 = vmax.xlane.f32.xlu0 %v329
  %v331 = vpop.xlane.xlu0 %330
  %v332 = vsub.f32 %v324, %v328
  %v333 = vsub.f32 %v325, %v331
  %v334 = vmul.f32 %v332, 1.442695
  %v335 = vpow.pop %v334
  %v336 = vmul.f32 %v333, 1.442695
  %v337 = vpow.pop %v336
  %v338 = vsel %vm233, %v335, 0.0
  %339 = vadd.xlane.f32.xlu0 %v338
  %v340 = vpop.xlane.xlu0 %339
  %v341 = vsel %vm233, %v337, 0.0
  %342 = vadd.xlane.f32.xlu0 %v341
  %v343 = vpop.xlane.xlu0 %342
  %v344 = vrcp.pop %v340
  %v345 = vrcp.pop %v343
  %v346 = vmul.f32 %v335, %v344
  %v347 = vmul.f32 %v337, %v345
  %v348 = vpack.c.bf16 %v347, %v346
  %350 = vrot.lane.b32.xlu0 %v229, 112
  %v351 = vpop.permute.xlu0 %350
  %v354 = vsel %vm233, %v348, 0
  %356 = vmatpush.bf16.msra.mxu0 0
  %357 = vmatpush.bf16.msra.mxu0 0
  %358 = vmatpush.bf16.msra.mxu0 0
  %359 = vmatpush.bf16.msra.mxu0 0
  %360 = vmatpush.bf16.msra.mxu0 0
  %361 = vmatpush.bf16.msra.mxu0 0
  %362 = vmatpush.bf16.msra.mxu0 0
  %363 = vmatpush.bf16.msra.mxu0 %v351
  %364 = vmatmul.bf16.gmra.mxu0 %v354
  %v365 = vpop.f32.mrf.mxu0
  %v366 = vadd.f32 0.0, %v365
  %v367 = vpop.f32.mrf.mxu0
  %v368 = vadd.f32 0.0, %v367
  %369 = vdwg.mxu0
  %370 = vrot.lane.b32.xlu0 %v228, 96
  %v371 = vpop.permute.xlu0 %370
  %372 = vrot.lane.b32.xlu0 %v228, 32
  %v373 = vpop.permute.xlu0 %372
  %v375 = vsel %vm233, %v371, 0
  %v378 = vsel %vm233, %v373, 0
  %380 = vmatpush.bf16.xpose.msra.mxu0 0
  %381 = vmatpush.bf16.xpose.msra.mxu0 0
  %382 = vmatpush.bf16.xpose.msra.mxu0 0
  %383 = vmatpush.bf16.xpose.msra.mxu0 0
  %384 = vmatpush.bf16.xpose.msra.mxu0 0
  %385 = vmatpush.bf16.xpose.msra.mxu0 0
  %386 = vmatpush.bf16.xpose.msra.mxu0 0
  %387 = vmatpush.bf16.xpose.msra.mxu0 %v378
  %388 = vmatmul.bf16.gmra.mxu0 %v375
  %v389 = vpop.f32.mrf.mxu0
  %v390 = vadd.f32 0.0, %v389
  %v391 = vpop.f32.mrf.mxu0
  %v392 = vadd.f32 0.0, %v391
  %393 = vdwg.mxu0
  %v394 = vmul.f32 %v390, 0.25
  %v395 = vmul.f32 %v392, 0.25
  %v396 = vsel %vm109, %v394, -1e+30
  %v397 = vsel %vm110, %v395, -1e+30
  %v398 = vsel %vm233, %v396, -inf
  %399 = vmax.xlane.f32.xlu0 %v398
  %v400 = vpop.xlane.xlu0 %399
  %v401 = vsel %vm233, %v397, -inf
  %402 = vmax.xlane.f32.xlu0 %v401
  %v403 = vpop.xlane.xlu0 %402
  %v404 = vsub.f32 %v396, %v400
  %v405 = vsub.f32 %v397, %v403
  %v406 = vmul.f32 %v404, 1.442695
  %v407 = vpow.pop %v406
  %v408 = vmul.f32 %v405, 1.442695
  %v409 = vpow.pop %v408
  %v410 = vsel %vm233, %v407, 0.0
  %411 = vadd.xlane.f32.xlu0 %v410
  %v412 = vpop.xlane.xlu0 %411
  %v413 = vsel %vm233, %v409, 0.0
  %414 = vadd.xlane.f32.xlu0 %v413
  %v415 = vpop.xlane.xlu0 %414
  %v416 = vrcp.pop %v412
  %v417 = vrcp.pop %v415
  %v418 = vmul.f32 %v407, %v416
  %v419 = vmul.f32 %v409, %v417
  %v420 = vpack.c.bf16 %v419, %v418
  %421 = vrot.lane.b32.xlu0 %v229, 96
  %v422 = vpop.permute.xlu0 %421
  %v425 = vsel %vm233, %v420, 0
  %427 = vmatpush.bf16.msra.mxu0 0
  %428 = vmatpush.bf16.msra.mxu0 0
  %429 = vmatpush.bf16.msra.mxu0 0
  %430 = vmatpush.bf16.msra.mxu0 0
  %431 = vmatpush.bf16.msra.mxu0 0
  %432 = vmatpush.bf16.msra.mxu0 0
  %433 = vmatpush.bf16.msra.mxu0 0
  %434 = vmatpush.bf16.msra.mxu0 %v422
  %435 = vmatmul.bf16.gmra.mxu0 %v425
  %v436 = vpop.f32.mrf.mxu0
  %v437 = vadd.f32 0.0, %v436
  %v438 = vpop.f32.mrf.mxu0
  %v439 = vadd.f32 0.0, %v438
  %440 = vdwg.mxu0
  %441 = vrot.lane.b32.xlu0 %v228, 80
  %v442 = vpop.permute.xlu0 %441
  %443 = vrot.lane.b32.xlu0 %v228, 16
  %v444 = vpop.permute.xlu0 %443
  %v446 = vsel %vm233, %v442, 0
  %v449 = vsel %vm233, %v444, 0
  %451 = vmatpush.bf16.xpose.msra.mxu0 0
  %452 = vmatpush.bf16.xpose.msra.mxu0 0
  %453 = vmatpush.bf16.xpose.msra.mxu0 0
  %454 = vmatpush.bf16.xpose.msra.mxu0 0
  %455 = vmatpush.bf16.xpose.msra.mxu0 0
  %456 = vmatpush.bf16.xpose.msra.mxu0 0
  %457 = vmatpush.bf16.xpose.msra.mxu0 0
  %458 = vmatpush.bf16.xpose.msra.mxu0 %v449
  %459 = vmatmul.bf16.gmra.mxu0 %v446
  %v460 = vpop.f32.mrf.mxu0
  %v461 = vadd.f32 0.0, %v460
  %v462 = vpop.f32.mrf.mxu0
  %v463 = vadd.f32 0.0, %v462
  %464 = vdwg.mxu0
  %v465 = vmul.f32 %v461, 0.25
  %v466 = vmul.f32 %v463, 0.25
  %v467 = vsel %vm109, %v465, -1e+30
  %v468 = vsel %vm110, %v466, -1e+30
  %v469 = vsel %vm233, %v467, -inf
  %470 = vmax.xlane.f32.xlu0 %v469
  %v471 = vpop.xlane.xlu0 %470
  %v472 = vsel %vm233, %v468, -inf
  %473 = vmax.xlane.f32.xlu0 %v472
  %v474 = vpop.xlane.xlu0 %473
  %v475 = vsub.f32 %v467, %v471
  %v476 = vsub.f32 %v468, %v474
  %v477 = vmul.f32 %v475, 1.442695
  %v478 = vpow.pop %v477
  %v479 = vmul.f32 %v476, 1.442695
  %v480 = vpow.pop %v479
  %v481 = vsel %vm233, %v478, 0.0
  %482 = vadd.xlane.f32.xlu0 %v481
  %v483 = vpop.xlane.xlu0 %482
  %v484 = vsel %vm233, %v480, 0.0
  %485 = vadd.xlane.f32.xlu0 %v484
  %v486 = vpop.xlane.xlu0 %485
  %v487 = vrcp.pop %v483
  %v488 = vrcp.pop %v486
  %v489 = vmul.f32 %v478, %v487
  %v490 = vmul.f32 %v480, %v488
  %v491 = vpack.c.bf16 %v490, %v489
  %492 = vrot.lane.b32.xlu0 %v229, 80
  %v493 = vpop.permute.xlu0 %492
  %v496 = vsel %vm233, %v491, 0
  %498 = vmatpush.bf16.msra.mxu0 0
  %499 = vmatpush.bf16.msra.mxu0 0
  %500 = vmatpush.bf16.msra.mxu0 0
  %501 = vmatpush.bf16.msra.mxu0 0
  %502 = vmatpush.bf16.msra.mxu0 0
  %503 = vmatpush.bf16.msra.mxu0 0
  %504 = vmatpush.bf16.msra.mxu0 0
  %505 = vmatpush.bf16.msra.mxu0 %v493
  %506 = vmatmul.bf16.gmra.mxu0 %v496
  %v507 = vpop.f32.mrf.mxu0
  %v508 = vadd.f32 0.0, %v507
  %v509 = vpop.f32.mrf.mxu0
  %v510 = vadd.f32 0.0, %v509
  %511 = vdwg.mxu0
  %514 = vrot.lane.b32.xlu0 %v366, 16
  %v515 = vpop.permute.xlu0 %514
  %516 = vrot.lane.b32.xlu0 %v368, 16
  %v517 = vpop.permute.xlu0 %516
  %522 = vrot.lane.b32.xlu0 %v437, 32
  %v523 = vpop.permute.xlu0 %522
  %524 = vrot.lane.b32.xlu0 %v439, 32
  %v525 = vpop.permute.xlu0 %524
  %530 = vrot.lane.b32.xlu0 %v508, 48
  %v531 = vpop.permute.xlu0 %530
  %532 = vrot.lane.b32.xlu0 %v510, 48
  %v533 = vpop.permute.xlu0 %532
  %v536 = vsel %vm233, %v294, %v515
  %v537 = vsel %vm233, %v296, %v517
  %vm538 = vcmask 261120
  %v539 = vsel %vm538, %v536, %v523
  %v540 = vsel %vm538, %v537, %v525
  %vm541 = vcmask 392192
  %v542 = vsel %vm541, %v539, %v531
  %v543 = vsel %vm541, %v540, %v533
  %v544 = vpack.c.bf16 %v543, %v542
  %v545 = vld [vmem:[%s5] sm:$0xf]
  %v546 = vld [vmem:[%s5 + $0x4] sm:$0xf]
  %v547 = vld [vmem:[%s5 + $0x8] sm:$0xf]
  %v548 = vld [vmem:[%s5 + $0xc] sm:$0xf]
  %v549 = vld [vmem:[%s5 + $0x10] sm:$0xf]
  %v550 = vld [vmem:[%s5 + $0x14] sm:$0xf]
  %v551 = vld [vmem:[%s5 + $0x18] sm:$0xf]
  %v552 = vld [vmem:[%s5 + $0x1c] sm:$0xf]
  %v553 = vld [vmem:[%s6] sm:$0x1]
  %v555 = vperm.slane %v553, 0
  %v565 = vunpack.c.l.b16 %v545
  %v566 = vunpack.c.l.b16 %v546
  %v567 = vunpack.c.l.b16 %v547
  %v568 = vunpack.c.l.b16 %v548
  %v569 = vunpack.c.l.b16 %v549
  %v570 = vunpack.c.l.b16 %v550
  %v571 = vunpack.c.l.b16 %v551
  %v572 = vunpack.c.l.b16 %v552
  %v573 = vpack.c.b16 %v566, %v565
  %v574 = vpack.c.b16 %v568, %v567
  %v575 = vpack.c.b16 %v570, %v569
  %v576 = vpack.c.b16 %v572, %v571
  %v582 = vsel %vm196, %v544, 0
  %584 = vmatpush.bf16.msra.mxu0 0
  %585 = vmatpush.bf16.msra.mxu0 0
  %586 = vmatpush.bf16.msra.mxu0 0
  %587 = vmatpush.bf16.msra.mxu0 0
  %588 = vmatpush.bf16.msra.mxu0 %v576
  %589 = vmatpush.bf16.msra.mxu0 %v575
  %590 = vmatpush.bf16.msra.mxu0 %v574
  %591 = vmatpush.bf16.msra.mxu0 %v573
  %592 = vmatmul.bf16.gmra.mxu0 %v582
  %v593 = vpop.f32.mrf.mxu0
  %v594 = vadd.f32 %v555, %v593
  %v595 = vpop.f32.mrf.mxu0
  %v596 = vadd.f32 %v555, %v595
  %597 = vdwg.mxu0
  %v598 = vld [vmem:[%s7] sm:$0x1]
  %v599 = vld [vmem:[%s8] sm:$0x1]
  %v600 = vadd.f32 %v137, %v594
  %v601 = vadd.f32 %v139, %v596
  %v602 = vsel %vm196, %v600, 0.0
  %603 = vadd.xlane.f32.xlu0 %v602
  %v604 = vpop.xlane.xlu0 %603
  %v605 = vsel %vm196, %v601, 0.0
  %606 = vadd.xlane.f32.xlu0 %v605
  %v607 = vpop.xlane.xlu0 %606
  %v608 = vrcp.pop 64.0
  %v609 = vmul.f32 64.0, %v608
  %v610 = vsub.f32 1.0, %v609
  %v611 = vmul.f32 %v608, %v610
  %v612 = vadd.f32 %v608, %v611
  %vm613 = vweird.f32 %v608
  %v614 = vsel %vm613, %v608, %v612
  %v615 = vmul.f32 %v604, %v614
  %v616 = vmul.f32 %v607, %v614
  %v617 = vsub.f32 %v600, %v615
  %v618 = vsub.f32 %v601, %v616
  %v619 = vmul.f32 %v617, %v617
  %v620 = vmul.f32 %v618, %v618
  %v621 = vsel %vm196, %v619, 0.0
  %622 = vadd.xlane.f32.xlu0 %v621
  %v623 = vpop.xlane.xlu0 %622
  %v624 = vsel %vm196, %v620, 0.0
  %625 = vadd.xlane.f32.xlu0 %v624
  %v626 = vpop.xlane.xlu0 %625
  %v627 = vmul.f32 %v623, %v614
  %v628 = vmul.f32 %v626, %v614
  %v629 = vadd.f32 %v627, 1e-05
  %v630 = vadd.f32 %v628, 1e-05
  %v631 = vrsqrt.pop %v629
  %v632 = vmul.f32 %v631, %v629
  %v633 = vmul.f32 %v632, %v631
  %v634 = vmul.f32 0.5, %v633
  %v635 = vsub.f32 1.5, %v634
  %v636 = vmul.f32 %v631, %v635
  %vm637 = vweird.f32 %v629
  %vm638 = vweird.f32 %v631
  %vm639 = vmor %vm637, %vm638
  %v640 = vsel %vm639, %v631, %v636
  %v641 = vrsqrt.pop %v630
  %v642 = vmul.f32 %v641, %v630
  %v643 = vmul.f32 %v642, %v641
  %v644 = vmul.f32 0.5, %v643
  %v645 = vsub.f32 1.5, %v644
  %v646 = vmul.f32 %v641, %v645
  %vm647 = vweird.f32 %v630
  %vm648 = vweird.f32 %v641
  %vm649 = vmor %vm647, %vm648
  %v650 = vsel %vm649, %v641, %v646
  %v651 = vmul.f32 %v617, %v640
  %v652 = vmul.f32 %v618, %v650
  %v654 = vperm.slane %v598, 0
  %v656 = vmul.f32 %v651, %v654
  %v657 = vmul.f32 %v652, %v654
  %v659 = vperm.slane %v599, 0
  %v661 = vadd.f32 %v656, %v659
  %v662 = vadd.f32 %v657, %v659
  %v663 = vpack.c.bf16 %v662, %v661
  %v664 = vld [vmem:[%s9] sm:$0xff]
  %v665 = vld [vmem:[%s9 + $0x8] sm:$0xff]
  %v666 = vld [vmem:[%s9 + $0x10] sm:$0xff]
  %v667 = vld [vmem:[%s9 + $0x18] sm:$0xff]
  %v668 = vld [vmem:[%s9 + $0x20] sm:$0xff]
  %v669 = vld [vmem:[%s9 + $0x28] sm:$0xff]
  %v670 = vld [vmem:[%s9 + $0x30] sm:$0xff]
  %v671 = vld [vmem:[%s9 + $0x38] sm:$0xff]
  %v672 = vld [vmem:[%s9 + $0x40] sm:$0xff]
  %v673 = vld [vmem:[%s9 + $0x48] sm:$0xff]
  %v674 = vld [vmem:[%s9 + $0x50] sm:$0xff]
  %v675 = vld [vmem:[%s9 + $0x58] sm:$0xff]
  %v676 = vld [vmem:[%s9 + $0x60] sm:$0xff]
  %v677 = vld [vmem:[%s9 + $0x68] sm:$0xff]
  %v678 = vld [vmem:[%s9 + $0x70] sm:$0xff]
  %v679 = vld [vmem:[%s9 + $0x78] sm:$0xff]
  %v680 = vld [vmem:[%s9 + $0x80] sm:$0xff]
  %v681 = vld [vmem:[%s9 + $0x88] sm:$0xff]
  %v682 = vld [vmem:[%s9 + $0x90] sm:$0xff]
  %v683 = vld [vmem:[%s9 + $0x98] sm:$0xff]
  %v684 = vld [vmem:[%s9 + $0xa0] sm:$0xff]
  %v685 = vld [vmem:[%s9 + $0xa8] sm:$0xff]
  %v686 = vld [vmem:[%s9 + $0xb0] sm:$0xff]
  %v687 = vld [vmem:[%s9 + $0xb8] sm:$0xff]
  %v688 = vld [vmem:[%s9 + $0xc0] sm:$0xff]
  %v689 = vld [vmem:[%s9 + $0xc8] sm:$0xff]
  %v690 = vld [vmem:[%s9 + $0xd0] sm:$0xff]
  %v691 = vld [vmem:[%s9 + $0xd8] sm:$0xff]
  %v692 = vld [vmem:[%s9 + $0xe0] sm:$0xff]
  %v693 = vld [vmem:[%s9 + $0xe8] sm:$0xff]
  %v694 = vld [vmem:[%s9 + $0xf0] sm:$0xff]
  %v695 = vld [vmem:[%s9 + $0xf8] sm:$0xff]
  %v696 = vld [vmem:[%s9 + $0x100] sm:$0xff]
  %v697 = vld [vmem:[%s9 + $0x108] sm:$0xff]
  %v698 = vld [vmem:[%s9 + $0x110] sm:$0xff]
  %v699 = vld [vmem:[%s9 + $0x118] sm:$0xff]
  %v700 = vld [vmem:[%s9 + $0x120] sm:$0xff]
  %v701 = vld [vmem:[%s9 + $0x128] sm:$0xff]
  %v702 = vld [vmem:[%s9 + $0x130] sm:$0xff]
  %v703 = vld [vmem:[%s9 + $0x138] sm:$0xff]
  %v704 = vld [vmem:[%s9 + $0x140] sm:$0xff]
  %v705 = vld [vmem:[%s9 + $0x148] sm:$0xff]
  %v706 = vld [vmem:[%s9 + $0x150] sm:$0xff]
  %v707 = vld [vmem:[%s9 + $0x158] sm:$0xff]
  %v708 = vld [vmem:[%s9 + $0x160] sm:$0xff]
  %v709 = vld [vmem:[%s9 + $0x168] sm:$0xff]
  %v710 = vld [vmem:[%s9 + $0x170] sm:$0xff]
  %v711 = vld [vmem:[%s9 + $0x178] sm:$0xff]
  %v712 = vld [vmem:[%s9 + $0x180] sm:$0xff]
  %v713 = vld [vmem:[%s9 + $0x188] sm:$0xff]
  %v714 = vld [vmem:[%s9 + $0x190] sm:$0xff]
  %v715 = vld [vmem:[%s9 + $0x198] sm:$0xff]
  %v716 = vld [vmem:[%s9 + $0x1a0] sm:$0xff]
  %v717 = vld [vmem:[%s9 + $0x1a8] sm:$0xff]
  %v718 = vld [vmem:[%s9 + $0x1b0] sm:$0xff]
  %v719 = vld [vmem:[%s9 + $0x1b8] sm:$0xff]
  %v720 = vld [vmem:[%s9 + $0x1c0] sm:$0xff]
  %v721 = vld [vmem:[%s9 + $0x1c8] sm:$0xff]
  %v722 = vld [vmem:[%s9 + $0x1d0] sm:$0xff]
  %v723 = vld [vmem:[%s9 + $0x1d8] sm:$0xff]
  %v724 = vld [vmem:[%s9 + $0x1e0] sm:$0xff]
  %v725 = vld [vmem:[%s9 + $0x1e8] sm:$0xff]
  %v726 = vld [vmem:[%s9 + $0x1f0] sm:$0xff]
  %v727 = vld [vmem:[%s9 + $0x1f8] sm:$0xff]
  %v728 = vld [vmem:[%s10] sm:$0xff]
  %v729 = vld [vmem:[%s10 + $0x8] sm:$0xff]
  %v732 = vperm.slane %v728, 0
  %v733 = vperm.slane %v728, 1
  %v734 = vperm.slane %v728, 2
  %v735 = vperm.slane %v728, 3
  %v736 = vperm.slane %v728, 4
  %v737 = vperm.slane %v728, 5
  %v738 = vperm.slane %v728, 6
  %v739 = vperm.slane %v728, 7
  %v740 = vperm.slane %v729, 0
  %v741 = vperm.slane %v729, 1
  %v742 = vperm.slane %v729, 2
  %v743 = vperm.slane %v729, 3
  %v744 = vperm.slane %v729, 4
  %v745 = vperm.slane %v729, 5
  %v746 = vperm.slane %v729, 6
  %v747 = vperm.slane %v729, 7
  %v828 = vunpack.c.l.b16 %v664
  %v829 = vunpack.c.h.b16 %v664
  %v830 = vunpack.c.l.b16 %v665
  %v831 = vunpack.c.h.b16 %v665
  %v832 = vunpack.c.l.b16 %v666
  %v833 = vunpack.c.h.b16 %v666
  %v834 = vunpack.c.l.b16 %v667
  %v835 = vunpack.c.h.b16 %v667
  %v836 = vunpack.c.l.b16 %v668
  %v837 = vunpack.c.h.b16 %v668
  %v838 = vunpack.c.l.b16 %v669
  %v839 = vunpack.c.h.b16 %v669
  %v840 = vunpack.c.l.b16 %v670
  %v841 = vunpack.c.h.b16 %v670
  %v842 = vunpack.c.l.b16 %v671
  %v843 = vunpack.c.h.b16 %v671
  %v844 = vunpack.c.l.b16 %v672
  %v845 = vunpack.c.h.b16 %v672
  %v846 = vunpack.c.l.b16 %v673
  %v847 = vunpack.c.h.b16 %v673
  %v848 = vunpack.c.l.b16 %v674
  %v849 = vunpack.c.h.b16 %v674
  %v850 = vunpack.c.l.b16 %v675
  %v851 = vunpack.c.h.b16 %v675
  %v852 = vunpack.c.l.b16 %v676
  %v853 = vunpack.c.h.b16 %v676
  %v854 = vunpack.c.l.b16 %v677
  %v855 = vunpack.c.h.b16 %v677
  %v856 = vunpack.c.l.b16 %v678
  %v857 = vunpack.c.h.b16 %v678
  %v858 = vunpack.c.l.b16 %v679
  %v859 = vunpack.c.h.b16 %v679
  %v860 = vunpack.c.l.b16 %v680
  %v861 = vunpack.c.h.b16 %v680
  %v862 = vunpack.c.l.b16 %v681
  %v863 = vunpack.c.h.b16 %v681
  %v864 = vunpack.c.l.b16 %v682
  %v865 = vunpack.c.h.b16 %v682
  %v866 = vunpack.c.l.b16 %v683
  %v867 = vunpack.c.h.b16 %v683
  %v868 = vunpack.c.l.b16 %v684
  %v869 = vunpack.c.h.b16 %v684
  %v870 = vunpack.c.l.b16 %v685
  %v871 = vunpack.c.h.b16 %v685
  %v872 = vunpack.c.l.b16 %v686
  %v873 = vunpack.c.h.b16 %v686
  %v874 = vunpack.c.l.b16 %v687
  %v875 = vunpack.c.h.b16 %v687
  %v876 = vunpack.c.l.b16 %v688
  %v877 = vunpack.c.h.b16 %v688
  %v878 = vunpack.c.l.b16 %v689
  %v879 = vunpack.c.h.b16 %v689
  %v880 = vunpack.c.l.b16 %v690
  %v881 = vunpack.c.h.b16 %v690
  %v882 = vunpack.c.l.b16 %v691
  %v883 = vunpack.c.h.b16 %v691
  %v884 = vunpack.c.l.b16 %v692
  %v885 = vunpack.c.h.b16 %v692
  %v886 = vunpack.c.l.b16 %v693
  %v887 = vunpack.c.h.b16 %v693
  %v888 = vunpack.c.l.b16 %v694
  %v889 = vunpack.c.h.b16 %v694
  %v890 = vunpack.c.l.b16 %v695
  %v891 = vunpack.c.h.b16 %v695
  %v892 = vunpack.c.l.b16 %v696
  %v893 = vunpack.c.h.b16 %v696
  %v894 = vunpack.c.l.b16 %v697
  %v895 = vunpack.c.h.b16 %v697
  %v896 = vunpack.c.l.b16 %v698
  %v897 = vunpack.c.h.b16 %v698
  %v898 = vunpack.c.l.b16 %v699
  %v899 = vunpack.c.h.b16 %v699
  %v900 = vunpack.c.l.b16 %v700
  %v901 = vunpack.c.h.b16 %v700
  %v902 = vunpack.c.l.b16 %v701
  %v903 = vunpack.c.h.b16 %v701
  %v904 = vunpack.c.l.b16 %v702
  %v905 = vunpack.c.h.b16 %v702
  %v906 = vunpack.c.l.b16 %v703
  %v907 = vunpack.c.h.b16 %v703
  %v908 = vunpack.c.l.b16 %v704
  %v909 = vunpack.c.h.b16 %v704
  %v910 = vunpack.c.l.b16 %v705
  %v911 = vunpack.c.h.b16 %v705
  %v912 = vunpack.c.l.b16 %v706
  %v913 = vunpack.c.h.b16 %v706
  %v914 = vunpack.c.l.b16 %v707
  %v915 = vunpack.c.h.b16 %v707
  %v916 = vunpack.c.l.b16 %v708
  %v917 = vunpack.c.h.b16 %v708
  %v918 = vunpack.c.l.b16 %v709
  %v919 = vunpack.c.h.b16 %v709
  %v920 = vunpack.c.l.b16 %v710
  %v921 = vunpack.c.h.b16 %v710
  %v922 = vunpack.c.l.b16 %v711
  %v923 = vunpack.c.h.b16 %v711
  %v924 = vunpack.c.l.b16 %v712
  %v925 = vunpack.c.h.b16 %v712
  %v926 = vunpack.c.l.b16 %v713
  %v927 = vunpack.c.h.b16 %v713
  %v928 = vunpack.c.l.b16 %v714
  %v929 = vunpack.c.h.b16 %v714
  %v930 = vunpack.c.l.b16 %v715
  %v931 = vunpack.c.h.b16 %v715
  %v932 = vunpack.c.l.b16 %v716
  %v933 = vunpack.c.h.b16 %v716
  %v934 = vunpack.c.l.b16 %v717
  %v935 = vunpack.c.h.b16 %v717
  %v936 = vunpack.c.l.b16 %v718
  %v937 = vunpack.c.h.b16 %v718
  %v938 = vunpack.c.l.b16 %v719
  %v939 = vunpack.c.h.b16 %v719
  %v940 = vunpack.c.l.b16 %v720
  %v941 = vunpack.c.h.b16 %v720
  %v942 = vunpack.c.l.b16 %v721
  %v943 = vunpack.c.h.b16 %v721
  %v944 = vunpack.c.l.b16 %v722
  %v945 = vunpack.c.h.b16 %v722
  %v946 = vunpack.c.l.b16 %v723
  %v947 = vunpack.c.h.b16 %v723
  %v948 = vunpack.c.l.b16 %v724
  %v949 = vunpack.c.h.b16 %v724
  %v950 = vunpack.c.l.b16 %v725
  %v951 = vunpack.c.h.b16 %v725
  %v952 = vunpack.c.l.b16 %v726
  %v953 = vunpack.c.h.b16 %v726
  %v954 = vunpack.c.l.b16 %v727
  %v955 = vunpack.c.h.b16 %v727
  %v956 = vpack.c.b16 %v844, %v828
  %v957 = vpack.c.b16 %v845, %v829
  %v958 = vpack.c.b16 %v846, %v830
  %v959 = vpack.c.b16 %v847, %v831
  %v960 = vpack.c.b16 %v848, %v832
  %v961 = vpack.c.b16 %v849, %v833
  %v962 = vpack.c.b16 %v850, %v834
  %v963 = vpack.c.b16 %v851, %v835
  %v964 = vpack.c.b16 %v852, %v836
  %v965 = vpack.c.b16 %v853, %v837
  %v966 = vpack.c.b16 %v854, %v838
  %v967 = vpack.c.b16 %v855, %v839
  %v968 = vpack.c.b16 %v856, %v840
  %v969 = vpack.c.b16 %v857, %v841
  %v970 = vpack.c.b16 %v858, %v842
  %v971 = vpack.c.b16 %v859, %v843
  %v972 = vpack.c.b16 %v876, %v860
  %v973 = vpack.c.b16 %v877, %v861
  %v974 = vpack.c.b16 %v878, %v862
  %v975 = vpack.c.b16 %v879, %v863
  %v976 = vpack.c.b16 %v880, %v864
  %v977 = vpack.c.b16 %v881, %v865
  %v978 = vpack.c.b16 %v882, %v866
  %v979 = vpack.c.b16 %v883, %v867
  %v980 = vpack.c.b16 %v884, %v868
  %v981 = vpack.c.b16 %v885, %v869
  %v982 = vpack.c.b16 %v886, %v870
  %v983 = vpack.c.b16 %v887, %v871
  %v984 = vpack.c.b16 %v888, %v872
  %v985 = vpack.c.b16 %v889, %v873
  %v986 = vpack.c.b16 %v890, %v874
  %v987 = vpack.c.b16 %v891, %v875
  %v988 = vpack.c.b16 %v908, %v892
  %v989 = vpack.c.b16 %v909, %v893
  %v990 = vpack.c.b16 %v910, %v894
  %v991 = vpack.c.b16 %v911, %v895
  %v992 = vpack.c.b16 %v912, %v896
  %v993 = vpack.c.b16 %v913, %v897
  %v994 = vpack.c.b16 %v914, %v898
  %v995 = vpack.c.b16 %v915, %v899
  %v996 = vpack.c.b16 %v916, %v900
  %v997 = vpack.c.b16 %v917, %v901
  %v998 = vpack.c.b16 %v918, %v902
  %v999 = vpack.c.b16 %v919, %v903
  %v1000 = vpack.c.b16 %v920, %v904
  %v1001 = vpack.c.b16 %v921, %v905
  %v1002 = vpack.c.b16 %v922, %v906
  %v1003 = vpack.c.b16 %v923, %v907
  %v1004 = vpack.c.b16 %v940, %v924
  %v1005 = vpack.c.b16 %v941, %v925
  %v1006 = vpack.c.b16 %v942, %v926
  %v1007 = vpack.c.b16 %v943, %v927
  %v1008 = vpack.c.b16 %v944, %v928
  %v1009 = vpack.c.b16 %v945, %v929
  %v1010 = vpack.c.b16 %v946, %v930
  %v1011 = vpack.c.b16 %v947, %v931
  %v1012 = vpack.c.b16 %v948, %v932
  %v1013 = vpack.c.b16 %v949, %v933
  %v1014 = vpack.c.b16 %v950, %v934
  %v1015 = vpack.c.b16 %v951, %v935
  %v1016 = vpack.c.b16 %v952, %v936
  %v1017 = vpack.c.b16 %v953, %v937
  %v1018 = vpack.c.b16 %v954, %v938
  %v1019 = vpack.c.b16 %v955, %v939
  %v1085 = vsel %vm196, %v663, 0
  %1087 = vmatpush.bf16.msra.mxu0 0
  %1088 = vmatpush.bf16.msra.mxu0 0
  %1089 = vmatpush.bf16.msra.mxu0 0
  %1090 = vmatpush.bf16.msra.mxu0 0
  %1091 = vmatpush.bf16.msra.mxu0 %v1004
  %1092 = vmatpush.bf16.msra.mxu0 %v988
  %1093 = vmatpush.bf16.msra.mxu0 %v972
  %1094 = vmatpush.bf16.msra.mxu0 %v956
  %1095 = vmatmul.bf16.gmra.mxu0 %v1085
  %v1096 = vpop.f32.mrf.mxu0
  %v1097 = vadd.f32 %v732, %v1096
  %v1098 = vpop.f32.mrf.mxu0
  %v1099 = vadd.f32 %v732, %v1098
  %1100 = vdwg.mxu0
  %1101 = vmatpush.bf16.msra.mxu0 0
  %1102 = vmatpush.bf16.msra.mxu0 0
  %1103 = vmatpush.bf16.msra.mxu0 0
  %1104 = vmatpush.bf16.msra.mxu0 0
  %1105 = vmatpush.bf16.msra.mxu0 %v1005
  %1106 = vmatpush.bf16.msra.mxu0 %v989
  %1107 = vmatpush.bf16.msra.mxu0 %v973
  %1108 = vmatpush.bf16.msra.mxu0 %v957
  %1109 = vmatmul.bf16.gmra.mxu0 %v1085
  %v1110 = vpop.f32.mrf.mxu0
  %v1111 = vadd.f32 %v733, %v1110
  %v1112 = vpop.f32.mrf.mxu0
  %v1113 = vadd.f32 %v733, %v1112
  %1114 = vdwg.mxu0
  %1115 = vmatpush.bf16.msra.mxu0 0
  %1116 = vmatpush.bf16.msra.mxu0 0
  %1117 = vmatpush.bf16.msra.mxu0 0
  %1118 = vmatpush.bf16.msra.mxu0 0
  %1119 = vmatpush.bf16.msra.mxu0 %v1006
  %1120 = vmatpush.bf16.msra.mxu0 %v990
  %1121 = vmatpush.bf16.msra.mxu0 %v974
  %1122 = vmatpush.bf16.msra.mxu0 %v958
  %1123 = vmatmul.bf16.gmra.mxu0 %v1085
  %v1124 = vpop.f32.mrf.mxu0
  %v1125 = vadd.f32 %v734, %v1124
  %v1126 = vpop.f32.mrf.mxu0
  %v1127 = vadd.f32 %v734, %v1126
  %1128 = vdwg.mxu0
  %1129 = vmatpush.bf16.msra.mxu0 0
  %1130 = vmatpush.bf16.msra.mxu0 0
  %1131 = vmatpush.bf16.msra.mxu0 0
  %1132 = vmatpush.bf16.msra.mxu0 0
  %1133 = vmatpush.bf16.msra.mxu0 %v1007
  %1134 = vmatpush.bf16.msra.mxu0 %v991
  %1135 = vmatpush.bf16.msra.mxu0 %v975
  %1136 = vmatpush.bf16.msra.mxu0 %v959
  %1137 = vmatmul.bf16.gmra.mxu0 %v1085
  %v1138 = vpop.f32.mrf.mxu0
  %v1139 = vadd.f32 %v735, %v1138
  %v1140 = vpop.f32.mrf.mxu0
  %v1141 = vadd.f32 %v735, %v1140
  %1142 = vdwg.mxu0
  %1143 = vmatpush.bf16.msra.mxu0 0
  %1144 = vmatpush.bf16.msra.mxu0 0
  %1145 = vmatpush.bf16.msra.mxu0 0
  %1146 = vmatpush.bf16.msra.mxu0 0
  %1147 = vmatpush.bf16.msra.mxu0 %v1008
  %1148 = vmatpush.bf16.msra.mxu0 %v992
  %1149 = vmatpush.bf16.msra.mxu0 %v976
  %1150 = vmatpush.bf16.msra.mxu0 %v960
  %1151 = vmatmul.bf16.gmra.mxu0 %v1085
  %v1152 = vpop.f32.mrf.mxu0
  %v1153 = vadd.f32 %v736, %v1152
  %v1154 = vpop.f32.mrf.mxu0
  %v1155 = vadd.f32 %v736, %v1154
  %1156 = vdwg.mxu0
  %1157 = vmatpush.bf16.msra.mxu0 0
  %1158 = vmatpush.bf16.msra.mxu0 0
  %1159 = vmatpush.bf16.msra.mxu0 0
  %1160 = vmatpush.bf16.msra.mxu0 0
  %1161 = vmatpush.bf16.msra.mxu0 %v1009
  %1162 = vmatpush.bf16.msra.mxu0 %v993
  %1163 = vmatpush.bf16.msra.mxu0 %v977
  %1164 = vmatpush.bf16.msra.mxu0 %v961
  %1165 = vmatmul.bf16.gmra.mxu0 %v1085
  %v1166 = vpop.f32.mrf.mxu0
  %v1167 = vadd.f32 %v737, %v1166
  %v1168 = vpop.f32.mrf.mxu0
  %v1169 = vadd.f32 %v737, %v1168
  %1170 = vdwg.mxu0
  %1171 = vmatpush.bf16.msra.mxu0 0
  %1172 = vmatpush.bf16.msra.mxu0 0
  %1173 = vmatpush.bf16.msra.mxu0 0
  %1174 = vmatpush.bf16.msra.mxu0 0
  %1175 = vmatpush.bf16.msra.mxu0 %v1010
  %1176 = vmatpush.bf16.msra.mxu0 %v994
  %1177 = vmatpush.bf16.msra.mxu0 %v978
  %1178 = vmatpush.bf16.msra.mxu0 %v962
  %1179 = vmatmul.bf16.gmra.mxu0 %v1085
  %v1180 = vpop.f32.mrf.mxu0
  %v1181 = vadd.f32 %v738, %v1180
  %v1182 = vpop.f32.mrf.mxu0
  %v1183 = vadd.f32 %v738, %v1182
  %1184 = vdwg.mxu0
  %1185 = vmatpush.bf16.msra.mxu0 0
  %1186 = vmatpush.bf16.msra.mxu0 0
  %1187 = vmatpush.bf16.msra.mxu0 0
  %1188 = vmatpush.bf16.msra.mxu0 0
  %1189 = vmatpush.bf16.msra.mxu0 %v1011
  %1190 = vmatpush.bf16.msra.mxu0 %v995
  %1191 = vmatpush.bf16.msra.mxu0 %v979
  %1192 = vmatpush.bf16.msra.mxu0 %v963
  %1193 = vmatmul.bf16.gmra.mxu0 %v1085
  %v1194 = vpop.f32.mrf.mxu0
  %v1195 = vadd.f32 %v739, %v1194
  %v1196 = vpop.f32.mrf.mxu0
  %v1197 = vadd.f32 %v739, %v1196
  %1198 = vdwg.mxu0
  %1199 = vmatpush.bf16.msra.mxu0 0
  %1200 = vmatpush.bf16.msra.mxu0 0
  %1201 = vmatpush.bf16.msra.mxu0 0
  %1202 = vmatpush.bf16.msra.mxu0 0
  %1203 = vmatpush.bf16.msra.mxu0 %v1012
  %1204 = vmatpush.bf16.msra.mxu0 %v996
  %1205 = vmatpush.bf16.msra.mxu0 %v980
  %1206 = vmatpush.bf16.msra.mxu0 %v964
  %1207 = vmatmul.bf16.gmra.mxu0 %v1085
  %v1208 = vpop.f32.mrf.mxu0
  %v1209 = vadd.f32 %v740, %v1208
  %v1210 = vpop.f32.mrf.mxu0
  %v1211 = vadd.f32 %v740, %v1210
  %1212 = vdwg.mxu0
  %1213 = vmatpush.bf16.msra.mxu0 0
  %1214 = vmatpush.bf16.msra.mxu0 0
  %1215 = vmatpush.bf16.msra.mxu0 0
  %1216 = vmatpush.bf16.msra.mxu0 0
  %1217 = vmatpush.bf16.msra.mxu0 %v1013
  %1218 = vmatpush.bf16.msra.mxu0 %v997
  %1219 = vmatpush.bf16.msra.mxu0 %v981
  %1220 = vmatpush.bf16.msra.mxu0 %v965
  %1221 = vmatmul.bf16.gmra.mxu0 %v1085
  %v1222 = vpop.f32.mrf.mxu0
  %v1223 = vadd.f32 %v741, %v1222
  %v1224 = vpop.f32.mrf.mxu0
  %v1225 = vadd.f32 %v741, %v1224
  %1226 = vdwg.mxu0
  %1227 = vmatpush.bf16.msra.mxu0 0
  %1228 = vmatpush.bf16.msra.mxu0 0
  %1229 = vmatpush.bf16.msra.mxu0 0
  %1230 = vmatpush.bf16.msra.mxu0 0
  %1231 = vmatpush.bf16.msra.mxu0 %v1014
  %1232 = vmatpush.bf16.msra.mxu0 %v998
  %1233 = vmatpush.bf16.msra.mxu0 %v982
  %1234 = vmatpush.bf16.msra.mxu0 %v966
  %1235 = vmatmul.bf16.gmra.mxu0 %v1085
  %v1236 = vpop.f32.mrf.mxu0
  %v1237 = vadd.f32 %v742, %v1236
  %v1238 = vpop.f32.mrf.mxu0
  %v1239 = vadd.f32 %v742, %v1238
  %1240 = vdwg.mxu0
  %1241 = vmatpush.bf16.msra.mxu0 0
  %1242 = vmatpush.bf16.msra.mxu0 0
  %1243 = vmatpush.bf16.msra.mxu0 0
  %1244 = vmatpush.bf16.msra.mxu0 0
  %1245 = vmatpush.bf16.msra.mxu0 %v1015
  %1246 = vmatpush.bf16.msra.mxu0 %v999
  %1247 = vmatpush.bf16.msra.mxu0 %v983
  %1248 = vmatpush.bf16.msra.mxu0 %v967
  %1249 = vmatmul.bf16.gmra.mxu0 %v1085
  %v1250 = vpop.f32.mrf.mxu0
  %v1251 = vadd.f32 %v743, %v1250
  %v1252 = vpop.f32.mrf.mxu0
  %v1253 = vadd.f32 %v743, %v1252
  %1254 = vdwg.mxu0
  %1255 = vmatpush.bf16.msra.mxu0 0
  %1256 = vmatpush.bf16.msra.mxu0 0
  %1257 = vmatpush.bf16.msra.mxu0 0
  %1258 = vmatpush.bf16.msra.mxu0 0
  %1259 = vmatpush.bf16.msra.mxu0 %v1016
  %1260 = vmatpush.bf16.msra.mxu0 %v1000
  %1261 = vmatpush.bf16.msra.mxu0 %v984
  %1262 = vmatpush.bf16.msra.mxu0 %v968
  %1263 = vmatmul.bf16.gmra.mxu0 %v1085
  %v1264 = vpop.f32.mrf.mxu0
  %v1265 = vadd.f32 %v744, %v1264
  %v1266 = vpop.f32.mrf.mxu0
  %v1267 = vadd.f32 %v744, %v1266
  %1268 = vdwg.mxu0
  %1269 = vmatpush.bf16.msra.mxu0 0
  %1270 = vmatpush.bf16.msra.mxu0 0
  %1271 = vmatpush.bf16.msra.mxu0 0
  %1272 = vmatpush.bf16.msra.mxu0 0
  %1273 = vmatpush.bf16.msra.mxu0 %v1017
  %1274 = vmatpush.bf16.msra.mxu0 %v1001
  %1275 = vmatpush.bf16.msra.mxu0 %v985
  %1276 = vmatpush.bf16.msra.mxu0 %v969
  %1277 = vmatmul.bf16.gmra.mxu0 %v1085
  %v1278 = vpop.f32.mrf.mxu0
  %v1279 = vadd.f32 %v745, %v1278
  %v1280 = vpop.f32.mrf.mxu0
  %v1281 = vadd.f32 %v745, %v1280
  %1282 = vdwg.mxu0
  %1283 = vmatpush.bf16.msra.mxu0 0
  %1284 = vmatpush.bf16.msra.mxu0 0
  %1285 = vmatpush.bf16.msra.mxu0 0
  %1286 = vmatpush.bf16.msra.mxu0 0
  %1287 = vmatpush.bf16.msra.mxu0 %v1018
  %1288 = vmatpush.bf16.msra.mxu0 %v1002
  %1289 = vmatpush.bf16.msra.mxu0 %v986
  %1290 = vmatpush.bf16.msra.mxu0 %v970
  %1291 = vmatmul.bf16.gmra.mxu0 %v1085
  %v1292 = vpop.f32.mrf.mxu0
  %v1293 = vadd.f32 %v746, %v1292
  %v1294 = vpop.f32.mrf.mxu0
  %v1295 = vadd.f32 %v746, %v1294
  %1296 = vdwg.mxu0
  %1297 = vmatpush.bf16.msra.mxu0 0
  %1298 = vmatpush.bf16.msra.mxu0 0
  %1299 = vmatpush.bf16.msra.mxu0 0
  %1300 = vmatpush.bf16.msra.mxu0 0
  %1301 = vmatpush.bf16.msra.mxu0 %v1019
  %1302 = vmatpush.bf16.msra.mxu0 %v1003
  %1303 = vmatpush.bf16.msra.mxu0 %v987
  %1304 = vmatpush.bf16.msra.mxu0 %v971
  %1305 = vmatmul.bf16.gmra.mxu0 %v1085
  %v1306 = vpop.f32.mrf.mxu0
  %v1307 = vadd.f32 %v747, %v1306
  %v1308 = vpop.f32.mrf.mxu0
  %v1309 = vadd.f32 %v747, %v1308
  %1310 = vdwg.mxu0
  %v1311 = vmax.f32 %v1097, 0.0
  %v1312 = vmax.f32 %v1111, 0.0
  %v1313 = vmax.f32 %v1125, 0.0
  %v1314 = vmax.f32 %v1139, 0.0
  %v1315 = vmax.f32 %v1153, 0.0
  %v1316 = vmax.f32 %v1167, 0.0
  %v1317 = vmax.f32 %v1181, 0.0
  %v1318 = vmax.f32 %v1195, 0.0
  %v1319 = vmax.f32 %v1209, 0.0
  %v1320 = vmax.f32 %v1223, 0.0
  %v1321 = vmax.f32 %v1237, 0.0
  %v1322 = vmax.f32 %v1251, 0.0
  %v1323 = vmax.f32 %v1265, 0.0
  %v1324 = vmax.f32 %v1279, 0.0
  %v1325 = vmax.f32 %v1293, 0.0
  %v1326 = vmax.f32 %v1307, 0.0
  %v1327 = vmax.f32 %v1099, 0.0
  %v1328 = vmax.f32 %v1113, 0.0
  %v1329 = vmax.f32 %v1127, 0.0
  %v1330 = vmax.f32 %v1141, 0.0
  %v1331 = vmax.f32 %v1155, 0.0
  %v1332 = vmax.f32 %v1169, 0.0
  %v1333 = vmax.f32 %v1183, 0.0
  %v1334 = vmax.f32 %v1197, 0.0
  %v1335 = vmax.f32 %v1211, 0.0
  %v1336 = vmax.f32 %v1225, 0.0
  %v1337 = vmax.f32 %v1239, 0.0
  %v1338 = vmax.f32 %v1253, 0.0
  %v1339 = vmax.f32 %v1267, 0.0
  %v1340 = vmax.f32 %v1281, 0.0
  %v1341 = vmax.f32 %v1295, 0.0
  %v1342 = vmax.f32 %v1309, 0.0
  %v1343 = vpack.c.bf16 %v1327, %v1311
  %v1344 = vpack.c.bf16 %v1328, %v1312
  %v1345 = vpack.c.bf16 %v1329, %v1313
  %v1346 = vpack.c.bf16 %v1330, %v1314
  %v1347 = vpack.c.bf16 %v1331, %v1315
  %v1348 = vpack.c.bf16 %v1332, %v1316
  %v1349 = vpack.c.bf16 %v1333, %v1317
  %v1350 = vpack.c.bf16 %v1334, %v1318
  %v1351 = vpack.c.bf16 %v1335, %v1319
  %v1352 = vpack.c.bf16 %v1336, %v1320
  %v1353 = vpack.c.bf16 %v1337, %v1321
  %v1354 = vpack.c.bf16 %v1338, %v1322
  %v1355 = vpack.c.bf16 %v1339, %v1323
  %v1356 = vpack.c.bf16 %v1340, %v1324
  %v1357 = vpack.c.bf16 %v1341, %v1325
  %v1358 = vpack.c.bf16 %v1342, %v1326
  %v1359 = vld [vmem:[%s11] sm:$0xf]
  %v1360 = vld [vmem:[%s11 + $0x4] sm:$0xf]
  %v1361 = vld [vmem:[%s11 + $0x8] sm:$0xf]
  %v1362 = vld [vmem:[%s11 + $0xc] sm:$0xf]
  %v1363 = vld [vmem:[%s11 + $0x10] sm:$0xf]
  %v1364 = vld [vmem:[%s11 + $0x14] sm:$0xf]
  %v1365 = vld [vmem:[%s11 + $0x18] sm:$0xf]
  %v1366 = vld [vmem:[%s11 + $0x1c] sm:$0xf]
  %v1367 = vld [vmem:[%s11 + $0x20] sm:$0xf]
  %v1368 = vld [vmem:[%s11 + $0x24] sm:$0xf]
  %v1369 = vld [vmem:[%s11 + $0x28] sm:$0xf]
  %v1370 = vld [vmem:[%s11 + $0x2c] sm:$0xf]
  %v1371 = vld [vmem:[%s11 + $0x30] sm:$0xf]
  %v1372 = vld [vmem:[%s11 + $0x34] sm:$0xf]
  %v1373 = vld [vmem:[%s11 + $0x38] sm:$0xf]
  %v1374 = vld [vmem:[%s11 + $0x3c] sm:$0xf]
  %v1375 = vld [vmem:[%s11 + $0x40] sm:$0xf]
  %v1376 = vld [vmem:[%s11 + $0x44] sm:$0xf]
  %v1377 = vld [vmem:[%s11 + $0x48] sm:$0xf]
  %v1378 = vld [vmem:[%s11 + $0x4c] sm:$0xf]
  %v1379 = vld [vmem:[%s11 + $0x50] sm:$0xf]
  %v1380 = vld [vmem:[%s11 + $0x54] sm:$0xf]
  %v1381 = vld [vmem:[%s11 + $0x58] sm:$0xf]
  %v1382 = vld [vmem:[%s11 + $0x5c] sm:$0xf]
  %v1383 = vld [vmem:[%s11 + $0x60] sm:$0xf]
  %v1384 = vld [vmem:[%s11 + $0x64] sm:$0xf]
  %v1385 = vld [vmem:[%s11 + $0x68] sm:$0xf]
  %v1386 = vld [vmem:[%s11 + $0x6c] sm:$0xf]
  %v1387 = vld [vmem:[%s11 + $0x70] sm:$0xf]
  %v1388 = vld [vmem:[%s11 + $0x74] sm:$0xf]
  %v1389 = vld [vmem:[%s11 + $0x78] sm:$0xf]
  %v1390 = vld [vmem:[%s11 + $0x7c] sm:$0xf]
  %v1391 = vld [vmem:[%s11 + $0x80] sm:$0xf]
  %v1392 = vld [vmem:[%s11 + $0x84] sm:$0xf]
  %v1393 = vld [vmem:[%s11 + $0x88] sm:$0xf]
  %v1394 = vld [vmem:[%s11 + $0x8c] sm:$0xf]
  %v1395 = vld [vmem:[%s11 + $0x90] sm:$0xf]
  %v1396 = vld [vmem:[%s11 + $0x94] sm:$0xf]
  %v1397 = vld [vmem:[%s11 + $0x98] sm:$0xf]
  %v1398 = vld [vmem:[%s11 + $0x9c] sm:$0xf]
  %v1399 = vld [vmem:[%s11 + $0xa0] sm:$0xf]
  %v1400 = vld [vmem:[%s11 + $0xa4] sm:$0xf]
  %v1401 = vld [vmem:[%s11 + $0xa8] sm:$0xf]
  %v1402 = vld [vmem:[%s11 + $0xac] sm:$0xf]
  %v1403 = vld [vmem:[%s11 + $0xb0] sm:$0xf]
  %v1404 = vld [vmem:[%s11 + $0xb4] sm:$0xf]
  %v1405 = vld [vmem:[%s11 + $0xb8] sm:$0xf]
  %v1406 = vld [vmem:[%s11 + $0xbc] sm:$0xf]
  %v1407 = vld [vmem:[%s11 + $0xc0] sm:$0xf]
  %v1408 = vld [vmem:[%s11 + $0xc4] sm:$0xf]
  %v1409 = vld [vmem:[%s11 + $0xc8] sm:$0xf]
  %v1410 = vld [vmem:[%s11 + $0xcc] sm:$0xf]
  %v1411 = vld [vmem:[%s11 + $0xd0] sm:$0xf]
  %v1412 = vld [vmem:[%s11 + $0xd4] sm:$0xf]
  %v1413 = vld [vmem:[%s11 + $0xd8] sm:$0xf]
  %v1414 = vld [vmem:[%s11 + $0xdc] sm:$0xf]
  %v1415 = vld [vmem:[%s11 + $0xe0] sm:$0xf]
  %v1416 = vld [vmem:[%s11 + $0xe4] sm:$0xf]
  %v1417 = vld [vmem:[%s11 + $0xe8] sm:$0xf]
  %v1418 = vld [vmem:[%s11 + $0xec] sm:$0xf]
  %v1419 = vld [vmem:[%s11 + $0xf0] sm:$0xf]
  %v1420 = vld [vmem:[%s11 + $0xf4] sm:$0xf]
  %v1421 = vld [vmem:[%s11 + $0xf8] sm:$0xf]
  %v1422 = vld [vmem:[%s11 + $0xfc] sm:$0xf]
  %v1423 = vld [vmem:[%s11 + $0x100] sm:$0xf]
  %v1424 = vld [vmem:[%s11 + $0x104] sm:$0xf]
  %v1425 = vld [vmem:[%s11 + $0x108] sm:$0xf]
  %v1426 = vld [vmem:[%s11 + $0x10c] sm:$0xf]
  %v1427 = vld [vmem:[%s11 + $0x110] sm:$0xf]
  %v1428 = vld [vmem:[%s11 + $0x114] sm:$0xf]
  %v1429 = vld [vmem:[%s11 + $0x118] sm:$0xf]
  %v1430 = vld [vmem:[%s11 + $0x11c] sm:$0xf]
  %v1431 = vld [vmem:[%s11 + $0x120] sm:$0xf]
  %v1432 = vld [vmem:[%s11 + $0x124] sm:$0xf]
  %v1433 = vld [vmem:[%s11 + $0x128] sm:$0xf]
  %v1434 = vld [vmem:[%s11 + $0x12c] sm:$0xf]
  %v1435 = vld [vmem:[%s11 + $0x130] sm:$0xf]
  %v1436 = vld [vmem:[%s11 + $0x134] sm:$0xf]
  %v1437 = vld [vmem:[%s11 + $0x138] sm:$0xf]
  %v1438 = vld [vmem:[%s11 + $0x13c] sm:$0xf]
  %v1439 = vld [vmem:[%s11 + $0x140] sm:$0xf]
  %v1440 = vld [vmem:[%s11 + $0x144] sm:$0xf]
  %v1441 = vld [vmem:[%s11 + $0x148] sm:$0xf]
  %v1442 = vld [vmem:[%s11 + $0x14c] sm:$0xf]
  %v1443 = vld [vmem:[%s11 + $0x150] sm:$0xf]
  %v1444 = vld [vmem:[%s11 + $0x154] sm:$0xf]
  %v1445 = vld [vmem:[%s11 + $0x158] sm:$0xf]
  %v1446 = vld [vmem:[%s11 + $0x15c] sm:$0xf]
  %v1447 = vld [vmem:[%s11 + $0x160] sm:$0xf]
  %v1448 = vld [vmem:[%s11 + $0x164] sm:$0xf]
  %v1449 = vld [vmem:[%s11 + $0x168] sm:$0xf]
  %v1450 = vld [vmem:[%s11 + $0x16c] sm:$0xf]
  %v1451 = vld [vmem:[%s11 + $0x170] sm:$0xf]
  %v1452 = vld [vmem:[%s11 + $0x174] sm:$0xf]
  %v1453 = vld [vmem:[%s11 + $0x178] sm:$0xf]
  %v1454 = vld [vmem:[%s11 + $0x17c] sm:$0xf]
  %v1455 = vld [vmem:[%s11 + $0x180] sm:$0xf]
  %v1456 = vld [vmem:[%s11 + $0x184] sm:$0xf]
  %v1457 = vld [vmem:[%s11 + $0x188] sm:$0xf]
  %v1458 = vld [vmem:[%s11 + $0x18c] sm:$0xf]
  %v1459 = vld [vmem:[%s11 + $0x190] sm:$0xf]
  %v1460 = vld [vmem:[%s11 + $0x194] sm:$0xf]
  %v1461 = vld [vmem:[%s11 + $0x198] sm:$0xf]
  %v1462 = vld [vmem:[%s11 + $0x19c] sm:$0xf]
  %v1463 = vld [vmem:[%s11 + $0x1a0] sm:$0xf]
  %v1464 = vld [vmem:[%s11 + $0x1a4] sm:$0xf]
  %v1465 = vld [vmem:[%s11 + $0x1a8] sm:$0xf]
  %v1466 = vld [vmem:[%s11 + $0x1ac] sm:$0xf]
  %v1467 = vld [vmem:[%s11 + $0x1b0] sm:$0xf]
  %v1468 = vld [vmem:[%s11 + $0x1b4] sm:$0xf]
  %v1469 = vld [vmem:[%s11 + $0x1b8] sm:$0xf]
  %v1470 = vld [vmem:[%s11 + $0x1bc] sm:$0xf]
  %v1471 = vld [vmem:[%s11 + $0x1c0] sm:$0xf]
  %v1472 = vld [vmem:[%s11 + $0x1c4] sm:$0xf]
  %v1473 = vld [vmem:[%s11 + $0x1c8] sm:$0xf]
  %v1474 = vld [vmem:[%s11 + $0x1cc] sm:$0xf]
  %v1475 = vld [vmem:[%s11 + $0x1d0] sm:$0xf]
  %v1476 = vld [vmem:[%s11 + $0x1d4] sm:$0xf]
  %v1477 = vld [vmem:[%s11 + $0x1d8] sm:$0xf]
  %v1478 = vld [vmem:[%s11 + $0x1dc] sm:$0xf]
  %v1479 = vld [vmem:[%s11 + $0x1e0] sm:$0xf]
  %v1480 = vld [vmem:[%s11 + $0x1e4] sm:$0xf]
  %v1481 = vld [vmem:[%s11 + $0x1e8] sm:$0xf]
  %v1482 = vld [vmem:[%s11 + $0x1ec] sm:$0xf]
  %v1483 = vld [vmem:[%s11 + $0x1f0] sm:$0xf]
  %v1484 = vld [vmem:[%s11 + $0x1f4] sm:$0xf]
  %v1485 = vld [vmem:[%s11 + $0x1f8] sm:$0xf]
  %v1486 = vld [vmem:[%s11 + $0x1fc] sm:$0xf]
  %v1487 = vld [vmem:[%s11 + $0x200] sm:$0xf]
  %v1488 = vld [vmem:[%s11 + $0x204] sm:$0xf]
  %v1489 = vld [vmem:[%s11 + $0x208] sm:$0xf]
  %v1490 = vld [vmem:[%s11 + $0x20c] sm:$0xf]
  %v1491 = vld [vmem:[%s11 + $0x210] sm:$0xf]
  %v1492 = vld [vmem:[%s11 + $0x214] sm:$0xf]
  %v1493 = vld [vmem:[%s11 + $0x218] sm:$0xf]
  %v1494 = vld [vmem:[%s11 + $0x21c] sm:$0xf]
  %v1495 = vld [vmem:[%s11 + $0x220] sm:$0xf]
  %v1496 = vld [vmem:[%s11 + $0x224] sm:$0xf]
  %v1497 = vld [vmem:[%s11 + $0x228] sm:$0xf]
  %v1498 = vld [vmem:[%s11 + $0x22c] sm:$0xf]
  %v1499 = vld [vmem:[%s11 + $0x230] sm:$0xf]
  %v1500 = vld [vmem:[%s11 + $0x234] sm:$0xf]
  %v1501 = vld [vmem:[%s11 + $0x238] sm:$0xf]
  %v1502 = vld [vmem:[%s11 + $0x23c] sm:$0xf]
  %v1503 = vld [vmem:[%s11 + $0x240] sm:$0xf]
  %v1504 = vld [vmem:[%s11 + $0x244] sm:$0xf]
  %v1505 = vld [vmem:[%s11 + $0x248] sm:$0xf]
  %v1506 = vld [vmem:[%s11 + $0x24c] sm:$0xf]
  %v1507 = vld [vmem:[%s11 + $0x250] sm:$0xf]
  %v1508 = vld [vmem:[%s11 + $0x254] sm:$0xf]
  %v1509 = vld [vmem:[%s11 + $0x258] sm:$0xf]
  %v1510 = vld [vmem:[%s11 + $0x25c] sm:$0xf]
  %v1511 = vld [vmem:[%s11 + $0x260] sm:$0xf]
  %v1512 = vld [vmem:[%s11 + $0x264] sm:$0xf]
  %v1513 = vld [vmem:[%s11 + $0x268] sm:$0xf]
  %v1514 = vld [vmem:[%s11 + $0x26c] sm:$0xf]
  %v1515 = vld [vmem:[%s11 + $0x270] sm:$0xf]
  %v1516 = vld [vmem:[%s11 + $0x274] sm:$0xf]
  %v1517 = vld [vmem:[%s11 + $0x278] sm:$0xf]
  %v1518 = vld [vmem:[%s11 + $0x27c] sm:$0xf]
  %v1519 = vld [vmem:[%s11 + $0x280] sm:$0xf]
  %v1520 = vld [vmem:[%s11 + $0x284] sm:$0xf]
  %v1521 = vld [vmem:[%s11 + $0x288] sm:$0xf]
  %v1522 = vld [vmem:[%s11 + $0x28c] sm:$0xf]
  %v1523 = vld [vmem:[%s11 + $0x290] sm:$0xf]
  %v1524 = vld [vmem:[%s11 + $0x294] sm:$0xf]
  %v1525 = vld [vmem:[%s11 + $0x298] sm:$0xf]
  %v1526 = vld [vmem:[%s11 + $0x29c] sm:$0xf]
  %v1527 = vld [vmem:[%s11 + $0x2a0] sm:$0xf]
  %v1528 = vld [vmem:[%s11 + $0x2a4] sm:$0xf]
  %v1529 = vld [vmem:[%s11 + $0x2a8] sm:$0xf]
  %v1530 = vld [vmem:[%s11 + $0x2ac] sm:$0xf]
  %v1531 = vld [vmem:[%s11 + $0x2b0] sm:$0xf]
  %v1532 = vld [vmem:[%s11 + $0x2b4] sm:$0xf]
  %v1533 = vld [vmem:[%s11 + $0x2b8] sm:$0xf]
  %v1534 = vld [vmem:[%s11 + $0x2bc] sm:$0xf]
  %v1535 = vld [vmem:[%s11 + $0x2c0] sm:$0xf]
  %v1536 = vld [vmem:[%s11 + $0x2c4] sm:$0xf]
  %v1537 = vld [vmem:[%s11 + $0x2c8] sm:$0xf]
  %v1538 = vld [vmem:[%s11 + $0x2cc] sm:$0xf]
  %v1539 = vld [vmem:[%s11 + $0x2d0] sm:$0xf]
  %v1540 = vld [vmem:[%s11 + $0x2d4] sm:$0xf]
  %v1541 = vld [vmem:[%s11 + $0x2d8] sm:$0xf]
  %v1542 = vld [vmem:[%s11 + $0x2dc] sm:$0xf]
  %v1543 = vld [vmem:[%s11 + $0x2e0] sm:$0xf]
  %v1544 = vld [vmem:[%s11 + $0x2e4] sm:$0xf]
  %v1545 = vld [vmem:[%s11 + $0x2e8] sm:$0xf]
  %v1546 = vld [vmem:[%s11 + $0x2ec] sm:$0xf]
  %v1547 = vld [vmem:[%s11 + $0x2f0] sm:$0xf]
  %v1548 = vld [vmem:[%s11 + $0x2f4] sm:$0xf]
  %v1549 = vld [vmem:[%s11 + $0x2f8] sm:$0xf]
  %v1550 = vld [vmem:[%s11 + $0x2fc] sm:$0xf]
  %v1551 = vld [vmem:[%s11 + $0x300] sm:$0xf]
  %v1552 = vld [vmem:[%s11 + $0x304] sm:$0xf]
  %v1553 = vld [vmem:[%s11 + $0x308] sm:$0xf]
  %v1554 = vld [vmem:[%s11 + $0x30c] sm:$0xf]
  %v1555 = vld [vmem:[%s11 + $0x310] sm:$0xf]
  %v1556 = vld [vmem:[%s11 + $0x314] sm:$0xf]
  %v1557 = vld [vmem:[%s11 + $0x318] sm:$0xf]
  %v1558 = vld [vmem:[%s11 + $0x31c] sm:$0xf]
  %v1559 = vld [vmem:[%s11 + $0x320] sm:$0xf]
  %v1560 = vld [vmem:[%s11 + $0x324] sm:$0xf]
  %v1561 = vld [vmem:[%s11 + $0x328] sm:$0xf]
  %v1562 = vld [vmem:[%s11 + $0x32c] sm:$0xf]
  %v1563 = vld [vmem:[%s11 + $0x330] sm:$0xf]
  %v1564 = vld [vmem:[%s11 + $0x334] sm:$0xf]
  %v1565 = vld [vmem:[%s11 + $0x338] sm:$0xf]
  %v1566 = vld [vmem:[%s11 + $0x33c] sm:$0xf]
  %v1567 = vld [vmem:[%s11 + $0x340] sm:$0xf]
  %v1568 = vld [vmem:[%s11 + $0x344] sm:$0xf]
  %v1569 = vld [vmem:[%s11 + $0x348] sm:$0xf]
  %v1570 = vld [vmem:[%s11 + $0x34c] sm:$0xf]
  %v1571 = vld [vmem:[%s11 + $0x350] sm:$0xf]
  %v1572 = vld [vmem:[%s11 + $0x354] sm:$0xf]
  %v1573 = vld [vmem:[%s11 + $0x358] sm:$0xf]
  %v1574 = vld [vmem:[%s11 + $0x35c] sm:$0xf]
  %v1575 = vld [vmem:[%s11 + $0x360] sm:$0xf]
  %v1576 = vld [vmem:[%s11 + $0x364] sm:$0xf]
  %v1577 = vld [vmem:[%s11 + $0x368] sm:$0xf]
  %v1578 = vld [vmem:[%s11 + $0x36c] sm:$0xf]
  %v1579 = vld [vmem:[%s11 + $0x370] sm:$0xf]
  %v1580 = vld [vmem:[%s11 + $0x374] sm:$0xf]
  %v1581 = vld [vmem:[%s11 + $0x378] sm:$0xf]
  %v1582 = vld [vmem:[%s11 + $0x37c] sm:$0xf]
  %v1583 = vld [vmem:[%s11 + $0x380] sm:$0xf]
  %v1584 = vld [vmem:[%s11 + $0x384] sm:$0xf]
  %v1585 = vld [vmem:[%s11 + $0x388] sm:$0xf]
  %v1586 = vld [vmem:[%s11 + $0x38c] sm:$0xf]
  %v1587 = vld [vmem:[%s11 + $0x390] sm:$0xf]
  %v1588 = vld [vmem:[%s11 + $0x394] sm:$0xf]
  %v1589 = vld [vmem:[%s11 + $0x398] sm:$0xf]
  %v1590 = vld [vmem:[%s11 + $0x39c] sm:$0xf]
  %v1591 = vld [vmem:[%s11 + $0x3a0] sm:$0xf]
  %v1592 = vld [vmem:[%s11 + $0x3a4] sm:$0xf]
  %v1593 = vld [vmem:[%s11 + $0x3a8] sm:$0xf]
  %v1594 = vld [vmem:[%s11 + $0x3ac] sm:$0xf]
  %v1595 = vld [vmem:[%s11 + $0x3b0] sm:$0xf]
  %v1596 = vld [vmem:[%s11 + $0x3b4] sm:$0xf]
  %v1597 = vld [vmem:[%s11 + $0x3b8] sm:$0xf]
  %v1598 = vld [vmem:[%s11 + $0x3bc] sm:$0xf]
  %v1599 = vld [vmem:[%s11 + $0x3c0] sm:$0xf]
  %v1600 = vld [vmem:[%s11 + $0x3c4] sm:$0xf]
  %v1601 = vld [vmem:[%s11 + $0x3c8] sm:$0xf]
  %v1602 = vld [vmem:[%s11 + $0x3cc] sm:$0xf]
  %v1603 = vld [vmem:[%s11 + $0x3d0] sm:$0xf]
  %v1604 = vld [vmem:[%s11 + $0x3d4] sm:$0xf]
  %v1605 = vld [vmem:[%s11 + $0x3d8] sm:$0xf]
  %v1606 = vld [vmem:[%s11 + $0x3dc] sm:$0xf]
  %v1607 = vld [vmem:[%s11 + $0x3e0] sm:$0xf]
  %v1608 = vld [vmem:[%s11 + $0x3e4] sm:$0xf]
  %v1609 = vld [vmem:[%s11 + $0x3e8] sm:$0xf]
  %v1610 = vld [vmem:[%s11 + $0x3ec] sm:$0xf]
  %v1611 = vld [vmem:[%s11 + $0x3f0] sm:$0xf]
  %v1612 = vld [vmem:[%s11 + $0x3f4] sm:$0xf]
  %v1613 = vld [vmem:[%s11 + $0x3f8] sm:$0xf]
  %v1614 = vld [vmem:[%s11 + $0x3fc] sm:$0xf]
  %v1615 = vld [vmem:[%s12] sm:$0x1]
  %v1617 = vperm.slane %v1615, 0
  %v1875 = vunpack.c.l.b16 %v1359
  %v1876 = vunpack.c.l.b16 %v1360
  %v1877 = vunpack.c.l.b16 %v1361
  %v1878 = vunpack.c.l.b16 %v1362
  %v1879 = vunpack.c.l.b16 %v1363
  %v1880 = vunpack.c.l.b16 %v1364
  %v1881 = vunpack.c.l.b16 %v1365
  %v1882 = vunpack.c.l.b16 %v1366
  %v1883 = vunpack.c.l.b16 %v1367
  %v1884 = vunpack.c.l.b16 %v1368
  %v1885 = vunpack.c.l.b16 %v1369
  %v1886 = vunpack.c.l.b16 %v1370
  %v1887 = vunpack.c.l.b16 %v1371
  %v1888 = vunpack.c.l.b16 %v1372
  %v1889 = vunpack.c.l.b16 %v1373
  %v1890 = vunpack.c.l.b16 %v1374
  %v1891 = vunpack.c.l.b16 %v1375
  %v1892 = vunpack.c.l.b16 %v1376
  %v1893 = vunpack.c.l.b16 %v1377
  %v1894 = vunpack.c.l.b16 %v1378
  %v1895 = vunpack.c.l.b16 %v1379
  %v1896 = vunpack.c.l.b16 %v1380
  %v1897 = vunpack.c.l.b16 %v1381
  %v1898 = vunpack.c.l.b16 %v1382
  %v1899 = vunpack.c.l.b16 %v1383
  %v1900 = vunpack.c.l.b16 %v1384
  %v1901 = vunpack.c.l.b16 %v1385
  %v1902 = vunpack.c.l.b16 %v1386
  %v1903 = vunpack.c.l.b16 %v1387
  %v1904 = vunpack.c.l.b16 %v1388
  %v1905 = vunpack.c.l.b16 %v1389
  %v1906 = vunpack.c.l.b16 %v1390
  %v1907 = vunpack.c.l.b16 %v1391
  %v1908 = vunpack.c.l.b16 %v1392
  %v1909 = vunpack.c.l.b16 %v1393
  %v1910 = vunpack.c.l.b16 %v1394
  %v1911 = vunpack.c.l.b16 %v1395
  %v1912 = vunpack.c.l.b16 %v1396
  %v1913 = vunpack.c.l.b16 %v1397
  %v1914 = vunpack.c.l.b16 %v1398
  %v1915 = vunpack.c.l.b16 %v1399
  %v1916 = vunpack.c.l.b16 %v1400
  %v1917 = vunpack.c.l.b16 %v1401
  %v1918 = vunpack.c.l.b16 %v1402
  %v1919 = vunpack.c.l.b16 %v1403
  %v1920 = vunpack.c.l.b16 %v1404
  %v1921 = vunpack.c.l.b16 %v1405
  %v1922 = vunpack.c.l.b16 %v1406
  %v1923 = vunpack.c.l.b16 %v1407
  %v1924 = vunpack.c.l.b16 %v1408
  %v1925 = vunpack.c.l.b16 %v1409
  %v1926 = vunpack.c.l.b16 %v1410
  %v1927 = vunpack.c.l.b16 %v1411
  %v1928 = vunpack.c.l.b16 %v1412
  %v1929 = vunpack.c.l.b16 %v1413
  %v1930 = vunpack.c.l.b16 %v1414
  %v1931 = vunpack.c.l.b16 %v1415
  %v1932 = vunpack.c.l.b16 %v1416
  %v1933 = vunpack.c.l.b16 %v1417
  %v1934 = vunpack.c.l.b16 %v1418
  %v1935 = vunpack.c.l.b16 %v1419
  %v1936 = vunpack.c.l.b16 %v1420
  %v1937 = vunpack.c.l.b16 %v1421
  %v1938 = vunpack.c.l.b16 %v1422
  %v1939 = vunpack.c.l.b16 %v1423
  %v1940 = vunpack.c.l.b16 %v1424
  %v1941 = vunpack.c.l.b16 %v1425
  %v1942 = vunpack.c.l.b16 %v1426
  %v1943 = vunpack.c.l.b16 %v1427
  %v1944 = vunpack.c.l.b16 %v1428
  %v1945 = vunpack.c.l.b16 %v1429
  %v1946 = vunpack.c.l.b16 %v1430
  %v1947 = vunpack.c.l.b16 %v1431
  %v1948 = vunpack.c.l.b16 %v1432
  %v1949 = vunpack.c.l.b16 %v1433
  %v1950 = vunpack.c.l.b16 %v1434
  %v1951 = vunpack.c.l.b16 %v1435
  %v1952 = vunpack.c.l.b16 %v1436
  %v1953 = vunpack.c.l.b16 %v1437
  %v1954 = vunpack.c.l.b16 %v1438
  %v1955 = vunpack.c.l.b16 %v1439
  %v1956 = vunpack.c.l.b16 %v1440
  %v1957 = vunpack.c.l.b16 %v1441
  %v1958 = vunpack.c.l.b16 %v1442
  %v1959 = vunpack.c.l.b16 %v1443
  %v1960 = vunpack.c.l.b16 %v1444
  %v1961 = vunpack.c.l.b16 %v1445
  %v1962 = vunpack.c.l.b16 %v1446
  %v1963 = vunpack.c.l.b16 %v1447
  %v1964 = vunpack.c.l.b16 %v1448
  %v1965 = vunpack.c.l.b16 %v1449
  %v1966 = vunpack.c.l.b16 %v1450
  %v1967 = vunpack.c.l.b16 %v1451
  %v1968 = vunpack.c.l.b16 %v1452
  %v1969 = vunpack.c.l.b16 %v1453
  %v1970 = vunpack.c.l.b16 %v1454
  %v1971 = vunpack.c.l.b16 %v1455
  %v1972 = vunpack.c.l.b16 %v1456
  %v1973 = vunpack.c.l.b16 %v1457
  %v1974 = vunpack.c.l.b16 %v1458
  %v1975 = vunpack.c.l.b16 %v1459
  %v1976 = vunpack.c.l.b16 %v1460
  %v1977 = vunpack.c.l.b16 %v1461
  %v1978 = vunpack.c.l.b16 %v1462
  %v1979 = vunpack.c.l.b16 %v1463
  %v1980 = vunpack.c.l.b16 %v1464
  %v1981 = vunpack.c.l.b16 %v1465
  %v1982 = vunpack.c.l.b16 %v1466
  %v1983 = vunpack.c.l.b16 %v1467
  %v1984 = vunpack.c.l.b16 %v1468
  %v1985 = vunpack.c.l.b16 %v1469
  %v1986 = vunpack.c.l.b16 %v1470
  %v1987 = vunpack.c.l.b16 %v1471
  %v1988 = vunpack.c.l.b16 %v1472
  %v1989 = vunpack.c.l.b16 %v1473
  %v1990 = vunpack.c.l.b16 %v1474
  %v1991 = vunpack.c.l.b16 %v1475
  %v1992 = vunpack.c.l.b16 %v1476
  %v1993 = vunpack.c.l.b16 %v1477
  %v1994 = vunpack.c.l.b16 %v1478
  %v1995 = vunpack.c.l.b16 %v1479
  %v1996 = vunpack.c.l.b16 %v1480
  %v1997 = vunpack.c.l.b16 %v1481
  %v1998 = vunpack.c.l.b16 %v1482
  %v1999 = vunpack.c.l.b16 %v1483
  %v2000 = vunpack.c.l.b16 %v1484
  %v2001 = vunpack.c.l.b16 %v1485
  %v2002 = vunpack.c.l.b16 %v1486
  %v2003 = vunpack.c.l.b16 %v1487
  %v2004 = vunpack.c.l.b16 %v1488
  %v2005 = vunpack.c.l.b16 %v1489
  %v2006 = vunpack.c.l.b16 %v1490
  %v2007 = vunpack.c.l.b16 %v1491
  %v2008 = vunpack.c.l.b16 %v1492
  %v2009 = vunpack.c.l.b16 %v1493
  %v2010 = vunpack.c.l.b16 %v1494
  %v2011 = vunpack.c.l.b16 %v1495
  %v2012 = vunpack.c.l.b16 %v1496
  %v2013 = vunpack.c.l.b16 %v1497
  %v2014 = vunpack.c.l.b16 %v1498
  %v2015 = vunpack.c.l.b16 %v1499
  %v2016 = vunpack.c.l.b16 %v1500
  %v2017 = vunpack.c.l.b16 %v1501
  %v2018 = vunpack.c.l.b16 %v1502
  %v2019 = vunpack.c.l.b16 %v1503
  %v2020 = vunpack.c.l.b16 %v1504
  %v2021 = vunpack.c.l.b16 %v1505
  %v2022 = vunpack.c.l.b16 %v1506
  %v2023 = vunpack.c.l.b16 %v1507
  %v2024 = vunpack.c.l.b16 %v1508
  %v2025 = vunpack.c.l.b16 %v1509
  %v2026 = vunpack.c.l.b16 %v1510
  %v2027 = vunpack.c.l.b16 %v1511
  %v2028 = vunpack.c.l.b16 %v1512
  %v2029 = vunpack.c.l.b16 %v1513
  %v2030 = vunpack.c.l.b16 %v1514
  %v2031 = vunpack.c.l.b16 %v1515
  %v2032 = vunpack.c.l.b16 %v1516
  %v2033 = vunpack.c.l.b16 %v1517
  %v2034 = vunpack.c.l.b16 %v1518
  %v2035 = vunpack.c.l.b16 %v1519
  %v2036 = vunpack.c.l.b16 %v1520
  %v2037 = vunpack.c.l.b16 %v1521
  %v2038 = vunpack.c.l.b16 %v1522
  %v2039 = vunpack.c.l.b16 %v1523
  %v2040 = vunpack.c.l.b16 %v1524
  %v2041 = vunpack.c.l.b16 %v1525
  %v2042 = vunpack.c.l.b16 %v1526
  %v2043 = vunpack.c.l.b16 %v1527
  %v2044 = vunpack.c.l.b16 %v1528
  %v2045 = vunpack.c.l.b16 %v1529
  %v2046 = vunpack.c.l.b16 %v1530
  %v2047 = vunpack.c.l.b16 %v1531
  %v2048 = vunpack.c.l.b16 %v1532
  %v2049 = vunpack.c.l.b16 %v1533
  %v2050 = vunpack.c.l.b16 %v1534
  %v2051 = vunpack.c.l.b16 %v1535
  %v2052 = vunpack.c.l.b16 %v1536
  %v2053 = vunpack.c.l.b16 %v1537
  %v2054 = vunpack.c.l.b16 %v1538
  %v2055 = vunpack.c.l.b16 %v1539
  %v2056 = vunpack.c.l.b16 %v1540
  %v2057 = vunpack.c.l.b16 %v1541
  %v2058 = vunpack.c.l.b16 %v1542
  %v2059 = vunpack.c.l.b16 %v1543
  %v2060 = vunpack.c.l.b16 %v1544
  %v2061 = vunpack.c.l.b16 %v1545
  %v2062 = vunpack.c.l.b16 %v1546
  %v2063 = vunpack.c.l.b16 %v1547
  %v2064 = vunpack.c.l.b16 %v1548
  %v2065 = vunpack.c.l.b16 %v1549
  %v2066 = vunpack.c.l.b16 %v1550
  %v2067 = vunpack.c.l.b16 %v1551
  %v2068 = vunpack.c.l.b16 %v1552
  %v2069 = vunpack.c.l.b16 %v1553
  %v2070 = vunpack.c.l.b16 %v1554
  %v2071 = vunpack.c.l.b16 %v1555
  %v2072 = vunpack.c.l.b16 %v1556
  %v2073 = vunpack.c.l.b16 %v1557
  %v2074 = vunpack.c.l.b16 %v1558
  %v2075 = vunpack.c.l.b16 %v1559
  %v2076 = vunpack.c.l.b16 %v1560
  %v2077 = vunpack.c.l.b16 %v1561
  %v2078 = vunpack.c.l.b16 %v1562
  %v2079 = vunpack.c.l.b16 %v1563
  %v2080 = vunpack.c.l.b16 %v1564
  %v2081 = vunpack.c.l.b16 %v1565
  %v2082 = vunpack.c.l.b16 %v1566
  %v2083 = vunpack.c.l.b16 %v1567
  %v2084 = vunpack.c.l.b16 %v1568
  %v2085 = vunpack.c.l.b16 %v1569
  %v2086 = vunpack.c.l.b16 %v1570
  %v2087 = vunpack.c.l.b16 %v1571
  %v2088 = vunpack.c.l.b16 %v1572
  %v2089 = vunpack.c.l.b16 %v1573
  %v2090 = vunpack.c.l.b16 %v1574
  %v2091 = vunpack.c.l.b16 %v1575
  %v2092 = vunpack.c.l.b16 %v1576
  %v2093 = vunpack.c.l.b16 %v1577
  %v2094 = vunpack.c.l.b16 %v1578
  %v2095 = vunpack.c.l.b16 %v1579
  %v2096 = vunpack.c.l.b16 %v1580
  %v2097 = vunpack.c.l.b16 %v1581
  %v2098 = vunpack.c.l.b16 %v1582
  %v2099 = vunpack.c.l.b16 %v1583
  %v2100 = vunpack.c.l.b16 %v1584
  %v2101 = vunpack.c.l.b16 %v1585
  %v2102 = vunpack.c.l.b16 %v1586
  %v2103 = vunpack.c.l.b16 %v1587
  %v2104 = vunpack.c.l.b16 %v1588
  %v2105 = vunpack.c.l.b16 %v1589
  %v2106 = vunpack.c.l.b16 %v1590
  %v2107 = vunpack.c.l.b16 %v1591
  %v2108 = vunpack.c.l.b16 %v1592
  %v2109 = vunpack.c.l.b16 %v1593
  %v2110 = vunpack.c.l.b16 %v1594
  %v2111 = vunpack.c.l.b16 %v1595
  %v2112 = vunpack.c.l.b16 %v1596
  %v2113 = vunpack.c.l.b16 %v1597
  %v2114 = vunpack.c.l.b16 %v1598
  %v2115 = vunpack.c.l.b16 %v1599
  %v2116 = vunpack.c.l.b16 %v1600
  %v2117 = vunpack.c.l.b16 %v1601
  %v2118 = vunpack.c.l.b16 %v1602
  %v2119 = vunpack.c.l.b16 %v1603
  %v2120 = vunpack.c.l.b16 %v1604
  %v2121 = vunpack.c.l.b16 %v1605
  %v2122 = vunpack.c.l.b16 %v1606
  %v2123 = vunpack.c.l.b16 %v1607
  %v2124 = vunpack.c.l.b16 %v1608
  %v2125 = vunpack.c.l.b16 %v1609
  %v2126 = vunpack.c.l.b16 %v1610
  %v2127 = vunpack.c.l.b16 %v1611
  %v2128 = vunpack.c.l.b16 %v1612
  %v2129 = vunpack.c.l.b16 %v1613
  %v2130 = vunpack.c.l.b16 %v1614
  %v2131 = vpack.c.b16 %v1876, %v1875
  %v2132 = vpack.c.b16 %v1878, %v1877
  %v2133 = vpack.c.b16 %v1880, %v1879
  %v2134 = vpack.c.b16 %v1882, %v1881
  %v2135 = vpack.c.b16 %v1884, %v1883
  %v2136 = vpack.c.b16 %v1886, %v1885
  %v2137 = vpack.c.b16 %v1888, %v1887
  %v2138 = vpack.c.b16 %v1890, %v1889
  %v2139 = vpack.c.b16 %v1892, %v1891
  %v2140 = vpack.c.b16 %v1894, %v1893
  %v2141 = vpack.c.b16 %v1896, %v1895
  %v2142 = vpack.c.b16 %v1898, %v1897
  %v2143 = vpack.c.b16 %v1900, %v1899
  %v2144 = vpack.c.b16 %v1902, %v1901
  %v2145 = vpack.c.b16 %v1904, %v1903
  %v2146 = vpack.c.b16 %v1906, %v1905
  %v2147 = vpack.c.b16 %v1908, %v1907
  %v2148 = vpack.c.b16 %v1910, %v1909
  %v2149 = vpack.c.b16 %v1912, %v1911
  %v2150 = vpack.c.b16 %v1914, %v1913
  %v2151 = vpack.c.b16 %v1916, %v1915
  %v2152 = vpack.c.b16 %v1918, %v1917
  %v2153 = vpack.c.b16 %v1920, %v1919
  %v2154 = vpack.c.b16 %v1922, %v1921
  %v2155 = vpack.c.b16 %v1924, %v1923
  %v2156 = vpack.c.b16 %v1926, %v1925
  %v2157 = vpack.c.b16 %v1928, %v1927
  %v2158 = vpack.c.b16 %v1930, %v1929
  %v2159 = vpack.c.b16 %v1932, %v1931
  %v2160 = vpack.c.b16 %v1934, %v1933
  %v2161 = vpack.c.b16 %v1936, %v1935
  %v2162 = vpack.c.b16 %v1938, %v1937
  %v2163 = vpack.c.b16 %v1940, %v1939
  %v2164 = vpack.c.b16 %v1942, %v1941
  %v2165 = vpack.c.b16 %v1944, %v1943
  %v2166 = vpack.c.b16 %v1946, %v1945
  %v2167 = vpack.c.b16 %v1948, %v1947
  %v2168 = vpack.c.b16 %v1950, %v1949
  %v2169 = vpack.c.b16 %v1952, %v1951
  %v2170 = vpack.c.b16 %v1954, %v1953
  %v2171 = vpack.c.b16 %v1956, %v1955
  %v2172 = vpack.c.b16 %v1958, %v1957
  %v2173 = vpack.c.b16 %v1960, %v1959
  %v2174 = vpack.c.b16 %v1962, %v1961
  %v2175 = vpack.c.b16 %v1964, %v1963
  %v2176 = vpack.c.b16 %v1966, %v1965
  %v2177 = vpack.c.b16 %v1968, %v1967
  %v2178 = vpack.c.b16 %v1970, %v1969
  %v2179 = vpack.c.b16 %v1972, %v1971
  %v2180 = vpack.c.b16 %v1974, %v1973
  %v2181 = vpack.c.b16 %v1976, %v1975
  %v2182 = vpack.c.b16 %v1978, %v1977
  %v2183 = vpack.c.b16 %v1980, %v1979
  %v2184 = vpack.c.b16 %v1982, %v1981
  %v2185 = vpack.c.b16 %v1984, %v1983
  %v2186 = vpack.c.b16 %v1986, %v1985
  %v2187 = vpack.c.b16 %v1988, %v1987
  %v2188 = vpack.c.b16 %v1990, %v1989
  %v2189 = vpack.c.b16 %v1992, %v1991
  %v2190 = vpack.c.b16 %v1994, %v1993
  %v2191 = vpack.c.b16 %v1996, %v1995
  %v2192 = vpack.c.b16 %v1998, %v1997
  %v2193 = vpack.c.b16 %v2000, %v1999
  %v2194 = vpack.c.b16 %v2002, %v2001
  %v2195 = vpack.c.b16 %v2004, %v2003
  %v2196 = vpack.c.b16 %v2006, %v2005
  %v2197 = vpack.c.b16 %v2008, %v2007
  %v2198 = vpack.c.b16 %v2010, %v2009
  %v2199 = vpack.c.b16 %v2012, %v2011
  %v2200 = vpack.c.b16 %v2014, %v2013
  %v2201 = vpack.c.b16 %v2016, %v2015
  %v2202 = vpack.c.b16 %v2018, %v2017
  %v2203 = vpack.c.b16 %v2020, %v2019
  %v2204 = vpack.c.b16 %v2022, %v2021
  %v2205 = vpack.c.b16 %v2024, %v2023
  %v2206 = vpack.c.b16 %v2026, %v2025
  %v2207 = vpack.c.b16 %v2028, %v2027
  %v2208 = vpack.c.b16 %v2030, %v2029
  %v2209 = vpack.c.b16 %v2032, %v2031
  %v2210 = vpack.c.b16 %v2034, %v2033
  %v2211 = vpack.c.b16 %v2036, %v2035
  %v2212 = vpack.c.b16 %v2038, %v2037
  %v2213 = vpack.c.b16 %v2040, %v2039
  %v2214 = vpack.c.b16 %v2042, %v2041
  %v2215 = vpack.c.b16 %v2044, %v2043
  %v2216 = vpack.c.b16 %v2046, %v2045
  %v2217 = vpack.c.b16 %v2048, %v2047
  %v2218 = vpack.c.b16 %v2050, %v2049
  %v2219 = vpack.c.b16 %v2052, %v2051
  %v2220 = vpack.c.b16 %v2054, %v2053
  %v2221 = vpack.c.b16 %v2056, %v2055
  %v2222 = vpack.c.b16 %v2058, %v2057
  %v2223 = vpack.c.b16 %v2060, %v2059
  %v2224 = vpack.c.b16 %v2062, %v2061
  %v2225 = vpack.c.b16 %v2064, %v2063
  %v2226 = vpack.c.b16 %v2066, %v2065
  %v2227 = vpack.c.b16 %v2068, %v2067
  %v2228 = vpack.c.b16 %v2070, %v2069
  %v2229 = vpack.c.b16 %v2072, %v2071
  %v2230 = vpack.c.b16 %v2074, %v2073
  %v2231 = vpack.c.b16 %v2076, %v2075
  %v2232 = vpack.c.b16 %v2078, %v2077
  %v2233 = vpack.c.b16 %v2080, %v2079
  %v2234 = vpack.c.b16 %v2082, %v2081
  %v2235 = vpack.c.b16 %v2084, %v2083
  %v2236 = vpack.c.b16 %v2086, %v2085
  %v2237 = vpack.c.b16 %v2088, %v2087
  %v2238 = vpack.c.b16 %v2090, %v2089
  %v2239 = vpack.c.b16 %v2092, %v2091
  %v2240 = vpack.c.b16 %v2094, %v2093
  %v2241 = vpack.c.b16 %v2096, %v2095
  %v2242 = vpack.c.b16 %v2098, %v2097
  %v2243 = vpack.c.b16 %v2100, %v2099
  %v2244 = vpack.c.b16 %v2102, %v2101
  %v2245 = vpack.c.b16 %v2104, %v2103
  %v2246 = vpack.c.b16 %v2106, %v2105
  %v2247 = vpack.c.b16 %v2108, %v2107
  %v2248 = vpack.c.b16 %v2110, %v2109
  %v2249 = vpack.c.b16 %v2112, %v2111
  %v2250 = vpack.c.b16 %v2114, %v2113
  %v2251 = vpack.c.b16 %v2116, %v2115
  %v2252 = vpack.c.b16 %v2118, %v2117
  %v2253 = vpack.c.b16 %v2120, %v2119
  %v2254 = vpack.c.b16 %v2122, %v2121
  %v2255 = vpack.c.b16 %v2124, %v2123
  %v2256 = vpack.c.b16 %v2126, %v2125
  %v2257 = vpack.c.b16 %v2128, %v2127
  %v2258 = vpack.c.b16 %v2130, %v2129
  %2387 = vmatpush.bf16.msra.mxu0 %v2138
  %2388 = vmatpush.bf16.msra.mxu0 %v2137
  %2389 = vmatpush.bf16.msra.mxu0 %v2136
  %2390 = vmatpush.bf16.msra.mxu0 %v2135
  %2391 = vmatpush.bf16.msra.mxu0 %v2134
  %2392 = vmatpush.bf16.msra.mxu0 %v2133
  %2393 = vmatpush.bf16.msra.mxu0 %v2132
  %2394 = vmatpush.bf16.msra.mxu0 %v2131
  %2395 = vmatmul.bf16.gmra.mxu0 %v1343
  %v2396 = vpop.f32.mrf.mxu0
  %v2397 = vadd.f32 %v1617, %v2396
  %v2398 = vpop.f32.mrf.mxu0
  %v2399 = vadd.f32 %v1617, %v2398
  %2400 = vdwg.mxu0
  %2401 = vmatpush.bf16.msra.mxu0 %v2146
  %2402 = vmatpush.bf16.msra.mxu0 %v2145
  %2403 = vmatpush.bf16.msra.mxu0 %v2144
  %2404 = vmatpush.bf16.msra.mxu0 %v2143
  %2405 = vmatpush.bf16.msra.mxu0 %v2142
  %2406 = vmatpush.bf16.msra.mxu0 %v2141
  %2407 = vmatpush.bf16.msra.mxu0 %v2140
  %2408 = vmatpush.bf16.msra.mxu0 %v2139
  %2409 = vmatmul.bf16.gmra.mxu0 %v1344
  %v2410 = vpop.f32.mrf.mxu0
  %v2411 = vadd.f32 %v2397, %v2410
  %v2412 = vpop.f32.mrf.mxu0
  %v2413 = vadd.f32 %v2399, %v2412
  %2414 = vdwg.mxu0
  %2415 = vmatpush.bf16.msra.mxu0 %v2154
  %2416 = vmatpush.bf16.msra.mxu0 %v2153
  %2417 = vmatpush.bf16.msra.mxu0 %v2152
  %2418 = vmatpush.bf16.msra.mxu0 %v2151
  %2419 = vmatpush.bf16.msra.mxu0 %v2150
  %2420 = vmatpush.bf16.msra.mxu0 %v2149
  %2421 = vmatpush.bf16.msra.mxu0 %v2148
  %2422 = vmatpush.bf16.msra.mxu0 %v2147
  %2423 = vmatmul.bf16.gmra.mxu0 %v1345
  %v2424 = vpop.f32.mrf.mxu0
  %v2425 = vadd.f32 %v2411, %v2424
  %v2426 = vpop.f32.mrf.mxu0
  %v2427 = vadd.f32 %v2413, %v2426
  %2428 = vdwg.mxu0
  %2429 = vmatpush.bf16.msra.mxu0 %v2162
  %2430 = vmatpush.bf16.msra.mxu0 %v2161
  %2431 = vmatpush.bf16.msra.mxu0 %v2160
  %2432 = vmatpush.bf16.msra.mxu0 %v2159
  %2433 = vmatpush.bf16.msra.mxu0 %v2158
  %2434 = vmatpush.bf16.msra.mxu0 %v2157
  %2435 = vmatpush.bf16.msra.mxu0 %v2156
  %2436 = vmatpush.bf16.msra.mxu0 %v2155
  %2437 = vmatmul.bf16.gmra.mxu0 %v1346
  %v2438 = vpop.f32.mrf.mxu0
  %v2439 = vadd.f32 %v2425, %v2438
  %v2440 = vpop.f32.mrf.mxu0
  %v2441 = vadd.f32 %v2427, %v2440
  %2442 = vdwg.mxu0
  %2443 = vmatpush.bf16.msra.mxu0 %v2170
  %2444 = vmatpush.bf16.msra.mxu0 %v2169
  %2445 = vmatpush.bf16.msra.mxu0 %v2168
  %2446 = vmatpush.bf16.msra.mxu0 %v2167
  %2447 = vmatpush.bf16.msra.mxu0 %v2166
  %2448 = vmatpush.bf16.msra.mxu0 %v2165
  %2449 = vmatpush.bf16.msra.mxu0 %v2164
  %2450 = vmatpush.bf16.msra.mxu0 %v2163
  %2451 = vmatmul.bf16.gmra.mxu0 %v1347
  %v2452 = vpop.f32.mrf.mxu0
  %v2453 = vadd.f32 %v2439, %v2452
  %v2454 = vpop.f32.mrf.mxu0
  %v2455 = vadd.f32 %v2441, %v2454
  %2456 = vdwg.mxu0
  %2457 = vmatpush.bf16.msra.mxu0 %v2178
  %2458 = vmatpush.bf16.msra.mxu0 %v2177
  %2459 = vmatpush.bf16.msra.mxu0 %v2176
  %2460 = vmatpush.bf16.msra.mxu0 %v2175
  %2461 = vmatpush.bf16.msra.mxu0 %v2174
  %2462 = vmatpush.bf16.msra.mxu0 %v2173
  %2463 = vmatpush.bf16.msra.mxu0 %v2172
  %2464 = vmatpush.bf16.msra.mxu0 %v2171
  %2465 = vmatmul.bf16.gmra.mxu0 %v1348
  %v2466 = vpop.f32.mrf.mxu0
  %v2467 = vadd.f32 %v2453, %v2466
  %v2468 = vpop.f32.mrf.mxu0
  %v2469 = vadd.f32 %v2455, %v2468
  %2470 = vdwg.mxu0
  %2471 = vmatpush.bf16.msra.mxu0 %v2186
  %2472 = vmatpush.bf16.msra.mxu0 %v2185
  %2473 = vmatpush.bf16.msra.mxu0 %v2184
  %2474 = vmatpush.bf16.msra.mxu0 %v2183
  %2475 = vmatpush.bf16.msra.mxu0 %v2182
  %2476 = vmatpush.bf16.msra.mxu0 %v2181
  %2477 = vmatpush.bf16.msra.mxu0 %v2180
  %2478 = vmatpush.bf16.msra.mxu0 %v2179
  %2479 = vmatmul.bf16.gmra.mxu0 %v1349
  %v2480 = vpop.f32.mrf.mxu0
  %v2481 = vadd.f32 %v2467, %v2480
  %v2482 = vpop.f32.mrf.mxu0
  %v2483 = vadd.f32 %v2469, %v2482
  %2484 = vdwg.mxu0
  %2485 = vmatpush.bf16.msra.mxu0 %v2194
  %2486 = vmatpush.bf16.msra.mxu0 %v2193
  %2487 = vmatpush.bf16.msra.mxu0 %v2192
  %2488 = vmatpush.bf16.msra.mxu0 %v2191
  %2489 = vmatpush.bf16.msra.mxu0 %v2190
  %2490 = vmatpush.bf16.msra.mxu0 %v2189
  %2491 = vmatpush.bf16.msra.mxu0 %v2188
  %2492 = vmatpush.bf16.msra.mxu0 %v2187
  %2493 = vmatmul.bf16.gmra.mxu0 %v1350
  %v2494 = vpop.f32.mrf.mxu0
  %v2495 = vadd.f32 %v2481, %v2494
  %v2496 = vpop.f32.mrf.mxu0
  %v2497 = vadd.f32 %v2483, %v2496
  %2498 = vdwg.mxu0
  %2499 = vmatpush.bf16.msra.mxu0 %v2202
  %2500 = vmatpush.bf16.msra.mxu0 %v2201
  %2501 = vmatpush.bf16.msra.mxu0 %v2200
  %2502 = vmatpush.bf16.msra.mxu0 %v2199
  %2503 = vmatpush.bf16.msra.mxu0 %v2198
  %2504 = vmatpush.bf16.msra.mxu0 %v2197
  %2505 = vmatpush.bf16.msra.mxu0 %v2196
  %2506 = vmatpush.bf16.msra.mxu0 %v2195
  %2507 = vmatmul.bf16.gmra.mxu0 %v1351
  %v2508 = vpop.f32.mrf.mxu0
  %v2509 = vadd.f32 %v2495, %v2508
  %v2510 = vpop.f32.mrf.mxu0
  %v2511 = vadd.f32 %v2497, %v2510
  %2512 = vdwg.mxu0
  %2513 = vmatpush.bf16.msra.mxu0 %v2210
  %2514 = vmatpush.bf16.msra.mxu0 %v2209
  %2515 = vmatpush.bf16.msra.mxu0 %v2208
  %2516 = vmatpush.bf16.msra.mxu0 %v2207
  %2517 = vmatpush.bf16.msra.mxu0 %v2206
  %2518 = vmatpush.bf16.msra.mxu0 %v2205
  %2519 = vmatpush.bf16.msra.mxu0 %v2204
  %2520 = vmatpush.bf16.msra.mxu0 %v2203
  %2521 = vmatmul.bf16.gmra.mxu0 %v1352
  %v2522 = vpop.f32.mrf.mxu0
  %v2523 = vadd.f32 %v2509, %v2522
  %v2524 = vpop.f32.mrf.mxu0
  %v2525 = vadd.f32 %v2511, %v2524
  %2526 = vdwg.mxu0
  %2527 = vmatpush.bf16.msra.mxu0 %v2218
  %2528 = vmatpush.bf16.msra.mxu0 %v2217
  %2529 = vmatpush.bf16.msra.mxu0 %v2216
  %2530 = vmatpush.bf16.msra.mxu0 %v2215
  %2531 = vmatpush.bf16.msra.mxu0 %v2214
  %2532 = vmatpush.bf16.msra.mxu0 %v2213
  %2533 = vmatpush.bf16.msra.mxu0 %v2212
  %2534 = vmatpush.bf16.msra.mxu0 %v2211
  %2535 = vmatmul.bf16.gmra.mxu0 %v1353
  %v2536 = vpop.f32.mrf.mxu0
  %v2537 = vadd.f32 %v2523, %v2536
  %v2538 = vpop.f32.mrf.mxu0
  %v2539 = vadd.f32 %v2525, %v2538
  %2540 = vdwg.mxu0
  %2541 = vmatpush.bf16.msra.mxu0 %v2226
  %2542 = vmatpush.bf16.msra.mxu0 %v2225
  %2543 = vmatpush.bf16.msra.mxu0 %v2224
  %2544 = vmatpush.bf16.msra.mxu0 %v2223
  %2545 = vmatpush.bf16.msra.mxu0 %v2222
  %2546 = vmatpush.bf16.msra.mxu0 %v2221
  %2547 = vmatpush.bf16.msra.mxu0 %v2220
  %2548 = vmatpush.bf16.msra.mxu0 %v2219
  %2549 = vmatmul.bf16.gmra.mxu0 %v1354
  %v2550 = vpop.f32.mrf.mxu0
  %v2551 = vadd.f32 %v2537, %v2550
  %v2552 = vpop.f32.mrf.mxu0
  %v2553 = vadd.f32 %v2539, %v2552
  %2554 = vdwg.mxu0
  %2555 = vmatpush.bf16.msra.mxu0 %v2234
  %2556 = vmatpush.bf16.msra.mxu0 %v2233
  %2557 = vmatpush.bf16.msra.mxu0 %v2232
  %2558 = vmatpush.bf16.msra.mxu0 %v2231
  %2559 = vmatpush.bf16.msra.mxu0 %v2230
  %2560 = vmatpush.bf16.msra.mxu0 %v2229
  %2561 = vmatpush.bf16.msra.mxu0 %v2228
  %2562 = vmatpush.bf16.msra.mxu0 %v2227
  %2563 = vmatmul.bf16.gmra.mxu0 %v1355
  %v2564 = vpop.f32.mrf.mxu0
  %v2565 = vadd.f32 %v2551, %v2564
  %v2566 = vpop.f32.mrf.mxu0
  %v2567 = vadd.f32 %v2553, %v2566
  %2568 = vdwg.mxu0
  %2569 = vmatpush.bf16.msra.mxu0 %v2242
  %2570 = vmatpush.bf16.msra.mxu0 %v2241
  %2571 = vmatpush.bf16.msra.mxu0 %v2240
  %2572 = vmatpush.bf16.msra.mxu0 %v2239
  %2573 = vmatpush.bf16.msra.mxu0 %v2238
  %2574 = vmatpush.bf16.msra.mxu0 %v2237
  %2575 = vmatpush.bf16.msra.mxu0 %v2236
  %2576 = vmatpush.bf16.msra.mxu0 %v2235
  %2577 = vmatmul.bf16.gmra.mxu0 %v1356
  %v2578 = vpop.f32.mrf.mxu0
  %v2579 = vadd.f32 %v2565, %v2578
  %v2580 = vpop.f32.mrf.mxu0
  %v2581 = vadd.f32 %v2567, %v2580
  %2582 = vdwg.mxu0
  %2583 = vmatpush.bf16.msra.mxu0 %v2250
  %2584 = vmatpush.bf16.msra.mxu0 %v2249
  %2585 = vmatpush.bf16.msra.mxu0 %v2248
  %2586 = vmatpush.bf16.msra.mxu0 %v2247
  %2587 = vmatpush.bf16.msra.mxu0 %v2246
  %2588 = vmatpush.bf16.msra.mxu0 %v2245
  %2589 = vmatpush.bf16.msra.mxu0 %v2244
  %2590 = vmatpush.bf16.msra.mxu0 %v2243
  %2591 = vmatmul.bf16.gmra.mxu0 %v1357
  %v2592 = vpop.f32.mrf.mxu0
  %v2593 = vadd.f32 %v2579, %v2592
  %v2594 = vpop.f32.mrf.mxu0
  %v2595 = vadd.f32 %v2581, %v2594
  %2596 = vdwg.mxu0
  %2597 = vmatpush.bf16.msra.mxu0 %v2258
  %2598 = vmatpush.bf16.msra.mxu0 %v2257
  %2599 = vmatpush.bf16.msra.mxu0 %v2256
  %2600 = vmatpush.bf16.msra.mxu0 %v2255
  %2601 = vmatpush.bf16.msra.mxu0 %v2254
  %2602 = vmatpush.bf16.msra.mxu0 %v2253
  %2603 = vmatpush.bf16.msra.mxu0 %v2252
  %2604 = vmatpush.bf16.msra.mxu0 %v2251
  %2605 = vmatmul.bf16.gmra.mxu0 %v1358
  %v2606 = vpop.f32.mrf.mxu0
  %v2607 = vadd.f32 %v2593, %v2606
  %v2608 = vpop.f32.mrf.mxu0
  %v2609 = vadd.f32 %v2595, %v2608
  %2610 = vdwg.mxu0
  %v2611 = vld [vmem:[%s13] sm:$0x1]
  %v2612 = vld [vmem:[%s14] sm:$0x1]
  %v2613 = vadd.f32 %v661, %v2607
  %v2614 = vadd.f32 %v662, %v2609
  %v2615 = vsel %vm196, %v2613, 0.0
  %2616 = vadd.xlane.f32.xlu0 %v2615
  %v2617 = vpop.xlane.xlu0 %2616
  %v2618 = vsel %vm196, %v2614, 0.0
  %2619 = vadd.xlane.f32.xlu0 %v2618
  %v2620 = vpop.xlane.xlu0 %2619
  %v2621 = vmul.f32 %v2617, %v614
  %v2622 = vmul.f32 %v2620, %v614
  %v2623 = vsub.f32 %v2613, %v2621
  %v2624 = vsub.f32 %v2614, %v2622
  %v2625 = vmul.f32 %v2623, %v2623
  %v2626 = vmul.f32 %v2624, %v2624
  %v2627 = vsel %vm196, %v2625, 0.0
  %2628 = vadd.xlane.f32.xlu0 %v2627
  %v2629 = vpop.xlane.xlu0 %2628
  %v2630 = vsel %vm196, %v2626, 0.0
  %2631 = vadd.xlane.f32.xlu0 %v2630
  %v2632 = vpop.xlane.xlu0 %2631
  %v2633 = vmul.f32 %v2629, %v614
  %v2634 = vmul.f32 %v2632, %v614
  %v2635 = vadd.f32 %v2633, 1e-05
  %v2636 = vadd.f32 %v2634, 1e-05
  %v2637 = vrsqrt.pop %v2635
  %v2638 = vmul.f32 %v2637, %v2635
  %v2639 = vmul.f32 %v2638, %v2637
  %v2640 = vmul.f32 0.5, %v2639
  %v2641 = vsub.f32 1.5, %v2640
  %v2642 = vmul.f32 %v2637, %v2641
  %vm2643 = vweird.f32 %v2635
  %vm2644 = vweird.f32 %v2637
  %vm2645 = vmor %vm2643, %vm2644
  %v2646 = vsel %vm2645, %v2637, %v2642
  %v2647 = vrsqrt.pop %v2636
  %v2648 = vmul.f32 %v2647, %v2636
  %v2649 = vmul.f32 %v2648, %v2647
  %v2650 = vmul.f32 0.5, %v2649
  %v2651 = vsub.f32 1.5, %v2650
  %v2652 = vmul.f32 %v2647, %v2651
  %vm2653 = vweird.f32 %v2636
  %vm2654 = vweird.f32 %v2647
  %vm2655 = vmor %vm2653, %vm2654
  %v2656 = vsel %vm2655, %v2647, %v2652
  %v2657 = vmul.f32 %v2623, %v2646
  %v2658 = vmul.f32 %v2624, %v2656
  %v2660 = vperm.slane %v2611, 0
  %v2662 = vmul.f32 %v2657, %v2660
  %v2663 = vmul.f32 %v2658, %v2660
  %v2665 = vperm.slane %v2612, 0
  %v2667 = vadd.f32 %v2662, %v2665
  %v2668 = vadd.f32 %v2663, %v2665
  %v2669 = vpack.c.bf16 %v2668, %v2667
  %s2670 = scalar_lea.vmem %s3, 64
  %v2671 = vld [vmem:[%s2670] sm:$0xff]
  %v2672 = vld [vmem:[%s2670 + $0x8] sm:$0xff]
  %v2673 = vld [vmem:[%s2670 + $0x10] sm:$0xff]
  %v2674 = vld [vmem:[%s2670 + $0x18] sm:$0xff]
  %v2675 = vld [vmem:[%s2670 + $0x20] sm:$0xff]
  %v2676 = vld [vmem:[%s2670 + $0x28] sm:$0xff]
  %v2677 = vld [vmem:[%s2670 + $0x30] sm:$0xff]
  %v2678 = vld [vmem:[%s2670 + $0x38] sm:$0xff]
  %s2679 = scalar_lea.vmem %s4, 2
  %v2680 = vld [vmem:[%s2679] sm:$0x3]
  %v2682 = vperm.slane %v2680, 0
  %v2683 = vperm.slane %v2680, 1
  %v2694 = vunpack.c.l.b16 %v2671
  %v2695 = vunpack.c.h.b16 %v2671
  %v2696 = vunpack.c.l.b16 %v2672
  %v2697 = vunpack.c.h.b16 %v2672
  %v2698 = vunpack.c.l.b16 %v2673
  %v2699 = vunpack.c.h.b16 %v2673
  %v2700 = vunpack.c.l.b16 %v2674
  %v2701 = vunpack.c.h.b16 %v2674
  %v2702 = vunpack.c.l.b16 %v2675
  %v2703 = vunpack.c.h.b16 %v2675
  %v2704 = vunpack.c.l.b16 %v2676
  %v2705 = vunpack.c.h.b16 %v2676
  %v2706 = vunpack.c.l.b16 %v2677
  %v2707 = vunpack.c.h.b16 %v2677
  %v2708 = vunpack.c.l.b16 %v2678
  %v2709 = vunpack.c.h.b16 %v2678
  %v2710 = vpack.c.b16 %v2696, %v2694
  %v2711 = vpack.c.b16 %v2697, %v2695
  %v2712 = vpack.c.b16 %v2700, %v2698
  %v2713 = vpack.c.b16 %v2701, %v2699
  %v2714 = vpack.c.b16 %v2704, %v2702
  %v2715 = vpack.c.b16 %v2705, %v2703
  %v2716 = vpack.c.b16 %v2708, %v2706
  %v2717 = vpack.c.b16 %v2709, %v2707
  %v2727 = vsel %vm196, %v2669, 0
  %2729 = vmatpush.bf16.msra.mxu0 0
  %2730 = vmatpush.bf16.msra.mxu0 0
  %2731 = vmatpush.bf16.msra.mxu0 0
  %2732 = vmatpush.bf16.msra.mxu0 0
  %2733 = vmatpush.bf16.msra.mxu0 %v2716
  %2734 = vmatpush.bf16.msra.mxu0 %v2714
  %2735 = vmatpush.bf16.msra.mxu0 %v2712
  %2736 = vmatpush.bf16.msra.mxu0 %v2710
  %2737 = vmatmul.bf16.gmra.mxu0 %v2727
  %v2738 = vpop.f32.mrf.mxu0
  %v2739 = vadd.f32 %v2682, %v2738
  %v2740 = vpop.f32.mrf.mxu0
  %v2741 = vadd.f32 %v2682, %v2740
  %2742 = vdwg.mxu0
  %2743 = vmatpush.bf16.msra.mxu0 0
  %2744 = vmatpush.bf16.msra.mxu0 0
  %2745 = vmatpush.bf16.msra.mxu0 0
  %2746 = vmatpush.bf16.msra.mxu0 0
  %2747 = vmatpush.bf16.msra.mxu0 %v2717
  %2748 = vmatpush.bf16.msra.mxu0 %v2715
  %2749 = vmatpush.bf16.msra.mxu0 %v2713
  %2750 = vmatpush.bf16.msra.mxu0 %v2711
  %2751 = vmatmul.bf16.gmra.mxu0 %v2727
  %v2752 = vpop.f32.mrf.mxu0
  %v2753 = vadd.f32 %v2683, %v2752
  %v2754 = vpop.f32.mrf.mxu0
  %v2755 = vadd.f32 %v2683, %v2754
  %2756 = vdwg.mxu0
  %v2757 = vpack.c.bf16 %v2741, %v2739
  %v2758 = vpack.c.bf16 %v2755, %v2753
  %2760 = vrot.lane.b32.xlu0 %v2757, 64
  %v2761 = vpop.permute.xlu0 %2760
  %v2763 = vsel %vm233, %v2757, 0
  %v2766 = vsel %vm233, %v2761, 0
  %2768 = vmatpush.bf16.xpose.msra.mxu0 0
  %2769 = vmatpush.bf16.xpose.msra.mxu0 0
  %2770 = vmatpush.bf16.xpose.msra.mxu0 0
  %2771 = vmatpush.bf16.xpose.msra.mxu0 0
  %2772 = vmatpush.bf16.xpose.msra.mxu0 0
  %2773 = vmatpush.bf16.xpose.msra.mxu0 0
  %2774 = vmatpush.bf16.xpose.msra.mxu0 0
  %2775 = vmatpush.bf16.xpose.msra.mxu0 %v2766
  %2776 = vmatmul.bf16.gmra.mxu0 %v2763
  %v2777 = vpop.f32.mrf.mxu0
  %v2778 = vadd.f32 0.0, %v2777
  %v2779 = vpop.f32.mrf.mxu0
  %v2780 = vadd.f32 0.0, %v2779
  %2781 = vdwg.mxu0
  %v2782 = vmul.f32 %v2778, 0.25
  %v2783 = vmul.f32 %v2780, 0.25
  %v2784 = vsel %vm109, %v2782, -1e+30
  %v2785 = vsel %vm110, %v2783, -1e+30
  %v2786 = vsel %vm233, %v2784, -inf
  %2787 = vmax.xlane.f32.xlu0 %v2786
  %v2788 = vpop.xlane.xlu0 %2787
  %v2789 = vsel %vm233, %v2785, -inf
  %2790 = vmax.xlane.f32.xlu0 %v2789
  %v2791 = vpop.xlane.xlu0 %2790
  %v2792 = vsub.f32 %v2784, %v2788
  %v2793 = vsub.f32 %v2785, %v2791
  %v2794 = vmul.f32 %v2792, 1.442695
  %v2795 = vpow.pop %v2794
  %v2796 = vmul.f32 %v2793, 1.442695
  %v2797 = vpow.pop %v2796
  %v2798 = vsel %vm233, %v2795, 0.0
  %2799 = vadd.xlane.f32.xlu0 %v2798
  %v2800 = vpop.xlane.xlu0 %2799
  %v2801 = vsel %vm233, %v2797, 0.0
  %2802 = vadd.xlane.f32.xlu0 %v2801
  %v2803 = vpop.xlane.xlu0 %2802
  %v2804 = vrcp.pop %v2800
  %v2805 = vrcp.pop %v2803
  %v2806 = vmul.f32 %v2795, %v2804
  %v2807 = vmul.f32 %v2797, %v2805
  %v2808 = vpack.c.bf16 %v2807, %v2806
  %v2810 = vsel %vm233, %v2808, 0
  %2812 = vmatpush.bf16.msra.mxu0 0
  %2813 = vmatpush.bf16.msra.mxu0 0
  %2814 = vmatpush.bf16.msra.mxu0 0
  %2815 = vmatpush.bf16.msra.mxu0 0
  %2816 = vmatpush.bf16.msra.mxu0 0
  %2817 = vmatpush.bf16.msra.mxu0 0
  %2818 = vmatpush.bf16.msra.mxu0 0
  %2819 = vmatpush.bf16.msra.mxu0 %v2758
  %2820 = vmatmul.bf16.gmra.mxu0 %v2810
  %v2821 = vpop.f32.mrf.mxu0
  %v2822 = vadd.f32 0.0, %v2821
  %v2823 = vpop.f32.mrf.mxu0
  %v2824 = vadd.f32 0.0, %v2823
  %2825 = vdwg.mxu0
  %2826 = vrot.lane.b32.xlu0 %v2757, 112
  %v2827 = vpop.permute.xlu0 %2826
  %2828 = vrot.lane.b32.xlu0 %v2757, 48
  %v2829 = vpop.permute.xlu0 %2828
  %v2831 = vsel %vm233, %v2827, 0
  %v2834 = vsel %vm233, %v2829, 0
  %2836 = vmatpush.bf16.xpose.msra.mxu0 0
  %2837 = vmatpush.bf16.xpose.msra.mxu0 0
  %2838 = vmatpush.bf16.xpose.msra.mxu0 0
  %2839 = vmatpush.bf16.xpose.msra.mxu0 0
  %2840 = vmatpush.bf16.xpose.msra.mxu0 0
  %2841 = vmatpush.bf16.xpose.msra.mxu0 0
  %2842 = vmatpush.bf16.xpose.msra.mxu0 0
  %2843 = vmatpush.bf16.xpose.msra.mxu0 %v2834
  %2844 = vmatmul.bf16.gmra.mxu0 %v2831
  %v2845 = vpop.f32.mrf.mxu0
  %v2846 = vadd.f32 0.0, %v2845
  %v2847 = vpop.f32.mrf.mxu0
  %v2848 = vadd.f32 0.0, %v2847
  %2849 = vdwg.mxu0
  %v2850 = vmul.f32 %v2846, 0.25
  %v2851 = vmul.f32 %v2848, 0.25
  %v2852 = vsel %vm109, %v2850, -1e+30
  %v2853 = vsel %vm110, %v2851, -1e+30
  %v2854 = vsel %vm233, %v2852, -inf
  %2855 = vmax.xlane.f32.xlu0 %v2854
  %v2856 = vpop.xlane.xlu0 %2855
  %v2857 = vsel %vm233, %v2853, -inf
  %2858 = vmax.xlane.f32.xlu0 %v2857
  %v2859 = vpop.xlane.xlu0 %2858
  %v2860 = vsub.f32 %v2852, %v2856
  %v2861 = vsub.f32 %v2853, %v2859
  %v2862 = vmul.f32 %v2860, 1.442695
  %v2863 = vpow.pop %v2862
  %v2864 = vmul.f32 %v2861, 1.442695
  %v2865 = vpow.pop %v2864
  %v2866 = vsel %vm233, %v2863, 0.0
  %2867 = vadd.xlane.f32.xlu0 %v2866
  %v2868 = vpop.xlane.xlu0 %2867
  %v2869 = vsel %vm233, %v2865, 0.0
  %2870 = vadd.xlane.f32.xlu0 %v2869
  %v2871 = vpop.xlane.xlu0 %2870
  %v2872 = vrcp.pop %v2868
  %v2873 = vrcp.pop %v2871
  %v2874 = vmul.f32 %v2863, %v2872
  %v2875 = vmul.f32 %v2865, %v2873
  %v2876 = vpack.c.bf16 %v2875, %v2874
  %2878 = vrot.lane.b32.xlu0 %v2758, 112
  %v2879 = vpop.permute.xlu0 %2878
  %v2882 = vsel %vm233, %v2876, 0
  %2884 = vmatpush.bf16.msra.mxu0 0
  %2885 = vmatpush.bf16.msra.mxu0 0
  %2886 = vmatpush.bf16.msra.mxu0 0
  %2887 = vmatpush.bf16.msra.mxu0 0
  %2888 = vmatpush.bf16.msra.mxu0 0
  %2889 = vmatpush.bf16.msra.mxu0 0
  %2890 = vmatpush.bf16.msra.mxu0 0
  %2891 = vmatpush.bf16.msra.mxu0 %v2879
  %2892 = vmatmul.bf16.gmra.mxu0 %v2882
  %v2893 = vpop.f32.mrf.mxu0
  %v2894 = vadd.f32 0.0, %v2893
  %v2895 = vpop.f32.mrf.mxu0
  %v2896 = vadd.f32 0.0, %v2895
  %2897 = vdwg.mxu0
  %2898 = vrot.lane.b32.xlu0 %v2757, 96
  %v2899 = vpop.permute.xlu0 %2898
  %2900 = vrot.lane.b32.xlu0 %v2757, 32
  %v2901 = vpop.permute.xlu0 %2900
  %v2903 = vsel %vm233, %v2899, 0
  %v2906 = vsel %vm233, %v2901, 0
  %2908 = vmatpush.bf16.xpose.msra.mxu0 0
  %2909 = vmatpush.bf16.xpose.msra.mxu0 0
  %2910 = vmatpush.bf16.xpose.msra.mxu0 0
  %2911 = vmatpush.bf16.xpose.msra.mxu0 0
  %2912 = vmatpush.bf16.xpose.msra.mxu0 0
  %2913 = vmatpush.bf16.xpose.msra.mxu0 0
  %2914 = vmatpush.bf16.xpose.msra.mxu0 0
  %2915 = vmatpush.bf16.xpose.msra.mxu0 %v2906
  %2916 = vmatmul.bf16.gmra.mxu0 %v2903
  %v2917 = vpop.f32.mrf.mxu0
  %v2918 = vadd.f32 0.0, %v2917
  %v2919 = vpop.f32.mrf.mxu0
  %v2920 = vadd.f32 0.0, %v2919
  %2921 = vdwg.mxu0
  %v2922 = vmul.f32 %v2918, 0.25
  %v2923 = vmul.f32 %v2920, 0.25
  %v2924 = vsel %vm109, %v2922, -1e+30
  %v2925 = vsel %vm110, %v2923, -1e+30
  %v2926 = vsel %vm233, %v2924, -inf
  %2927 = vmax.xlane.f32.xlu0 %v2926
  %v2928 = vpop.xlane.xlu0 %2927
  %v2929 = vsel %vm233, %v2925, -inf
  %2930 = vmax.xlane.f32.xlu0 %v2929
  %v2931 = vpop.xlane.xlu0 %2930
  %v2932 = vsub.f32 %v2924, %v2928
  %v2933 = vsub.f32 %v2925, %v2931
  %v2934 = vmul.f32 %v2932, 1.442695
  %v2935 = vpow.pop %v2934
  %v2936 = vmul.f32 %v2933, 1.442695
  %v2937 = vpow.pop %v2936
  %v2938 = vsel %vm233, %v2935, 0.0
  %2939 = vadd.xlane.f32.xlu0 %v2938
  %v2940 = vpop.xlane.xlu0 %2939
  %v2941 = vsel %vm233, %v2937, 0.0
  %2942 = vadd.xlane.f32.xlu0 %v2941
  %v2943 = vpop.xlane.xlu0 %2942
  %v2944 = vrcp.pop %v2940
  %v2945 = vrcp.pop %v2943
  %v2946 = vmul.f32 %v2935, %v2944
  %v2947 = vmul.f32 %v2937, %v2945
  %v2948 = vpack.c.bf16 %v2947, %v2946
  %2949 = vrot.lane.b32.xlu0 %v2758, 96
  %v2950 = vpop.permute.xlu0 %2949
  %v2953 = vsel %vm233, %v2948, 0
  %2955 = vmatpush.bf16.msra.mxu0 0
  %2956 = vmatpush.bf16.msra.mxu0 0
  %2957 = vmatpush.bf16.msra.mxu0 0
  %2958 = vmatpush.bf16.msra.mxu0 0
  %2959 = vmatpush.bf16.msra.mxu0 0
  %2960 = vmatpush.bf16.msra.mxu0 0
  %2961 = vmatpush.bf16.msra.mxu0 0
  %2962 = vmatpush.bf16.msra.mxu0 %v2950
  %2963 = vmatmul.bf16.gmra.mxu0 %v2953
  %v2964 = vpop.f32.mrf.mxu0
  %v2965 = vadd.f32 0.0, %v2964
  %v2966 = vpop.f32.mrf.mxu0
  %v2967 = vadd.f32 0.0, %v2966
  %2968 = vdwg.mxu0
  %2969 = vrot.lane.b32.xlu0 %v2757, 80
  %v2970 = vpop.permute.xlu0 %2969
  %2971 = vrot.lane.b32.xlu0 %v2757, 16
  %v2972 = vpop.permute.xlu0 %2971
  %v2974 = vsel %vm233, %v2970, 0
  %v2977 = vsel %vm233, %v2972, 0
  %2979 = vmatpush.bf16.xpose.msra.mxu0 0
  %2980 = vmatpush.bf16.xpose.msra.mxu0 0
  %2981 = vmatpush.bf16.xpose.msra.mxu0 0
  %2982 = vmatpush.bf16.xpose.msra.mxu0 0
  %2983 = vmatpush.bf16.xpose.msra.mxu0 0
  %2984 = vmatpush.bf16.xpose.msra.mxu0 0
  %2985 = vmatpush.bf16.xpose.msra.mxu0 0
  %2986 = vmatpush.bf16.xpose.msra.mxu0 %v2977
  %2987 = vmatmul.bf16.gmra.mxu0 %v2974
  %v2988 = vpop.f32.mrf.mxu0
  %v2989 = vadd.f32 0.0, %v2988
  %v2990 = vpop.f32.mrf.mxu0
  %v2991 = vadd.f32 0.0, %v2990
  %2992 = vdwg.mxu0
  %v2993 = vmul.f32 %v2989, 0.25
  %v2994 = vmul.f32 %v2991, 0.25
  %v2995 = vsel %vm109, %v2993, -1e+30
  %v2996 = vsel %vm110, %v2994, -1e+30
  %v2997 = vsel %vm233, %v2995, -inf
  %2998 = vmax.xlane.f32.xlu0 %v2997
  %v2999 = vpop.xlane.xlu0 %2998
  %v3000 = vsel %vm233, %v2996, -inf
  %3001 = vmax.xlane.f32.xlu0 %v3000
  %v3002 = vpop.xlane.xlu0 %3001
  %v3003 = vsub.f32 %v2995, %v2999
  %v3004 = vsub.f32 %v2996, %v3002
  %v3005 = vmul.f32 %v3003, 1.442695
  %v3006 = vpow.pop %v3005
  %v3007 = vmul.f32 %v3004, 1.442695
  %v3008 = vpow.pop %v3007
  %v3009 = vsel %vm233, %v3006, 0.0
  %3010 = vadd.xlane.f32.xlu0 %v3009
  %v3011 = vpop.xlane.xlu0 %3010
  %v3012 = vsel %vm233, %v3008, 0.0
  %3013 = vadd.xlane.f32.xlu0 %v3012
  %v3014 = vpop.xlane.xlu0 %3013
  %v3015 = vrcp.pop %v3011
  %v3016 = vrcp.pop %v3014
  %v3017 = vmul.f32 %v3006, %v3015
  %v3018 = vmul.f32 %v3008, %v3016
  %v3019 = vpack.c.bf16 %v3018, %v3017
  %3020 = vrot.lane.b32.xlu0 %v2758, 80
  %v3021 = vpop.permute.xlu0 %3020
  %v3024 = vsel %vm233, %v3019, 0
  %3026 = vmatpush.bf16.msra.mxu0 0
  %3027 = vmatpush.bf16.msra.mxu0 0
  %3028 = vmatpush.bf16.msra.mxu0 0
  %3029 = vmatpush.bf16.msra.mxu0 0
  %3030 = vmatpush.bf16.msra.mxu0 0
  %3031 = vmatpush.bf16.msra.mxu0 0
  %3032 = vmatpush.bf16.msra.mxu0 0
  %3033 = vmatpush.bf16.msra.mxu0 %v3021
  %3034 = vmatmul.bf16.gmra.mxu0 %v3024
  %v3035 = vpop.f32.mrf.mxu0
  %v3036 = vadd.f32 0.0, %v3035
  %v3037 = vpop.f32.mrf.mxu0
  %v3038 = vadd.f32 0.0, %v3037
  %3039 = vdwg.mxu0
  %3042 = vrot.lane.b32.xlu0 %v2894, 16
  %v3043 = vpop.permute.xlu0 %3042
  %3044 = vrot.lane.b32.xlu0 %v2896, 16
  %v3045 = vpop.permute.xlu0 %3044
  %3050 = vrot.lane.b32.xlu0 %v2965, 32
  %v3051 = vpop.permute.xlu0 %3050
  %3052 = vrot.lane.b32.xlu0 %v2967, 32
  %v3053 = vpop.permute.xlu0 %3052
  %3058 = vrot.lane.b32.xlu0 %v3036, 48
  %v3059 = vpop.permute.xlu0 %3058
  %3060 = vrot.lane.b32.xlu0 %v3038, 48
  %v3061 = vpop.permute.xlu0 %3060
  %v3064 = vsel %vm233, %v2822, %v3043
  %v3065 = vsel %vm233, %v2824, %v3045
  %v3066 = vsel %vm538, %v3064, %v3051
  %v3067 = vsel %vm538, %v3065, %v3053
  %v3068 = vsel %vm541, %v3066, %v3059
  %v3069 = vsel %vm541, %v3067, %v3061
  %v3070 = vpack.c.bf16 %v3069, %v3068
  %s3071 = scalar_lea.vmem %s5, 32
  %v3072 = vld [vmem:[%s3071] sm:$0xf]
  %v3073 = vld [vmem:[%s3071 + $0x4] sm:$0xf]
  %v3074 = vld [vmem:[%s3071 + $0x8] sm:$0xf]
  %v3075 = vld [vmem:[%s3071 + $0xc] sm:$0xf]
  %v3076 = vld [vmem:[%s3071 + $0x10] sm:$0xf]
  %v3077 = vld [vmem:[%s3071 + $0x14] sm:$0xf]
  %v3078 = vld [vmem:[%s3071 + $0x18] sm:$0xf]
  %v3079 = vld [vmem:[%s3071 + $0x1c] sm:$0xf]
  %s3080 = scalar_lea.vmem %s6, 1
  %v3081 = vld [vmem:[%s3080] sm:$0x1]
  %v3083 = vperm.slane %v3081, 0
  %v3093 = vunpack.c.l.b16 %v3072
  %v3094 = vunpack.c.l.b16 %v3073
  %v3095 = vunpack.c.l.b16 %v3074
  %v3096 = vunpack.c.l.b16 %v3075
  %v3097 = vunpack.c.l.b16 %v3076
  %v3098 = vunpack.c.l.b16 %v3077
  %v3099 = vunpack.c.l.b16 %v3078
  %v3100 = vunpack.c.l.b16 %v3079
  %v3101 = vpack.c.b16 %v3094, %v3093
  %v3102 = vpack.c.b16 %v3096, %v3095
  %v3103 = vpack.c.b16 %v3098, %v3097
  %v3104 = vpack.c.b16 %v3100, %v3099
  %v3110 = vsel %vm196, %v3070, 0
  %3112 = vmatpush.bf16.msra.mxu0 0
  %3113 = vmatpush.bf16.msra.mxu0 0
  %3114 = vmatpush.bf16.msra.mxu0 0
  %3115 = vmatpush.bf16.msra.mxu0 0
  %3116 = vmatpush.bf16.msra.mxu0 %v3104
  %3117 = vmatpush.bf16.msra.mxu0 %v3103
  %3118 = vmatpush.bf16.msra.mxu0 %v3102
  %3119 = vmatpush.bf16.msra.mxu0 %v3101
  %3120 = vmatmul.bf16.gmra.mxu0 %v3110
  %v3121 = vpop.f32.mrf.mxu0
  %v3122 = vadd.f32 %v3083, %v3121
  %v3123 = vpop.f32.mrf.mxu0
  %v3124 = vadd.f32 %v3083, %v3123
  %3125 = vdwg.mxu0
  %s3126 = scalar_lea.vmem %s7, 1
  %v3127 = vld [vmem:[%s3126] sm:$0x1]
  %s3128 = scalar_lea.vmem %s8, 1
  %v3129 = vld [vmem:[%s3128] sm:$0x1]
  %v3130 = vadd.f32 %v2667, %v3122
  %v3131 = vadd.f32 %v2668, %v3124
  %v3132 = vsel %vm196, %v3130, 0.0
  %3133 = vadd.xlane.f32.xlu0 %v3132
  %v3134 = vpop.xlane.xlu0 %3133
  %v3135 = vsel %vm196, %v3131, 0.0
  %3136 = vadd.xlane.f32.xlu0 %v3135
  %v3137 = vpop.xlane.xlu0 %3136
  %v3138 = vmul.f32 %v3134, %v614
  %v3139 = vmul.f32 %v3137, %v614
  %v3140 = vsub.f32 %v3130, %v3138
  %v3141 = vsub.f32 %v3131, %v3139
  %v3142 = vmul.f32 %v3140, %v3140
  %v3143 = vmul.f32 %v3141, %v3141
  %v3144 = vsel %vm196, %v3142, 0.0
  %3145 = vadd.xlane.f32.xlu0 %v3144
  %v3146 = vpop.xlane.xlu0 %3145
  %v3147 = vsel %vm196, %v3143, 0.0
  %3148 = vadd.xlane.f32.xlu0 %v3147
  %v3149 = vpop.xlane.xlu0 %3148
  %v3150 = vmul.f32 %v3146, %v614
  %v3151 = vmul.f32 %v3149, %v614
  %v3152 = vadd.f32 %v3150, 1e-05
  %v3153 = vadd.f32 %v3151, 1e-05
  %v3154 = vrsqrt.pop %v3152
  %v3155 = vmul.f32 %v3154, %v3152
  %v3156 = vmul.f32 %v3155, %v3154
  %v3157 = vmul.f32 0.5, %v3156
  %v3158 = vsub.f32 1.5, %v3157
  %v3159 = vmul.f32 %v3154, %v3158
  %vm3160 = vweird.f32 %v3152
  %vm3161 = vweird.f32 %v3154
  %vm3162 = vmor %vm3160, %vm3161
  %v3163 = vsel %vm3162, %v3154, %v3159
  %v3164 = vrsqrt.pop %v3153
  %v3165 = vmul.f32 %v3164, %v3153
  %v3166 = vmul.f32 %v3165, %v3164
  %v3167 = vmul.f32 0.5, %v3166
  %v3168 = vsub.f32 1.5, %v3167
  %v3169 = vmul.f32 %v3164, %v3168
  %vm3170 = vweird.f32 %v3153
  %vm3171 = vweird.f32 %v3164
  %vm3172 = vmor %vm3170, %vm3171
  %v3173 = vsel %vm3172, %v3164, %v3169
  %v3174 = vmul.f32 %v3140, %v3163
  %v3175 = vmul.f32 %v3141, %v3173
  %v3177 = vperm.slane %v3127, 0
  %v3179 = vmul.f32 %v3174, %v3177
  %v3180 = vmul.f32 %v3175, %v3177
  %v3182 = vperm.slane %v3129, 0
  %v3184 = vadd.f32 %v3179, %v3182
  %v3185 = vadd.f32 %v3180, %v3182
  %v3186 = vpack.c.bf16 %v3185, %v3184
  %s3187 = scalar_lea.vmem %s9, 512
  %v3188 = vld [vmem:[%s3187] sm:$0xff]
  %v3189 = vld [vmem:[%s3187 + $0x8] sm:$0xff]
  %v3190 = vld [vmem:[%s3187 + $0x10] sm:$0xff]
  %v3191 = vld [vmem:[%s3187 + $0x18] sm:$0xff]
  %v3192 = vld [vmem:[%s3187 + $0x20] sm:$0xff]
  %v3193 = vld [vmem:[%s3187 + $0x28] sm:$0xff]
  %v3194 = vld [vmem:[%s3187 + $0x30] sm:$0xff]
  %v3195 = vld [vmem:[%s3187 + $0x38] sm:$0xff]
  %v3196 = vld [vmem:[%s3187 + $0x40] sm:$0xff]
  %v3197 = vld [vmem:[%s3187 + $0x48] sm:$0xff]
  %v3198 = vld [vmem:[%s3187 + $0x50] sm:$0xff]
  %v3199 = vld [vmem:[%s3187 + $0x58] sm:$0xff]
  %v3200 = vld [vmem:[%s3187 + $0x60] sm:$0xff]
  %v3201 = vld [vmem:[%s3187 + $0x68] sm:$0xff]
  %v3202 = vld [vmem:[%s3187 + $0x70] sm:$0xff]
  %v3203 = vld [vmem:[%s3187 + $0x78] sm:$0xff]
  %v3204 = vld [vmem:[%s3187 + $0x80] sm:$0xff]
  %v3205 = vld [vmem:[%s3187 + $0x88] sm:$0xff]
  %v3206 = vld [vmem:[%s3187 + $0x90] sm:$0xff]
  %v3207 = vld [vmem:[%s3187 + $0x98] sm:$0xff]
  %v3208 = vld [vmem:[%s3187 + $0xa0] sm:$0xff]
  %v3209 = vld [vmem:[%s3187 + $0xa8] sm:$0xff]
  %v3210 = vld [vmem:[%s3187 + $0xb0] sm:$0xff]
  %v3211 = vld [vmem:[%s3187 + $0xb8] sm:$0xff]
  %v3212 = vld [vmem:[%s3187 + $0xc0] sm:$0xff]
  %v3213 = vld [vmem:[%s3187 + $0xc8] sm:$0xff]
  %v3214 = vld [vmem:[%s3187 + $0xd0] sm:$0xff]
  %v3215 = vld [vmem:[%s3187 + $0xd8] sm:$0xff]
  %v3216 = vld [vmem:[%s3187 + $0xe0] sm:$0xff]
  %v3217 = vld [vmem:[%s3187 + $0xe8] sm:$0xff]
  %v3218 = vld [vmem:[%s3187 + $0xf0] sm:$0xff]
  %v3219 = vld [vmem:[%s3187 + $0xf8] sm:$0xff]
  %v3220 = vld [vmem:[%s3187 + $0x100] sm:$0xff]
  %v3221 = vld [vmem:[%s3187 + $0x108] sm:$0xff]
  %v3222 = vld [vmem:[%s3187 + $0x110] sm:$0xff]
  %v3223 = vld [vmem:[%s3187 + $0x118] sm:$0xff]
  %v3224 = vld [vmem:[%s3187 + $0x120] sm:$0xff]
  %v3225 = vld [vmem:[%s3187 + $0x128] sm:$0xff]
  %v3226 = vld [vmem:[%s3187 + $0x130] sm:$0xff]
  %v3227 = vld [vmem:[%s3187 + $0x138] sm:$0xff]
  %v3228 = vld [vmem:[%s3187 + $0x140] sm:$0xff]
  %v3229 = vld [vmem:[%s3187 + $0x148] sm:$0xff]
  %v3230 = vld [vmem:[%s3187 + $0x150] sm:$0xff]
  %v3231 = vld [vmem:[%s3187 + $0x158] sm:$0xff]
  %v3232 = vld [vmem:[%s3187 + $0x160] sm:$0xff]
  %v3233 = vld [vmem:[%s3187 + $0x168] sm:$0xff]
  %v3234 = vld [vmem:[%s3187 + $0x170] sm:$0xff]
  %v3235 = vld [vmem:[%s3187 + $0x178] sm:$0xff]
  %v3236 = vld [vmem:[%s3187 + $0x180] sm:$0xff]
  %v3237 = vld [vmem:[%s3187 + $0x188] sm:$0xff]
  %v3238 = vld [vmem:[%s3187 + $0x190] sm:$0xff]
  %v3239 = vld [vmem:[%s3187 + $0x198] sm:$0xff]
  %v3240 = vld [vmem:[%s3187 + $0x1a0] sm:$0xff]
  %v3241 = vld [vmem:[%s3187 + $0x1a8] sm:$0xff]
  %v3242 = vld [vmem:[%s3187 + $0x1b0] sm:$0xff]
  %v3243 = vld [vmem:[%s3187 + $0x1b8] sm:$0xff]
  %v3244 = vld [vmem:[%s3187 + $0x1c0] sm:$0xff]
  %v3245 = vld [vmem:[%s3187 + $0x1c8] sm:$0xff]
  %v3246 = vld [vmem:[%s3187 + $0x1d0] sm:$0xff]
  %v3247 = vld [vmem:[%s3187 + $0x1d8] sm:$0xff]
  %v3248 = vld [vmem:[%s3187 + $0x1e0] sm:$0xff]
  %v3249 = vld [vmem:[%s3187 + $0x1e8] sm:$0xff]
  %v3250 = vld [vmem:[%s3187 + $0x1f0] sm:$0xff]
  %v3251 = vld [vmem:[%s3187 + $0x1f8] sm:$0xff]
  %s3252 = scalar_lea.vmem %s10, 16
  %v3253 = vld [vmem:[%s3252] sm:$0xff]
  %v3254 = vld [vmem:[%s3252 + $0x8] sm:$0xff]
  %v3257 = vperm.slane %v3253, 0
  %v3258 = vperm.slane %v3253, 1
  %v3259 = vperm.slane %v3253, 2
  %v3260 = vperm.slane %v3253, 3
  %v3261 = vperm.slane %v3253, 4
  %v3262 = vperm.slane %v3253, 5
  %v3263 = vperm.slane %v3253, 6
  %v3264 = vperm.slane %v3253, 7
  %v3265 = vperm.slane %v3254, 0
  %v3266 = vperm.slane %v3254, 1
  %v3267 = vperm.slane %v3254, 2
  %v3268 = vperm.slane %v3254, 3
  %v3269 = vperm.slane %v3254, 4
  %v3270 = vperm.slane %v3254, 5
  %v3271 = vperm.slane %v3254, 6
  %v3272 = vperm.slane %v3254, 7
  %v3353 = vunpack.c.l.b16 %v3188
  %v3354 = vunpack.c.h.b16 %v3188
  %v3355 = vunpack.c.l.b16 %v3189
  %v3356 = vunpack.c.h.b16 %v3189
  %v3357 = vunpack.c.l.b16 %v3190
  %v3358 = vunpack.c.h.b16 %v3190
  %v3359 = vunpack.c.l.b16 %v3191
  %v3360 = vunpack.c.h.b16 %v3191
  %v3361 = vunpack.c.l.b16 %v3192
  %v3362 = vunpack.c.h.b16 %v3192
  %v3363 = vunpack.c.l.b16 %v3193
  %v3364 = vunpack.c.h.b16 %v3193
  %v3365 = vunpack.c.l.b16 %v3194
  %v3366 = vunpack.c.h.b16 %v3194
  %v3367 = vunpack.c.l.b16 %v3195
  %v3368 = vunpack.c.h.b16 %v3195
  %v3369 = vunpack.c.l.b16 %v3196
  %v3370 = vunpack.c.h.b16 %v3196
  %v3371 = vunpack.c.l.b16 %v3197
  %v3372 = vunpack.c.h.b16 %v3197
  %v3373 = vunpack.c.l.b16 %v3198
  %v3374 = vunpack.c.h.b16 %v3198
  %v3375 = vunpack.c.l.b16 %v3199
  %v3376 = vunpack.c.h.b16 %v3199
  %v3377 = vunpack.c.l.b16 %v3200
  %v3378 = vunpack.c.h.b16 %v3200
  %v3379 = vunpack.c.l.b16 %v3201
  %v3380 = vunpack.c.h.b16 %v3201
  %v3381 = vunpack.c.l.b16 %v3202
  %v3382 = vunpack.c.h.b16 %v3202
  %v3383 = vunpack.c.l.b16 %v3203
  %v3384 = vunpack.c.h.b16 %v3203
  %v3385 = vunpack.c.l.b16 %v3204
  %v3386 = vunpack.c.h.b16 %v3204
  %v3387 = vunpack.c.l.b16 %v3205
  %v3388 = vunpack.c.h.b16 %v3205
  %v3389 = vunpack.c.l.b16 %v3206
  %v3390 = vunpack.c.h.b16 %v3206
  %v3391 = vunpack.c.l.b16 %v3207
  %v3392 = vunpack.c.h.b16 %v3207
  %v3393 = vunpack.c.l.b16 %v3208
  %v3394 = vunpack.c.h.b16 %v3208
  %v3395 = vunpack.c.l.b16 %v3209
  %v3396 = vunpack.c.h.b16 %v3209
  %v3397 = vunpack.c.l.b16 %v3210
  %v3398 = vunpack.c.h.b16 %v3210
  %v3399 = vunpack.c.l.b16 %v3211
  %v3400 = vunpack.c.h.b16 %v3211
  %v3401 = vunpack.c.l.b16 %v3212
  %v3402 = vunpack.c.h.b16 %v3212
  %v3403 = vunpack.c.l.b16 %v3213
  %v3404 = vunpack.c.h.b16 %v3213
  %v3405 = vunpack.c.l.b16 %v3214
  %v3406 = vunpack.c.h.b16 %v3214
  %v3407 = vunpack.c.l.b16 %v3215
  %v3408 = vunpack.c.h.b16 %v3215
  %v3409 = vunpack.c.l.b16 %v3216
  %v3410 = vunpack.c.h.b16 %v3216
  %v3411 = vunpack.c.l.b16 %v3217
  %v3412 = vunpack.c.h.b16 %v3217
  %v3413 = vunpack.c.l.b16 %v3218
  %v3414 = vunpack.c.h.b16 %v3218
  %v3415 = vunpack.c.l.b16 %v3219
  %v3416 = vunpack.c.h.b16 %v3219
  %v3417 = vunpack.c.l.b16 %v3220
  %v3418 = vunpack.c.h.b16 %v3220
  %v3419 = vunpack.c.l.b16 %v3221
  %v3420 = vunpack.c.h.b16 %v3221
  %v3421 = vunpack.c.l.b16 %v3222
  %v3422 = vunpack.c.h.b16 %v3222
  %v3423 = vunpack.c.l.b16 %v3223
  %v3424 = vunpack.c.h.b16 %v3223
  %v3425 = vunpack.c.l.b16 %v3224
  %v3426 = vunpack.c.h.b16 %v3224
  %v3427 = vunpack.c.l.b16 %v3225
  %v3428 = vunpack.c.h.b16 %v3225
  %v3429 = vunpack.c.l.b16 %v3226
  %v3430 = vunpack.c.h.b16 %v3226
  %v3431 = vunpack.c.l.b16 %v3227
  %v3432 = vunpack.c.h.b16 %v3227
  %v3433 = vunpack.c.l.b16 %v3228
  %v3434 = vunpack.c.h.b16 %v3228
  %v3435 = vunpack.c.l.b16 %v3229
  %v3436 = vunpack.c.h.b16 %v3229
  %v3437 = vunpack.c.l.b16 %v3230
  %v3438 = vunpack.c.h.b16 %v3230
  %v3439 = vunpack.c.l.b16 %v3231
  %v3440 = vunpack.c.h.b16 %v3231
  %v3441 = vunpack.c.l.b16 %v3232
  %v3442 = vunpack.c.h.b16 %v3232
  %v3443 = vunpack.c.l.b16 %v3233
  %v3444 = vunpack.c.h.b16 %v3233
  %v3445 = vunpack.c.l.b16 %v3234
  %v3446 = vunpack.c.h.b16 %v3234
  %v3447 = vunpack.c.l.b16 %v3235
  %v3448 = vunpack.c.h.b16 %v3235
  %v3449 = vunpack.c.l.b16 %v3236
  %v3450 = vunpack.c.h.b16 %v3236
  %v3451 = vunpack.c.l.b16 %v3237
  %v3452 = vunpack.c.h.b16 %v3237
  %v3453 = vunpack.c.l.b16 %v3238
  %v3454 = vunpack.c.h.b16 %v3238
  %v3455 = vunpack.c.l.b16 %v3239
  %v3456 = vunpack.c.h.b16 %v3239
  %v3457 = vunpack.c.l.b16 %v3240
  %v3458 = vunpack.c.h.b16 %v3240
  %v3459 = vunpack.c.l.b16 %v3241
  %v3460 = vunpack.c.h.b16 %v3241
  %v3461 = vunpack.c.l.b16 %v3242
  %v3462 = vunpack.c.h.b16 %v3242
  %v3463 = vunpack.c.l.b16 %v3243
  %v3464 = vunpack.c.h.b16 %v3243
  %v3465 = vunpack.c.l.b16 %v3244
  %v3466 = vunpack.c.h.b16 %v3244
  %v3467 = vunpack.c.l.b16 %v3245
  %v3468 = vunpack.c.h.b16 %v3245
  %v3469 = vunpack.c.l.b16 %v3246
  %v3470 = vunpack.c.h.b16 %v3246
  %v3471 = vunpack.c.l.b16 %v3247
  %v3472 = vunpack.c.h.b16 %v3247
  %v3473 = vunpack.c.l.b16 %v3248
  %v3474 = vunpack.c.h.b16 %v3248
  %v3475 = vunpack.c.l.b16 %v3249
  %v3476 = vunpack.c.h.b16 %v3249
  %v3477 = vunpack.c.l.b16 %v3250
  %v3478 = vunpack.c.h.b16 %v3250
  %v3479 = vunpack.c.l.b16 %v3251
  %v3480 = vunpack.c.h.b16 %v3251
  %v3481 = vpack.c.b16 %v3369, %v3353
  %v3482 = vpack.c.b16 %v3370, %v3354
  %v3483 = vpack.c.b16 %v3371, %v3355
  %v3484 = vpack.c.b16 %v3372, %v3356
  %v3485 = vpack.c.b16 %v3373, %v3357
  %v3486 = vpack.c.b16 %v3374, %v3358
  %v3487 = vpack.c.b16 %v3375, %v3359
  %v3488 = vpack.c.b16 %v3376, %v3360
  %v3489 = vpack.c.b16 %v3377, %v3361
  %v3490 = vpack.c.b16 %v3378, %v3362
  %v3491 = vpack.c.b16 %v3379, %v3363
  %v3492 = vpack.c.b16 %v3380, %v3364
  %v3493 = vpack.c.b16 %v3381, %v3365
  %v3494 = vpack.c.b16 %v3382, %v3366
  %v3495 = vpack.c.b16 %v3383, %v3367
  %v3496 = vpack.c.b16 %v3384, %v3368
  %v3497 = vpack.c.b16 %v3401, %v3385
  %v3498 = vpack.c.b16 %v3402, %v3386
  %v3499 = vpack.c.b16 %v3403, %v3387
  %v3500 = vpack.c.b16 %v3404, %v3388
  %v3501 = vpack.c.b16 %v3405, %v3389
  %v3502 = vpack.c.b16 %v3406, %v3390
  %v3503 = vpack.c.b16 %v3407, %v3391
  %v3504 = vpack.c.b16 %v3408, %v3392
  %v3505 = vpack.c.b16 %v3409, %v3393
  %v3506 = vpack.c.b16 %v3410, %v3394
  %v3507 = vpack.c.b16 %v3411, %v3395
  %v3508 = vpack.c.b16 %v3412, %v3396
  %v3509 = vpack.c.b16 %v3413, %v3397
  %v3510 = vpack.c.b16 %v3414, %v3398
  %v3511 = vpack.c.b16 %v3415, %v3399
  %v3512 = vpack.c.b16 %v3416, %v3400
  %v3513 = vpack.c.b16 %v3433, %v3417
  %v3514 = vpack.c.b16 %v3434, %v3418
  %v3515 = vpack.c.b16 %v3435, %v3419
  %v3516 = vpack.c.b16 %v3436, %v3420
  %v3517 = vpack.c.b16 %v3437, %v3421
  %v3518 = vpack.c.b16 %v3438, %v3422
  %v3519 = vpack.c.b16 %v3439, %v3423
  %v3520 = vpack.c.b16 %v3440, %v3424
  %v3521 = vpack.c.b16 %v3441, %v3425
  %v3522 = vpack.c.b16 %v3442, %v3426
  %v3523 = vpack.c.b16 %v3443, %v3427
  %v3524 = vpack.c.b16 %v3444, %v3428
  %v3525 = vpack.c.b16 %v3445, %v3429
  %v3526 = vpack.c.b16 %v3446, %v3430
  %v3527 = vpack.c.b16 %v3447, %v3431
  %v3528 = vpack.c.b16 %v3448, %v3432
  %v3529 = vpack.c.b16 %v3465, %v3449
  %v3530 = vpack.c.b16 %v3466, %v3450
  %v3531 = vpack.c.b16 %v3467, %v3451
  %v3532 = vpack.c.b16 %v3468, %v3452
  %v3533 = vpack.c.b16 %v3469, %v3453
  %v3534 = vpack.c.b16 %v3470, %v3454
  %v3535 = vpack.c.b16 %v3471, %v3455
  %v3536 = vpack.c.b16 %v3472, %v3456
  %v3537 = vpack.c.b16 %v3473, %v3457
  %v3538 = vpack.c.b16 %v3474, %v3458
  %v3539 = vpack.c.b16 %v3475, %v3459
  %v3540 = vpack.c.b16 %v3476, %v3460
  %v3541 = vpack.c.b16 %v3477, %v3461
  %v3542 = vpack.c.b16 %v3478, %v3462
  %v3543 = vpack.c.b16 %v3479, %v3463
  %v3544 = vpack.c.b16 %v3480, %v3464
  %v3610 = vsel %vm196, %v3186, 0
  %3612 = vmatpush.bf16.msra.mxu0 0
  %3613 = vmatpush.bf16.msra.mxu0 0
  %3614 = vmatpush.bf16.msra.mxu0 0
  %3615 = vmatpush.bf16.msra.mxu0 0
  %3616 = vmatpush.bf16.msra.mxu0 %v3529
  %3617 = vmatpush.bf16.msra.mxu0 %v3513
  %3618 = vmatpush.bf16.msra.mxu0 %v3497
  %3619 = vmatpush.bf16.msra.mxu0 %v3481
  %3620 = vmatmul.bf16.gmra.mxu0 %v3610
  %v3621 = vpop.f32.mrf.mxu0
  %v3622 = vadd.f32 %v3257, %v3621
  %v3623 = vpop.f32.mrf.mxu0
  %v3624 = vadd.f32 %v3257, %v3623
  %3625 = vdwg.mxu0
  %3626 = vmatpush.bf16.msra.mxu0 0
  %3627 = vmatpush.bf16.msra.mxu0 0
  %3628 = vmatpush.bf16.msra.mxu0 0
  %3629 = vmatpush.bf16.msra.mxu0 0
  %3630 = vmatpush.bf16.msra.mxu0 %v3530
  %3631 = vmatpush.bf16.msra.mxu0 %v3514
  %3632 = vmatpush.bf16.msra.mxu0 %v3498
  %3633 = vmatpush.bf16.msra.mxu0 %v3482
  %3634 = vmatmul.bf16.gmra.mxu0 %v3610
  %v3635 = vpop.f32.mrf.mxu0
  %v3636 = vadd.f32 %v3258, %v3635
  %v3637 = vpop.f32.mrf.mxu0
  %v3638 = vadd.f32 %v3258, %v3637
  %3639 = vdwg.mxu0
  %3640 = vmatpush.bf16.msra.mxu0 0
  %3641 = vmatpush.bf16.msra.mxu0 0
  %3642 = vmatpush.bf16.msra.mxu0 0
  %3643 = vmatpush.bf16.msra.mxu0 0
  %3644 = vmatpush.bf16.msra.mxu0 %v3531
  %3645 = vmatpush.bf16.msra.mxu0 %v3515
  %3646 = vmatpush.bf16.msra.mxu0 %v3499
  %3647 = vmatpush.bf16.msra.mxu0 %v3483
  %3648 = vmatmul.bf16.gmra.mxu0 %v3610
  %v3649 = vpop.f32.mrf.mxu0
  %v3650 = vadd.f32 %v3259, %v3649
  %v3651 = vpop.f32.mrf.mxu0
  %v3652 = vadd.f32 %v3259, %v3651
  %3653 = vdwg.mxu0
  %3654 = vmatpush.bf16.msra.mxu0 0
  %3655 = vmatpush.bf16.msra.mxu0 0
  %3656 = vmatpush.bf16.msra.mxu0 0
  %3657 = vmatpush.bf16.msra.mxu0 0
  %3658 = vmatpush.bf16.msra.mxu0 %v3532
  %3659 = vmatpush.bf16.msra.mxu0 %v3516
  %3660 = vmatpush.bf16.msra.mxu0 %v3500
  %3661 = vmatpush.bf16.msra.mxu0 %v3484
  %3662 = vmatmul.bf16.gmra.mxu0 %v3610
  %v3663 = vpop.f32.mrf.mxu0
  %v3664 = vadd.f32 %v3260, %v3663
  %v3665 = vpop.f32.mrf.mxu0
  %v3666 = vadd.f32 %v3260, %v3665
  %3667 = vdwg.mxu0
  %3668 = vmatpush.bf16.msra.mxu0 0
  %3669 = vmatpush.bf16.msra.mxu0 0
  %3670 = vmatpush.bf16.msra.mxu0 0
  %3671 = vmatpush.bf16.msra.mxu0 0
  %3672 = vmatpush.bf16.msra.mxu0 %v3533
  %3673 = vmatpush.bf16.msra.mxu0 %v3517
  %3674 = vmatpush.bf16.msra.mxu0 %v3501
  %3675 = vmatpush.bf16.msra.mxu0 %v3485
  %3676 = vmatmul.bf16.gmra.mxu0 %v3610
  %v3677 = vpop.f32.mrf.mxu0
  %v3678 = vadd.f32 %v3261, %v3677
  %v3679 = vpop.f32.mrf.mxu0
  %v3680 = vadd.f32 %v3261, %v3679
  %3681 = vdwg.mxu0
  %3682 = vmatpush.bf16.msra.mxu0 0
  %3683 = vmatpush.bf16.msra.mxu0 0
  %3684 = vmatpush.bf16.msra.mxu0 0
  %3685 = vmatpush.bf16.msra.mxu0 0
  %3686 = vmatpush.bf16.msra.mxu0 %v3534
  %3687 = vmatpush.bf16.msra.mxu0 %v3518
  %3688 = vmatpush.bf16.msra.mxu0 %v3502
  %3689 = vmatpush.bf16.msra.mxu0 %v3486
  %3690 = vmatmul.bf16.gmra.mxu0 %v3610
  %v3691 = vpop.f32.mrf.mxu0
  %v3692 = vadd.f32 %v3262, %v3691
  %v3693 = vpop.f32.mrf.mxu0
  %v3694 = vadd.f32 %v3262, %v3693
  %3695 = vdwg.mxu0
  %3696 = vmatpush.bf16.msra.mxu0 0
  %3697 = vmatpush.bf16.msra.mxu0 0
  %3698 = vmatpush.bf16.msra.mxu0 0
  %3699 = vmatpush.bf16.msra.mxu0 0
  %3700 = vmatpush.bf16.msra.mxu0 %v3535
  %3701 = vmatpush.bf16.msra.mxu0 %v3519
  %3702 = vmatpush.bf16.msra.mxu0 %v3503
  %3703 = vmatpush.bf16.msra.mxu0 %v3487
  %3704 = vmatmul.bf16.gmra.mxu0 %v3610
  %v3705 = vpop.f32.mrf.mxu0
  %v3706 = vadd.f32 %v3263, %v3705
  %v3707 = vpop.f32.mrf.mxu0
  %v3708 = vadd.f32 %v3263, %v3707
  %3709 = vdwg.mxu0
  %3710 = vmatpush.bf16.msra.mxu0 0
  %3711 = vmatpush.bf16.msra.mxu0 0
  %3712 = vmatpush.bf16.msra.mxu0 0
  %3713 = vmatpush.bf16.msra.mxu0 0
  %3714 = vmatpush.bf16.msra.mxu0 %v3536
  %3715 = vmatpush.bf16.msra.mxu0 %v3520
  %3716 = vmatpush.bf16.msra.mxu0 %v3504
  %3717 = vmatpush.bf16.msra.mxu0 %v3488
  %3718 = vmatmul.bf16.gmra.mxu0 %v3610
  %v3719 = vpop.f32.mrf.mxu0
  %v3720 = vadd.f32 %v3264, %v3719
  %v3721 = vpop.f32.mrf.mxu0
  %v3722 = vadd.f32 %v3264, %v3721
  %3723 = vdwg.mxu0
  %3724 = vmatpush.bf16.msra.mxu0 0
  %3725 = vmatpush.bf16.msra.mxu0 0
  %3726 = vmatpush.bf16.msra.mxu0 0
  %3727 = vmatpush.bf16.msra.mxu0 0
  %3728 = vmatpush.bf16.msra.mxu0 %v3537
  %3729 = vmatpush.bf16.msra.mxu0 %v3521
  %3730 = vmatpush.bf16.msra.mxu0 %v3505
  %3731 = vmatpush.bf16.msra.mxu0 %v3489
  %3732 = vmatmul.bf16.gmra.mxu0 %v3610
  %v3733 = vpop.f32.mrf.mxu0
  %v3734 = vadd.f32 %v3265, %v3733
  %v3735 = vpop.f32.mrf.mxu0
  %v3736 = vadd.f32 %v3265, %v3735
  %3737 = vdwg.mxu0
  %3738 = vmatpush.bf16.msra.mxu0 0
  %3739 = vmatpush.bf16.msra.mxu0 0
  %3740 = vmatpush.bf16.msra.mxu0 0
  %3741 = vmatpush.bf16.msra.mxu0 0
  %3742 = vmatpush.bf16.msra.mxu0 %v3538
  %3743 = vmatpush.bf16.msra.mxu0 %v3522
  %3744 = vmatpush.bf16.msra.mxu0 %v3506
  %3745 = vmatpush.bf16.msra.mxu0 %v3490
  %3746 = vmatmul.bf16.gmra.mxu0 %v3610
  %v3747 = vpop.f32.mrf.mxu0
  %v3748 = vadd.f32 %v3266, %v3747
  %v3749 = vpop.f32.mrf.mxu0
  %v3750 = vadd.f32 %v3266, %v3749
  %3751 = vdwg.mxu0
  %3752 = vmatpush.bf16.msra.mxu0 0
  %3753 = vmatpush.bf16.msra.mxu0 0
  %3754 = vmatpush.bf16.msra.mxu0 0
  %3755 = vmatpush.bf16.msra.mxu0 0
  %3756 = vmatpush.bf16.msra.mxu0 %v3539
  %3757 = vmatpush.bf16.msra.mxu0 %v3523
  %3758 = vmatpush.bf16.msra.mxu0 %v3507
  %3759 = vmatpush.bf16.msra.mxu0 %v3491
  %3760 = vmatmul.bf16.gmra.mxu0 %v3610
  %v3761 = vpop.f32.mrf.mxu0
  %v3762 = vadd.f32 %v3267, %v3761
  %v3763 = vpop.f32.mrf.mxu0
  %v3764 = vadd.f32 %v3267, %v3763
  %3765 = vdwg.mxu0
  %3766 = vmatpush.bf16.msra.mxu0 0
  %3767 = vmatpush.bf16.msra.mxu0 0
  %3768 = vmatpush.bf16.msra.mxu0 0
  %3769 = vmatpush.bf16.msra.mxu0 0
  %3770 = vmatpush.bf16.msra.mxu0 %v3540
  %3771 = vmatpush.bf16.msra.mxu0 %v3524
  %3772 = vmatpush.bf16.msra.mxu0 %v3508
  %3773 = vmatpush.bf16.msra.mxu0 %v3492
  %3774 = vmatmul.bf16.gmra.mxu0 %v3610
  %v3775 = vpop.f32.mrf.mxu0
  %v3776 = vadd.f32 %v3268, %v3775
  %v3777 = vpop.f32.mrf.mxu0
  %v3778 = vadd.f32 %v3268, %v3777
  %3779 = vdwg.mxu0
  %3780 = vmatpush.bf16.msra.mxu0 0
  %3781 = vmatpush.bf16.msra.mxu0 0
  %3782 = vmatpush.bf16.msra.mxu0 0
  %3783 = vmatpush.bf16.msra.mxu0 0
  %3784 = vmatpush.bf16.msra.mxu0 %v3541
  %3785 = vmatpush.bf16.msra.mxu0 %v3525
  %3786 = vmatpush.bf16.msra.mxu0 %v3509
  %3787 = vmatpush.bf16.msra.mxu0 %v3493
  %3788 = vmatmul.bf16.gmra.mxu0 %v3610
  %v3789 = vpop.f32.mrf.mxu0
  %v3790 = vadd.f32 %v3269, %v3789
  %v3791 = vpop.f32.mrf.mxu0
  %v3792 = vadd.f32 %v3269, %v3791
  %3793 = vdwg.mxu0
  %3794 = vmatpush.bf16.msra.mxu0 0
  %3795 = vmatpush.bf16.msra.mxu0 0
  %3796 = vmatpush.bf16.msra.mxu0 0
  %3797 = vmatpush.bf16.msra.mxu0 0
  %3798 = vmatpush.bf16.msra.mxu0 %v3542
  %3799 = vmatpush.bf16.msra.mxu0 %v3526
  %3800 = vmatpush.bf16.msra.mxu0 %v3510
  %3801 = vmatpush.bf16.msra.mxu0 %v3494
  %3802 = vmatmul.bf16.gmra.mxu0 %v3610
  %v3803 = vpop.f32.mrf.mxu0
  %v3804 = vadd.f32 %v3270, %v3803
  %v3805 = vpop.f32.mrf.mxu0
  %v3806 = vadd.f32 %v3270, %v3805
  %3807 = vdwg.mxu0
  %3808 = vmatpush.bf16.msra.mxu0 0
  %3809 = vmatpush.bf16.msra.mxu0 0
  %3810 = vmatpush.bf16.msra.mxu0 0
  %3811 = vmatpush.bf16.msra.mxu0 0
  %3812 = vmatpush.bf16.msra.mxu0 %v3543
  %3813 = vmatpush.bf16.msra.mxu0 %v3527
  %3814 = vmatpush.bf16.msra.mxu0 %v3511
  %3815 = vmatpush.bf16.msra.mxu0 %v3495
  %3816 = vmatmul.bf16.gmra.mxu0 %v3610
  %v3817 = vpop.f32.mrf.mxu0
  %v3818 = vadd.f32 %v3271, %v3817
  %v3819 = vpop.f32.mrf.mxu0
  %v3820 = vadd.f32 %v3271, %v3819
  %3821 = vdwg.mxu0
  %3822 = vmatpush.bf16.msra.mxu0 0
  %3823 = vmatpush.bf16.msra.mxu0 0
  %3824 = vmatpush.bf16.msra.mxu0 0
  %3825 = vmatpush.bf16.msra.mxu0 0
  %3826 = vmatpush.bf16.msra.mxu0 %v3544
  %3827 = vmatpush.bf16.msra.mxu0 %v3528
  %3828 = vmatpush.bf16.msra.mxu0 %v3512
  %3829 = vmatpush.bf16.msra.mxu0 %v3496
  %3830 = vmatmul.bf16.gmra.mxu0 %v3610
  %v3831 = vpop.f32.mrf.mxu0
  %v3832 = vadd.f32 %v3272, %v3831
  %v3833 = vpop.f32.mrf.mxu0
  %v3834 = vadd.f32 %v3272, %v3833
  %3835 = vdwg.mxu0
  %v3836 = vmax.f32 %v3622, 0.0
  %v3837 = vmax.f32 %v3636, 0.0
  %v3838 = vmax.f32 %v3650, 0.0
  %v3839 = vmax.f32 %v3664, 0.0
  %v3840 = vmax.f32 %v3678, 0.0
  %v3841 = vmax.f32 %v3692, 0.0
  %v3842 = vmax.f32 %v3706, 0.0
  %v3843 = vmax.f32 %v3720, 0.0
  %v3844 = vmax.f32 %v3734, 0.0
  %v3845 = vmax.f32 %v3748, 0.0
  %v3846 = vmax.f32 %v3762, 0.0
  %v3847 = vmax.f32 %v3776, 0.0
  %v3848 = vmax.f32 %v3790, 0.0
  %v3849 = vmax.f32 %v3804, 0.0
  %v3850 = vmax.f32 %v3818, 0.0
  %v3851 = vmax.f32 %v3832, 0.0
  %v3852 = vmax.f32 %v3624, 0.0
  %v3853 = vmax.f32 %v3638, 0.0
  %v3854 = vmax.f32 %v3652, 0.0
  %v3855 = vmax.f32 %v3666, 0.0
  %v3856 = vmax.f32 %v3680, 0.0
  %v3857 = vmax.f32 %v3694, 0.0
  %v3858 = vmax.f32 %v3708, 0.0
  %v3859 = vmax.f32 %v3722, 0.0
  %v3860 = vmax.f32 %v3736, 0.0
  %v3861 = vmax.f32 %v3750, 0.0
  %v3862 = vmax.f32 %v3764, 0.0
  %v3863 = vmax.f32 %v3778, 0.0
  %v3864 = vmax.f32 %v3792, 0.0
  %v3865 = vmax.f32 %v3806, 0.0
  %v3866 = vmax.f32 %v3820, 0.0
  %v3867 = vmax.f32 %v3834, 0.0
  %v3868 = vpack.c.bf16 %v3852, %v3836
  %v3869 = vpack.c.bf16 %v3853, %v3837
  %v3870 = vpack.c.bf16 %v3854, %v3838
  %v3871 = vpack.c.bf16 %v3855, %v3839
  %v3872 = vpack.c.bf16 %v3856, %v3840
  %v3873 = vpack.c.bf16 %v3857, %v3841
  %v3874 = vpack.c.bf16 %v3858, %v3842
  %v3875 = vpack.c.bf16 %v3859, %v3843
  %v3876 = vpack.c.bf16 %v3860, %v3844
  %v3877 = vpack.c.bf16 %v3861, %v3845
  %v3878 = vpack.c.bf16 %v3862, %v3846
  %v3879 = vpack.c.bf16 %v3863, %v3847
  %v3880 = vpack.c.bf16 %v3864, %v3848
  %v3881 = vpack.c.bf16 %v3865, %v3849
  %v3882 = vpack.c.bf16 %v3866, %v3850
  %v3883 = vpack.c.bf16 %v3867, %v3851
  %s3884 = scalar_lea.vmem %s11, 1024
  %v3885 = vld [vmem:[%s3884] sm:$0xf]
  %v3886 = vld [vmem:[%s3884 + $0x4] sm:$0xf]
  %v3887 = vld [vmem:[%s3884 + $0x8] sm:$0xf]
  %v3888 = vld [vmem:[%s3884 + $0xc] sm:$0xf]
  %v3889 = vld [vmem:[%s3884 + $0x10] sm:$0xf]
  %v3890 = vld [vmem:[%s3884 + $0x14] sm:$0xf]
  %v3891 = vld [vmem:[%s3884 + $0x18] sm:$0xf]
  %v3892 = vld [vmem:[%s3884 + $0x1c] sm:$0xf]
  %v3893 = vld [vmem:[%s3884 + $0x20] sm:$0xf]
  %v3894 = vld [vmem:[%s3884 + $0x24] sm:$0xf]
  %v3895 = vld [vmem:[%s3884 + $0x28] sm:$0xf]
  %v3896 = vld [vmem:[%s3884 + $0x2c] sm:$0xf]
  %v3897 = vld [vmem:[%s3884 + $0x30] sm:$0xf]
  %v3898 = vld [vmem:[%s3884 + $0x34] sm:$0xf]
  %v3899 = vld [vmem:[%s3884 + $0x38] sm:$0xf]
  %v3900 = vld [vmem:[%s3884 + $0x3c] sm:$0xf]
  %v3901 = vld [vmem:[%s3884 + $0x40] sm:$0xf]
  %v3902 = vld [vmem:[%s3884 + $0x44] sm:$0xf]
  %v3903 = vld [vmem:[%s3884 + $0x48] sm:$0xf]
  %v3904 = vld [vmem:[%s3884 + $0x4c] sm:$0xf]
  %v3905 = vld [vmem:[%s3884 + $0x50] sm:$0xf]
  %v3906 = vld [vmem:[%s3884 + $0x54] sm:$0xf]
  %v3907 = vld [vmem:[%s3884 + $0x58] sm:$0xf]
  %v3908 = vld [vmem:[%s3884 + $0x5c] sm:$0xf]
  %v3909 = vld [vmem:[%s3884 + $0x60] sm:$0xf]
  %v3910 = vld [vmem:[%s3884 + $0x64] sm:$0xf]
  %v3911 = vld [vmem:[%s3884 + $0x68] sm:$0xf]
  %v3912 = vld [vmem:[%s3884 + $0x6c] sm:$0xf]
  %v3913 = vld [vmem:[%s3884 + $0x70] sm:$0xf]
  %v3914 = vld [vmem:[%s3884 + $0x74] sm:$0xf]
  %v3915 = vld [vmem:[%s3884 + $0x78] sm:$0xf]
  %v3916 = vld [vmem:[%s3884 + $0x7c] sm:$0xf]
  %v3917 = vld [vmem:[%s3884 + $0x80] sm:$0xf]
  %v3918 = vld [vmem:[%s3884 + $0x84] sm:$0xf]
  %v3919 = vld [vmem:[%s3884 + $0x88] sm:$0xf]
  %v3920 = vld [vmem:[%s3884 + $0x8c] sm:$0xf]
  %v3921 = vld [vmem:[%s3884 + $0x90] sm:$0xf]
  %v3922 = vld [vmem:[%s3884 + $0x94] sm:$0xf]
  %v3923 = vld [vmem:[%s3884 + $0x98] sm:$0xf]
  %v3924 = vld [vmem:[%s3884 + $0x9c] sm:$0xf]
  %v3925 = vld [vmem:[%s3884 + $0xa0] sm:$0xf]
  %v3926 = vld [vmem:[%s3884 + $0xa4] sm:$0xf]
  %v3927 = vld [vmem:[%s3884 + $0xa8] sm:$0xf]
  %v3928 = vld [vmem:[%s3884 + $0xac] sm:$0xf]
  %v3929 = vld [vmem:[%s3884 + $0xb0] sm:$0xf]
  %v3930 = vld [vmem:[%s3884 + $0xb4] sm:$0xf]
  %v3931 = vld [vmem:[%s3884 + $0xb8] sm:$0xf]
  %v3932 = vld [vmem:[%s3884 + $0xbc] sm:$0xf]
  %v3933 = vld [vmem:[%s3884 + $0xc0] sm:$0xf]
  %v3934 = vld [vmem:[%s3884 + $0xc4] sm:$0xf]
  %v3935 = vld [vmem:[%s3884 + $0xc8] sm:$0xf]
  %v3936 = vld [vmem:[%s3884 + $0xcc] sm:$0xf]
  %v3937 = vld [vmem:[%s3884 + $0xd0] sm:$0xf]
  %v3938 = vld [vmem:[%s3884 + $0xd4] sm:$0xf]
  %v3939 = vld [vmem:[%s3884 + $0xd8] sm:$0xf]
  %v3940 = vld [vmem:[%s3884 + $0xdc] sm:$0xf]
  %v3941 = vld [vmem:[%s3884 + $0xe0] sm:$0xf]
  %v3942 = vld [vmem:[%s3884 + $0xe4] sm:$0xf]
  %v3943 = vld [vmem:[%s3884 + $0xe8] sm:$0xf]
  %v3944 = vld [vmem:[%s3884 + $0xec] sm:$0xf]
  %v3945 = vld [vmem:[%s3884 + $0xf0] sm:$0xf]
  %v3946 = vld [vmem:[%s3884 + $0xf4] sm:$0xf]
  %v3947 = vld [vmem:[%s3884 + $0xf8] sm:$0xf]
  %v3948 = vld [vmem:[%s3884 + $0xfc] sm:$0xf]
  %v3949 = vld [vmem:[%s3884 + $0x100] sm:$0xf]
  %v3950 = vld [vmem:[%s3884 + $0x104] sm:$0xf]
  %v3951 = vld [vmem:[%s3884 + $0x108] sm:$0xf]
  %v3952 = vld [vmem:[%s3884 + $0x10c] sm:$0xf]
  %v3953 = vld [vmem:[%s3884 + $0x110] sm:$0xf]
  %v3954 = vld [vmem:[%s3884 + $0x114] sm:$0xf]
  %v3955 = vld [vmem:[%s3884 + $0x118] sm:$0xf]
  %v3956 = vld [vmem:[%s3884 + $0x11c] sm:$0xf]
  %v3957 = vld [vmem:[%s3884 + $0x120] sm:$0xf]
  %v3958 = vld [vmem:[%s3884 + $0x124] sm:$0xf]
  %v3959 = vld [vmem:[%s3884 + $0x128] sm:$0xf]
  %v3960 = vld [vmem:[%s3884 + $0x12c] sm:$0xf]
  %v3961 = vld [vmem:[%s3884 + $0x130] sm:$0xf]
  %v3962 = vld [vmem:[%s3884 + $0x134] sm:$0xf]
  %v3963 = vld [vmem:[%s3884 + $0x138] sm:$0xf]
  %v3964 = vld [vmem:[%s3884 + $0x13c] sm:$0xf]
  %v3965 = vld [vmem:[%s3884 + $0x140] sm:$0xf]
  %v3966 = vld [vmem:[%s3884 + $0x144] sm:$0xf]
  %v3967 = vld [vmem:[%s3884 + $0x148] sm:$0xf]
  %v3968 = vld [vmem:[%s3884 + $0x14c] sm:$0xf]
  %v3969 = vld [vmem:[%s3884 + $0x150] sm:$0xf]
  %v3970 = vld [vmem:[%s3884 + $0x154] sm:$0xf]
  %v3971 = vld [vmem:[%s3884 + $0x158] sm:$0xf]
  %v3972 = vld [vmem:[%s3884 + $0x15c] sm:$0xf]
  %v3973 = vld [vmem:[%s3884 + $0x160] sm:$0xf]
  %v3974 = vld [vmem:[%s3884 + $0x164] sm:$0xf]
  %v3975 = vld [vmem:[%s3884 + $0x168] sm:$0xf]
  %v3976 = vld [vmem:[%s3884 + $0x16c] sm:$0xf]
  %v3977 = vld [vmem:[%s3884 + $0x170] sm:$0xf]
  %v3978 = vld [vmem:[%s3884 + $0x174] sm:$0xf]
  %v3979 = vld [vmem:[%s3884 + $0x178] sm:$0xf]
  %v3980 = vld [vmem:[%s3884 + $0x17c] sm:$0xf]
  %v3981 = vld [vmem:[%s3884 + $0x180] sm:$0xf]
  %v3982 = vld [vmem:[%s3884 + $0x184] sm:$0xf]
  %v3983 = vld [vmem:[%s3884 + $0x188] sm:$0xf]
  %v3984 = vld [vmem:[%s3884 + $0x18c] sm:$0xf]
  %v3985 = vld [vmem:[%s3884 + $0x190] sm:$0xf]
  %v3986 = vld [vmem:[%s3884 + $0x194] sm:$0xf]
  %v3987 = vld [vmem:[%s3884 + $0x198] sm:$0xf]
  %v3988 = vld [vmem:[%s3884 + $0x19c] sm:$0xf]
  %v3989 = vld [vmem:[%s3884 + $0x1a0] sm:$0xf]
  %v3990 = vld [vmem:[%s3884 + $0x1a4] sm:$0xf]
  %v3991 = vld [vmem:[%s3884 + $0x1a8] sm:$0xf]
  %v3992 = vld [vmem:[%s3884 + $0x1ac] sm:$0xf]
  %v3993 = vld [vmem:[%s3884 + $0x1b0] sm:$0xf]
  %v3994 = vld [vmem:[%s3884 + $0x1b4] sm:$0xf]
  %v3995 = vld [vmem:[%s3884 + $0x1b8] sm:$0xf]
  %v3996 = vld [vmem:[%s3884 + $0x1bc] sm:$0xf]
  %v3997 = vld [vmem:[%s3884 + $0x1c0] sm:$0xf]
  %v3998 = vld [vmem:[%s3884 + $0x1c4] sm:$0xf]
  %v3999 = vld [vmem:[%s3884 + $0x1c8] sm:$0xf]
  %v4000 = vld [vmem:[%s3884 + $0x1cc] sm:$0xf]
  %v4001 = vld [vmem:[%s3884 + $0x1d0] sm:$0xf]
  %v4002 = vld [vmem:[%s3884 + $0x1d4] sm:$0xf]
  %v4003 = vld [vmem:[%s3884 + $0x1d8] sm:$0xf]
  %v4004 = vld [vmem:[%s3884 + $0x1dc] sm:$0xf]
  %v4005 = vld [vmem:[%s3884 + $0x1e0] sm:$0xf]
  %v4006 = vld [vmem:[%s3884 + $0x1e4] sm:$0xf]
  %v4007 = vld [vmem:[%s3884 + $0x1e8] sm:$0xf]
  %v4008 = vld [vmem:[%s3884 + $0x1ec] sm:$0xf]
  %v4009 = vld [vmem:[%s3884 + $0x1f0] sm:$0xf]
  %v4010 = vld [vmem:[%s3884 + $0x1f4] sm:$0xf]
  %v4011 = vld [vmem:[%s3884 + $0x1f8] sm:$0xf]
  %v4012 = vld [vmem:[%s3884 + $0x1fc] sm:$0xf]
  %v4013 = vld [vmem:[%s3884 + $0x200] sm:$0xf]
  %v4014 = vld [vmem:[%s3884 + $0x204] sm:$0xf]
  %v4015 = vld [vmem:[%s3884 + $0x208] sm:$0xf]
  %v4016 = vld [vmem:[%s3884 + $0x20c] sm:$0xf]
  %v4017 = vld [vmem:[%s3884 + $0x210] sm:$0xf]
  %v4018 = vld [vmem:[%s3884 + $0x214] sm:$0xf]
  %v4019 = vld [vmem:[%s3884 + $0x218] sm:$0xf]
  %v4020 = vld [vmem:[%s3884 + $0x21c] sm:$0xf]
  %v4021 = vld [vmem:[%s3884 + $0x220] sm:$0xf]
  %v4022 = vld [vmem:[%s3884 + $0x224] sm:$0xf]
  %v4023 = vld [vmem:[%s3884 + $0x228] sm:$0xf]
  %v4024 = vld [vmem:[%s3884 + $0x22c] sm:$0xf]
  %v4025 = vld [vmem:[%s3884 + $0x230] sm:$0xf]
  %v4026 = vld [vmem:[%s3884 + $0x234] sm:$0xf]
  %v4027 = vld [vmem:[%s3884 + $0x238] sm:$0xf]
  %v4028 = vld [vmem:[%s3884 + $0x23c] sm:$0xf]
  %v4029 = vld [vmem:[%s3884 + $0x240] sm:$0xf]
  %v4030 = vld [vmem:[%s3884 + $0x244] sm:$0xf]
  %v4031 = vld [vmem:[%s3884 + $0x248] sm:$0xf]
  %v4032 = vld [vmem:[%s3884 + $0x24c] sm:$0xf]
  %v4033 = vld [vmem:[%s3884 + $0x250] sm:$0xf]
  %v4034 = vld [vmem:[%s3884 + $0x254] sm:$0xf]
  %v4035 = vld [vmem:[%s3884 + $0x258] sm:$0xf]
  %v4036 = vld [vmem:[%s3884 + $0x25c] sm:$0xf]
  %v4037 = vld [vmem:[%s3884 + $0x260] sm:$0xf]
  %v4038 = vld [vmem:[%s3884 + $0x264] sm:$0xf]
  %v4039 = vld [vmem:[%s3884 + $0x268] sm:$0xf]
  %v4040 = vld [vmem:[%s3884 + $0x26c] sm:$0xf]
  %v4041 = vld [vmem:[%s3884 + $0x270] sm:$0xf]
  %v4042 = vld [vmem:[%s3884 + $0x274] sm:$0xf]
  %v4043 = vld [vmem:[%s3884 + $0x278] sm:$0xf]
  %v4044 = vld [vmem:[%s3884 + $0x27c] sm:$0xf]
  %v4045 = vld [vmem:[%s3884 + $0x280] sm:$0xf]
  %v4046 = vld [vmem:[%s3884 + $0x284] sm:$0xf]
  %v4047 = vld [vmem:[%s3884 + $0x288] sm:$0xf]
  %v4048 = vld [vmem:[%s3884 + $0x28c] sm:$0xf]
  %v4049 = vld [vmem:[%s3884 + $0x290] sm:$0xf]
  %v4050 = vld [vmem:[%s3884 + $0x294] sm:$0xf]
  %v4051 = vld [vmem:[%s3884 + $0x298] sm:$0xf]
  %v4052 = vld [vmem:[%s3884 + $0x29c] sm:$0xf]
  %v4053 = vld [vmem:[%s3884 + $0x2a0] sm:$0xf]
  %v4054 = vld [vmem:[%s3884 + $0x2a4] sm:$0xf]
  %v4055 = vld [vmem:[%s3884 + $0x2a8] sm:$0xf]
  %v4056 = vld [vmem:[%s3884 + $0x2ac] sm:$0xf]
  %v4057 = vld [vmem:[%s3884 + $0x2b0] sm:$0xf]
  %v4058 = vld [vmem:[%s3884 + $0x2b4] sm:$0xf]
  %v4059 = vld [vmem:[%s3884 + $0x2b8] sm:$0xf]
  %v4060 = vld [vmem:[%s3884 + $0x2bc] sm:$0xf]
  %v4061 = vld [vmem:[%s3884 + $0x2c0] sm:$0xf]
  %v4062 = vld [vmem:[%s3884 + $0x2c4] sm:$0xf]
  %v4063 = vld [vmem:[%s3884 + $0x2c8] sm:$0xf]
  %v4064 = vld [vmem:[%s3884 + $0x2cc] sm:$0xf]
  %v4065 = vld [vmem:[%s3884 + $0x2d0] sm:$0xf]
  %v4066 = vld [vmem:[%s3884 + $0x2d4] sm:$0xf]
  %v4067 = vld [vmem:[%s3884 + $0x2d8] sm:$0xf]
  %v4068 = vld [vmem:[%s3884 + $0x2dc] sm:$0xf]
  %v4069 = vld [vmem:[%s3884 + $0x2e0] sm:$0xf]
  %v4070 = vld [vmem:[%s3884 + $0x2e4] sm:$0xf]
  %v4071 = vld [vmem:[%s3884 + $0x2e8] sm:$0xf]
  %v4072 = vld [vmem:[%s3884 + $0x2ec] sm:$0xf]
  %v4073 = vld [vmem:[%s3884 + $0x2f0] sm:$0xf]
  %v4074 = vld [vmem:[%s3884 + $0x2f4] sm:$0xf]
  %v4075 = vld [vmem:[%s3884 + $0x2f8] sm:$0xf]
  %v4076 = vld [vmem:[%s3884 + $0x2fc] sm:$0xf]
  %v4077 = vld [vmem:[%s3884 + $0x300] sm:$0xf]
  %v4078 = vld [vmem:[%s3884 + $0x304] sm:$0xf]
  %v4079 = vld [vmem:[%s3884 + $0x308] sm:$0xf]
  %v4080 = vld [vmem:[%s3884 + $0x30c] sm:$0xf]
  %v4081 = vld [vmem:[%s3884 + $0x310] sm:$0xf]
  %v4082 = vld [vmem:[%s3884 + $0x314] sm:$0xf]
  %v4083 = vld [vmem:[%s3884 + $0x318] sm:$0xf]
  %v4084 = vld [vmem:[%s3884 + $0x31c] sm:$0xf]
  %v4085 = vld [vmem:[%s3884 + $0x320] sm:$0xf]
  %v4086 = vld [vmem:[%s3884 + $0x324] sm:$0xf]
  %v4087 = vld [vmem:[%s3884 + $0x328] sm:$0xf]
  %v4088 = vld [vmem:[%s3884 + $0x32c] sm:$0xf]
  %v4089 = vld [vmem:[%s3884 + $0x330] sm:$0xf]
  %v4090 = vld [vmem:[%s3884 + $0x334] sm:$0xf]
  %v4091 = vld [vmem:[%s3884 + $0x338] sm:$0xf]
  %v4092 = vld [vmem:[%s3884 + $0x33c] sm:$0xf]
  %v4093 = vld [vmem:[%s3884 + $0x340] sm:$0xf]
  %v4094 = vld [vmem:[%s3884 + $0x344] sm:$0xf]
  %v4095 = vld [vmem:[%s3884 + $0x348] sm:$0xf]
  %v4096 = vld [vmem:[%s3884 + $0x34c] sm:$0xf]
  %v4097 = vld [vmem:[%s3884 + $0x350] sm:$0xf]
  %v4098 = vld [vmem:[%s3884 + $0x354] sm:$0xf]
  %v4099 = vld [vmem:[%s3884 + $0x358] sm:$0xf]
  %v4100 = vld [vmem:[%s3884 + $0x35c] sm:$0xf]
  %v4101 = vld [vmem:[%s3884 + $0x360] sm:$0xf]
  %v4102 = vld [vmem:[%s3884 + $0x364] sm:$0xf]
  %v4103 = vld [vmem:[%s3884 + $0x368] sm:$0xf]
  %v4104 = vld [vmem:[%s3884 + $0x36c] sm:$0xf]
  %v4105 = vld [vmem:[%s3884 + $0x370] sm:$0xf]
  %v4106 = vld [vmem:[%s3884 + $0x374] sm:$0xf]
  %v4107 = vld [vmem:[%s3884 + $0x378] sm:$0xf]
  %v4108 = vld [vmem:[%s3884 + $0x37c] sm:$0xf]
  %v4109 = vld [vmem:[%s3884 + $0x380] sm:$0xf]
  %v4110 = vld [vmem:[%s3884 + $0x384] sm:$0xf]
  %v4111 = vld [vmem:[%s3884 + $0x388] sm:$0xf]
  %v4112 = vld [vmem:[%s3884 + $0x38c] sm:$0xf]
  %v4113 = vld [vmem:[%s3884 + $0x390] sm:$0xf]
  %v4114 = vld [vmem:[%s3884 + $0x394] sm:$0xf]
  %v4115 = vld [vmem:[%s3884 + $0x398] sm:$0xf]
  %v4116 = vld [vmem:[%s3884 + $0x39c] sm:$0xf]
  %v4117 = vld [vmem:[%s3884 + $0x3a0] sm:$0xf]
  %v4118 = vld [vmem:[%s3884 + $0x3a4] sm:$0xf]
  %v4119 = vld [vmem:[%s3884 + $0x3a8] sm:$0xf]
  %v4120 = vld [vmem:[%s3884 + $0x3ac] sm:$0xf]
  %v4121 = vld [vmem:[%s3884 + $0x3b0] sm:$0xf]
  %v4122 = vld [vmem:[%s3884 + $0x3b4] sm:$0xf]
  %v4123 = vld [vmem:[%s3884 + $0x3b8] sm:$0xf]
  %v4124 = vld [vmem:[%s3884 + $0x3bc] sm:$0xf]
  %v4125 = vld [vmem:[%s3884 + $0x3c0] sm:$0xf]
  %v4126 = vld [vmem:[%s3884 + $0x3c4] sm:$0xf]
  %v4127 = vld [vmem:[%s3884 + $0x3c8] sm:$0xf]
  %v4128 = vld [vmem:[%s3884 + $0x3cc] sm:$0xf]
  %v4129 = vld [vmem:[%s3884 + $0x3d0] sm:$0xf]
  %v4130 = vld [vmem:[%s3884 + $0x3d4] sm:$0xf]
  %v4131 = vld [vmem:[%s3884 + $0x3d8] sm:$0xf]
  %v4132 = vld [vmem:[%s3884 + $0x3dc] sm:$0xf]
  %v4133 = vld [vmem:[%s3884 + $0x3e0] sm:$0xf]
  %v4134 = vld [vmem:[%s3884 + $0x3e4] sm:$0xf]
  %v4135 = vld [vmem:[%s3884 + $0x3e8] sm:$0xf]
  %v4136 = vld [vmem:[%s3884 + $0x3ec] sm:$0xf]
  %v4137 = vld [vmem:[%s3884 + $0x3f0] sm:$0xf]
  %v4138 = vld [vmem:[%s3884 + $0x3f4] sm:$0xf]
  %v4139 = vld [vmem:[%s3884 + $0x3f8] sm:$0xf]
  %v4140 = vld [vmem:[%s3884 + $0x3fc] sm:$0xf]
  %s4141 = scalar_lea.vmem %s12, 1
  %v4142 = vld [vmem:[%s4141] sm:$0x1]
  %v4144 = vperm.slane %v4142, 0
  %v4402 = vunpack.c.l.b16 %v3885
  %v4403 = vunpack.c.l.b16 %v3886
  %v4404 = vunpack.c.l.b16 %v3887
  %v4405 = vunpack.c.l.b16 %v3888
  %v4406 = vunpack.c.l.b16 %v3889
  %v4407 = vunpack.c.l.b16 %v3890
  %v4408 = vunpack.c.l.b16 %v3891
  %v4409 = vunpack.c.l.b16 %v3892
  %v4410 = vunpack.c.l.b16 %v3893
  %v4411 = vunpack.c.l.b16 %v3894
  %v4412 = vunpack.c.l.b16 %v3895
  %v4413 = vunpack.c.l.b16 %v3896
  %v4414 = vunpack.c.l.b16 %v3897
  %v4415 = vunpack.c.l.b16 %v3898
  %v4416 = vunpack.c.l.b16 %v3899
  %v4417 = vunpack.c.l.b16 %v3900
  %v4418 = vunpack.c.l.b16 %v3901
  %v4419 = vunpack.c.l.b16 %v3902
  %v4420 = vunpack.c.l.b16 %v3903
  %v4421 = vunpack.c.l.b16 %v3904
  %v4422 = vunpack.c.l.b16 %v3905
  %v4423 = vunpack.c.l.b16 %v3906
  %v4424 = vunpack.c.l.b16 %v3907
  %v4425 = vunpack.c.l.b16 %v3908
  %v4426 = vunpack.c.l.b16 %v3909
  %v4427 = vunpack.c.l.b16 %v3910
  %v4428 = vunpack.c.l.b16 %v3911
  %v4429 = vunpack.c.l.b16 %v3912
  %v4430 = vunpack.c.l.b16 %v3913
  %v4431 = vunpack.c.l.b16 %v3914
  %v4432 = vunpack.c.l.b16 %v3915
  %v4433 = vunpack.c.l.b16 %v3916
  %v4434 = vunpack.c.l.b16 %v3917
  %v4435 = vunpack.c.l.b16 %v3918
  %v4436 = vunpack.c.l.b16 %v3919
  %v4437 = vunpack.c.l.b16 %v3920
  %v4438 = vunpack.c.l.b16 %v3921
  %v4439 = vunpack.c.l.b16 %v3922
  %v4440 = vunpack.c.l.b16 %v3923
  %v4441 = vunpack.c.l.b16 %v3924
  %v4442 = vunpack.c.l.b16 %v3925
  %v4443 = vunpack.c.l.b16 %v3926
  %v4444 = vunpack.c.l.b16 %v3927
  %v4445 = vunpack.c.l.b16 %v3928
  %v4446 = vunpack.c.l.b16 %v3929
  %v4447 = vunpack.c.l.b16 %v3930
  %v4448 = vunpack.c.l.b16 %v3931
  %v4449 = vunpack.c.l.b16 %v3932
  %v4450 = vunpack.c.l.b16 %v3933
  %v4451 = vunpack.c.l.b16 %v3934
  %v4452 = vunpack.c.l.b16 %v3935
  %v4453 = vunpack.c.l.b16 %v3936
  %v4454 = vunpack.c.l.b16 %v3937
  %v4455 = vunpack.c.l.b16 %v3938
  %v4456 = vunpack.c.l.b16 %v3939
  %v4457 = vunpack.c.l.b16 %v3940
  %v4458 = vunpack.c.l.b16 %v3941
  %v4459 = vunpack.c.l.b16 %v3942
  %v4460 = vunpack.c.l.b16 %v3943
  %v4461 = vunpack.c.l.b16 %v3944
  %v4462 = vunpack.c.l.b16 %v3945
  %v4463 = vunpack.c.l.b16 %v3946
  %v4464 = vunpack.c.l.b16 %v3947
  %v4465 = vunpack.c.l.b16 %v3948
  %v4466 = vunpack.c.l.b16 %v3949
  %v4467 = vunpack.c.l.b16 %v3950
  %v4468 = vunpack.c.l.b16 %v3951
  %v4469 = vunpack.c.l.b16 %v3952
  %v4470 = vunpack.c.l.b16 %v3953
  %v4471 = vunpack.c.l.b16 %v3954
  %v4472 = vunpack.c.l.b16 %v3955
  %v4473 = vunpack.c.l.b16 %v3956
  %v4474 = vunpack.c.l.b16 %v3957
  %v4475 = vunpack.c.l.b16 %v3958
  %v4476 = vunpack.c.l.b16 %v3959
  %v4477 = vunpack.c.l.b16 %v3960
  %v4478 = vunpack.c.l.b16 %v3961
  %v4479 = vunpack.c.l.b16 %v3962
  %v4480 = vunpack.c.l.b16 %v3963
  %v4481 = vunpack.c.l.b16 %v3964
  %v4482 = vunpack.c.l.b16 %v3965
  %v4483 = vunpack.c.l.b16 %v3966
  %v4484 = vunpack.c.l.b16 %v3967
  %v4485 = vunpack.c.l.b16 %v3968
  %v4486 = vunpack.c.l.b16 %v3969
  %v4487 = vunpack.c.l.b16 %v3970
  %v4488 = vunpack.c.l.b16 %v3971
  %v4489 = vunpack.c.l.b16 %v3972
  %v4490 = vunpack.c.l.b16 %v3973
  %v4491 = vunpack.c.l.b16 %v3974
  %v4492 = vunpack.c.l.b16 %v3975
  %v4493 = vunpack.c.l.b16 %v3976
  %v4494 = vunpack.c.l.b16 %v3977
  %v4495 = vunpack.c.l.b16 %v3978
  %v4496 = vunpack.c.l.b16 %v3979
  %v4497 = vunpack.c.l.b16 %v3980
  %v4498 = vunpack.c.l.b16 %v3981
  %v4499 = vunpack.c.l.b16 %v3982
  %v4500 = vunpack.c.l.b16 %v3983
  %v4501 = vunpack.c.l.b16 %v3984
  %v4502 = vunpack.c.l.b16 %v3985
  %v4503 = vunpack.c.l.b16 %v3986
  %v4504 = vunpack.c.l.b16 %v3987
  %v4505 = vunpack.c.l.b16 %v3988
  %v4506 = vunpack.c.l.b16 %v3989
  %v4507 = vunpack.c.l.b16 %v3990
  %v4508 = vunpack.c.l.b16 %v3991
  %v4509 = vunpack.c.l.b16 %v3992
  %v4510 = vunpack.c.l.b16 %v3993
  %v4511 = vunpack.c.l.b16 %v3994
  %v4512 = vunpack.c.l.b16 %v3995
  %v4513 = vunpack.c.l.b16 %v3996
  %v4514 = vunpack.c.l.b16 %v3997
  %v4515 = vunpack.c.l.b16 %v3998
  %v4516 = vunpack.c.l.b16 %v3999
  %v4517 = vunpack.c.l.b16 %v4000
  %v4518 = vunpack.c.l.b16 %v4001
  %v4519 = vunpack.c.l.b16 %v4002
  %v4520 = vunpack.c.l.b16 %v4003
  %v4521 = vunpack.c.l.b16 %v4004
  %v4522 = vunpack.c.l.b16 %v4005
  %v4523 = vunpack.c.l.b16 %v4006
  %v4524 = vunpack.c.l.b16 %v4007
  %v4525 = vunpack.c.l.b16 %v4008
  %v4526 = vunpack.c.l.b16 %v4009
  %v4527 = vunpack.c.l.b16 %v4010
  %v4528 = vunpack.c.l.b16 %v4011
  %v4529 = vunpack.c.l.b16 %v4012
  %v4530 = vunpack.c.l.b16 %v4013
  %v4531 = vunpack.c.l.b16 %v4014
  %v4532 = vunpack.c.l.b16 %v4015
  %v4533 = vunpack.c.l.b16 %v4016
  %v4534 = vunpack.c.l.b16 %v4017
  %v4535 = vunpack.c.l.b16 %v4018
  %v4536 = vunpack.c.l.b16 %v4019
  %v4537 = vunpack.c.l.b16 %v4020
  %v4538 = vunpack.c.l.b16 %v4021
  %v4539 = vunpack.c.l.b16 %v4022
  %v4540 = vunpack.c.l.b16 %v4023
  %v4541 = vunpack.c.l.b16 %v4024
  %v4542 = vunpack.c.l.b16 %v4025
  %v4543 = vunpack.c.l.b16 %v4026
  %v4544 = vunpack.c.l.b16 %v4027
  %v4545 = vunpack.c.l.b16 %v4028
  %v4546 = vunpack.c.l.b16 %v4029
  %v4547 = vunpack.c.l.b16 %v4030
  %v4548 = vunpack.c.l.b16 %v4031
  %v4549 = vunpack.c.l.b16 %v4032
  %v4550 = vunpack.c.l.b16 %v4033
  %v4551 = vunpack.c.l.b16 %v4034
  %v4552 = vunpack.c.l.b16 %v4035
  %v4553 = vunpack.c.l.b16 %v4036
  %v4554 = vunpack.c.l.b16 %v4037
  %v4555 = vunpack.c.l.b16 %v4038
  %v4556 = vunpack.c.l.b16 %v4039
  %v4557 = vunpack.c.l.b16 %v4040
  %v4558 = vunpack.c.l.b16 %v4041
  %v4559 = vunpack.c.l.b16 %v4042
  %v4560 = vunpack.c.l.b16 %v4043
  %v4561 = vunpack.c.l.b16 %v4044
  %v4562 = vunpack.c.l.b16 %v4045
  %v4563 = vunpack.c.l.b16 %v4046
  %v4564 = vunpack.c.l.b16 %v4047
  %v4565 = vunpack.c.l.b16 %v4048
  %v4566 = vunpack.c.l.b16 %v4049
  %v4567 = vunpack.c.l.b16 %v4050
  %v4568 = vunpack.c.l.b16 %v4051
  %v4569 = vunpack.c.l.b16 %v4052
  %v4570 = vunpack.c.l.b16 %v4053
  %v4571 = vunpack.c.l.b16 %v4054
  %v4572 = vunpack.c.l.b16 %v4055
  %v4573 = vunpack.c.l.b16 %v4056
  %v4574 = vunpack.c.l.b16 %v4057
  %v4575 = vunpack.c.l.b16 %v4058
  %v4576 = vunpack.c.l.b16 %v4059
  %v4577 = vunpack.c.l.b16 %v4060
  %v4578 = vunpack.c.l.b16 %v4061
  %v4579 = vunpack.c.l.b16 %v4062
  %v4580 = vunpack.c.l.b16 %v4063
  %v4581 = vunpack.c.l.b16 %v4064
  %v4582 = vunpack.c.l.b16 %v4065
  %v4583 = vunpack.c.l.b16 %v4066
  %v4584 = vunpack.c.l.b16 %v4067
  %v4585 = vunpack.c.l.b16 %v4068
  %v4586 = vunpack.c.l.b16 %v4069
  %v4587 = vunpack.c.l.b16 %v4070
  %v4588 = vunpack.c.l.b16 %v4071
  %v4589 = vunpack.c.l.b16 %v4072
  %v4590 = vunpack.c.l.b16 %v4073
  %v4591 = vunpack.c.l.b16 %v4074
  %v4592 = vunpack.c.l.b16 %v4075
  %v4593 = vunpack.c.l.b16 %v4076
  %v4594 = vunpack.c.l.b16 %v4077
  %v4595 = vunpack.c.l.b16 %v4078
  %v4596 = vunpack.c.l.b16 %v4079
  %v4597 = vunpack.c.l.b16 %v4080
  %v4598 = vunpack.c.l.b16 %v4081
  %v4599 = vunpack.c.l.b16 %v4082
  %v4600 = vunpack.c.l.b16 %v4083
  %v4601 = vunpack.c.l.b16 %v4084
  %v4602 = vunpack.c.l.b16 %v4085
  %v4603 = vunpack.c.l.b16 %v4086
  %v4604 = vunpack.c.l.b16 %v4087
  %v4605 = vunpack.c.l.b16 %v4088
  %v4606 = vunpack.c.l.b16 %v4089
  %v4607 = vunpack.c.l.b16 %v4090
  %v4608 = vunpack.c.l.b16 %v4091
  %v4609 = vunpack.c.l.b16 %v4092
  %v4610 = vunpack.c.l.b16 %v4093
  %v4611 = vunpack.c.l.b16 %v4094
  %v4612 = vunpack.c.l.b16 %v4095
  %v4613 = vunpack.c.l.b16 %v4096
  %v4614 = vunpack.c.l.b16 %v4097
  %v4615 = vunpack.c.l.b16 %v4098
  %v4616 = vunpack.c.l.b16 %v4099
  %v4617 = vunpack.c.l.b16 %v4100
  %v4618 = vunpack.c.l.b16 %v4101
  %v4619 = vunpack.c.l.b16 %v4102
  %v4620 = vunpack.c.l.b16 %v4103
  %v4621 = vunpack.c.l.b16 %v4104
  %v4622 = vunpack.c.l.b16 %v4105
  %v4623 = vunpack.c.l.b16 %v4106
  %v4624 = vunpack.c.l.b16 %v4107
  %v4625 = vunpack.c.l.b16 %v4108
  %v4626 = vunpack.c.l.b16 %v4109
  %v4627 = vunpack.c.l.b16 %v4110
  %v4628 = vunpack.c.l.b16 %v4111
  %v4629 = vunpack.c.l.b16 %v4112
  %v4630 = vunpack.c.l.b16 %v4113
  %v4631 = vunpack.c.l.b16 %v4114
  %v4632 = vunpack.c.l.b16 %v4115
  %v4633 = vunpack.c.l.b16 %v4116
  %v4634 = vunpack.c.l.b16 %v4117
  %v4635 = vunpack.c.l.b16 %v4118
  %v4636 = vunpack.c.l.b16 %v4119
  %v4637 = vunpack.c.l.b16 %v4120
  %v4638 = vunpack.c.l.b16 %v4121
  %v4639 = vunpack.c.l.b16 %v4122
  %v4640 = vunpack.c.l.b16 %v4123
  %v4641 = vunpack.c.l.b16 %v4124
  %v4642 = vunpack.c.l.b16 %v4125
  %v4643 = vunpack.c.l.b16 %v4126
  %v4644 = vunpack.c.l.b16 %v4127
  %v4645 = vunpack.c.l.b16 %v4128
  %v4646 = vunpack.c.l.b16 %v4129
  %v4647 = vunpack.c.l.b16 %v4130
  %v4648 = vunpack.c.l.b16 %v4131
  %v4649 = vunpack.c.l.b16 %v4132
  %v4650 = vunpack.c.l.b16 %v4133
  %v4651 = vunpack.c.l.b16 %v4134
  %v4652 = vunpack.c.l.b16 %v4135
  %v4653 = vunpack.c.l.b16 %v4136
  %v4654 = vunpack.c.l.b16 %v4137
  %v4655 = vunpack.c.l.b16 %v4138
  %v4656 = vunpack.c.l.b16 %v4139
  %v4657 = vunpack.c.l.b16 %v4140
  %v4658 = vpack.c.b16 %v4403, %v4402
  %v4659 = vpack.c.b16 %v4405, %v4404
  %v4660 = vpack.c.b16 %v4407, %v4406
  %v4661 = vpack.c.b16 %v4409, %v4408
  %v4662 = vpack.c.b16 %v4411, %v4410
  %v4663 = vpack.c.b16 %v4413, %v4412
  %v4664 = vpack.c.b16 %v4415, %v4414
  %v4665 = vpack.c.b16 %v4417, %v4416
  %v4666 = vpack.c.b16 %v4419, %v4418
  %v4667 = vpack.c.b16 %v4421, %v4420
  %v4668 = vpack.c.b16 %v4423, %v4422
  %v4669 = vpack.c.b16 %v4425, %v4424
  %v4670 = vpack.c.b16 %v4427, %v4426
  %v4671 = vpack.c.b16 %v4429, %v4428
  %v4672 = vpack.c.b16 %v4431, %v4430
  %v4673 = vpack.c.b16 %v4433, %v4432
  %v4674 = vpack.c.b16 %v4435, %v4434
  %v4675 = vpack.c.b16 %v4437, %v4436
  %v4676 = vpack.c.b16 %v4439, %v4438
  %v4677 = vpack.c.b16 %v4441, %v4440
  %v4678 = vpack.c.b16 %v4443, %v4442
  %v4679 = vpack.c.b16 %v4445, %v4444
  %v4680 = vpack.c.b16 %v4447, %v4446
  %v4681 = vpack.c.b16 %v4449, %v4448
  %v4682 = vpack.c.b16 %v4451, %v4450
  %v4683 = vpack.c.b16 %v4453, %v4452
  %v4684 = vpack.c.b16 %v4455, %v4454
  %v4685 = vpack.c.b16 %v4457, %v4456
  %v4686 = vpack.c.b16 %v4459, %v4458
  %v4687 = vpack.c.b16 %v4461, %v4460
  %v4688 = vpack.c.b16 %v4463, %v4462
  %v4689 = vpack.c.b16 %v4465, %v4464
  %v4690 = vpack.c.b16 %v4467, %v4466
  %v4691 = vpack.c.b16 %v4469, %v4468
  %v4692 = vpack.c.b16 %v4471, %v4470
  %v4693 = vpack.c.b16 %v4473, %v4472
  %v4694 = vpack.c.b16 %v4475, %v4474
  %v4695 = vpack.c.b16 %v4477, %v4476
  %v4696 = vpack.c.b16 %v4479, %v4478
  %v4697 = vpack.c.b16 %v4481, %v4480
  %v4698 = vpack.c.b16 %v4483, %v4482
  %v4699 = vpack.c.b16 %v4485, %v4484
  %v4700 = vpack.c.b16 %v4487, %v4486
  %v4701 = vpack.c.b16 %v4489, %v4488
  %v4702 = vpack.c.b16 %v4491, %v4490
  %v4703 = vpack.c.b16 %v4493, %v4492
  %v4704 = vpack.c.b16 %v4495, %v4494
  %v4705 = vpack.c.b16 %v4497, %v4496
  %v4706 = vpack.c.b16 %v4499, %v4498
  %v4707 = vpack.c.b16 %v4501, %v4500
  %v4708 = vpack.c.b16 %v4503, %v4502
  %v4709 = vpack.c.b16 %v4505, %v4504
  %v4710 = vpack.c.b16 %v4507, %v4506
  %v4711 = vpack.c.b16 %v4509, %v4508
  %v4712 = vpack.c.b16 %v4511, %v4510
  %v4713 = vpack.c.b16 %v4513, %v4512
  %v4714 = vpack.c.b16 %v4515, %v4514
  %v4715 = vpack.c.b16 %v4517, %v4516
  %v4716 = vpack.c.b16 %v4519, %v4518
  %v4717 = vpack.c.b16 %v4521, %v4520
  %v4718 = vpack.c.b16 %v4523, %v4522
  %v4719 = vpack.c.b16 %v4525, %v4524
  %v4720 = vpack.c.b16 %v4527, %v4526
  %v4721 = vpack.c.b16 %v4529, %v4528
  %v4722 = vpack.c.b16 %v4531, %v4530
  %v4723 = vpack.c.b16 %v4533, %v4532
  %v4724 = vpack.c.b16 %v4535, %v4534
  %v4725 = vpack.c.b16 %v4537, %v4536
  %v4726 = vpack.c.b16 %v4539, %v4538
  %v4727 = vpack.c.b16 %v4541, %v4540
  %v4728 = vpack.c.b16 %v4543, %v4542
  %v4729 = vpack.c.b16 %v4545, %v4544
  %v4730 = vpack.c.b16 %v4547, %v4546
  %v4731 = vpack.c.b16 %v4549, %v4548
  %v4732 = vpack.c.b16 %v4551, %v4550
  %v4733 = vpack.c.b16 %v4553, %v4552
  %v4734 = vpack.c.b16 %v4555, %v4554
  %v4735 = vpack.c.b16 %v4557, %v4556
  %v4736 = vpack.c.b16 %v4559, %v4558
  %v4737 = vpack.c.b16 %v4561, %v4560
  %v4738 = vpack.c.b16 %v4563, %v4562
  %v4739 = vpack.c.b16 %v4565, %v4564
  %v4740 = vpack.c.b16 %v4567, %v4566
  %v4741 = vpack.c.b16 %v4569, %v4568
  %v4742 = vpack.c.b16 %v4571, %v4570
  %v4743 = vpack.c.b16 %v4573, %v4572
  %v4744 = vpack.c.b16 %v4575, %v4574
  %v4745 = vpack.c.b16 %v4577, %v4576
  %v4746 = vpack.c.b16 %v4579, %v4578
  %v4747 = vpack.c.b16 %v4581, %v4580
  %v4748 = vpack.c.b16 %v4583, %v4582
  %v4749 = vpack.c.b16 %v4585, %v4584
  %v4750 = vpack.c.b16 %v4587, %v4586
  %v4751 = vpack.c.b16 %v4589, %v4588
  %v4752 = vpack.c.b16 %v4591, %v4590
  %v4753 = vpack.c.b16 %v4593, %v4592
  %v4754 = vpack.c.b16 %v4595, %v4594
  %v4755 = vpack.c.b16 %v4597, %v4596
  %v4756 = vpack.c.b16 %v4599, %v4598
  %v4757 = vpack.c.b16 %v4601, %v4600
  %v4758 = vpack.c.b16 %v4603, %v4602
  %v4759 = vpack.c.b16 %v4605, %v4604
  %v4760 = vpack.c.b16 %v4607, %v4606
  %v4761 = vpack.c.b16 %v4609, %v4608
  %v4762 = vpack.c.b16 %v4611, %v4610
  %v4763 = vpack.c.b16 %v4613, %v4612
  %v4764 = vpack.c.b16 %v4615, %v4614
  %v4765 = vpack.c.b16 %v4617, %v4616
  %v4766 = vpack.c.b16 %v4619, %v4618
  %v4767 = vpack.c.b16 %v4621, %v4620
  %v4768 = vpack.c.b16 %v4623, %v4622
  %v4769 = vpack.c.b16 %v4625, %v4624
  %v4770 = vpack.c.b16 %v4627, %v4626
  %v4771 = vpack.c.b16 %v4629, %v4628
  %v4772 = vpack.c.b16 %v4631, %v4630
  %v4773 = vpack.c.b16 %v4633, %v4632
  %v4774 = vpack.c.b16 %v4635, %v4634
  %v4775 = vpack.c.b16 %v4637, %v4636
  %v4776 = vpack.c.b16 %v4639, %v4638
  %v4777 = vpack.c.b16 %v4641, %v4640
  %v4778 = vpack.c.b16 %v4643, %v4642
  %v4779 = vpack.c.b16 %v4645, %v4644
  %v4780 = vpack.c.b16 %v4647, %v4646
  %v4781 = vpack.c.b16 %v4649, %v4648
  %v4782 = vpack.c.b16 %v4651, %v4650
  %v4783 = vpack.c.b16 %v4653, %v4652
  %v4784 = vpack.c.b16 %v4655, %v4654
  %v4785 = vpack.c.b16 %v4657, %v4656
  %4914 = vmatpush.bf16.msra.mxu0 %v4665
  %4915 = vmatpush.bf16.msra.mxu0 %v4664
  %4916 = vmatpush.bf16.msra.mxu0 %v4663
  %4917 = vmatpush.bf16.msra.mxu0 %v4662
  %4918 = vmatpush.bf16.msra.mxu0 %v4661
  %4919 = vmatpush.bf16.msra.mxu0 %v4660
  %4920 = vmatpush.bf16.msra.mxu0 %v4659
  %4921 = vmatpush.bf16.msra.mxu0 %v4658
  %4922 = vmatmul.bf16.gmra.mxu0 %v3868
  %v4923 = vpop.f32.mrf.mxu0
  %v4924 = vadd.f32 %v4144, %v4923
  %v4925 = vpop.f32.mrf.mxu0
  %v4926 = vadd.f32 %v4144, %v4925
  %4927 = vdwg.mxu0
  %4928 = vmatpush.bf16.msra.mxu0 %v4673
  %4929 = vmatpush.bf16.msra.mxu0 %v4672
  %4930 = vmatpush.bf16.msra.mxu0 %v4671
  %4931 = vmatpush.bf16.msra.mxu0 %v4670
  %4932 = vmatpush.bf16.msra.mxu0 %v4669
  %4933 = vmatpush.bf16.msra.mxu0 %v4668
  %4934 = vmatpush.bf16.msra.mxu0 %v4667
  %4935 = vmatpush.bf16.msra.mxu0 %v4666
  %4936 = vmatmul.bf16.gmra.mxu0 %v3869
  %v4937 = vpop.f32.mrf.mxu0
  %v4938 = vadd.f32 %v4924, %v4937
  %v4939 = vpop.f32.mrf.mxu0
  %v4940 = vadd.f32 %v4926, %v4939
  %4941 = vdwg.mxu0
  %4942 = vmatpush.bf16.msra.mxu0 %v4681
  %4943 = vmatpush.bf16.msra.mxu0 %v4680
  %4944 = vmatpush.bf16.msra.mxu0 %v4679
  %4945 = vmatpush.bf16.msra.mxu0 %v4678
  %4946 = vmatpush.bf16.msra.mxu0 %v4677
  %4947 = vmatpush.bf16.msra.mxu0 %v4676
  %4948 = vmatpush.bf16.msra.mxu0 %v4675
  %4949 = vmatpush.bf16.msra.mxu0 %v4674
  %4950 = vmatmul.bf16.gmra.mxu0 %v3870
  %v4951 = vpop.f32.mrf.mxu0
  %v4952 = vadd.f32 %v4938, %v4951
  %v4953 = vpop.f32.mrf.mxu0
  %v4954 = vadd.f32 %v4940, %v4953
  %4955 = vdwg.mxu0
  %4956 = vmatpush.bf16.msra.mxu0 %v4689
  %4957 = vmatpush.bf16.msra.mxu0 %v4688
  %4958 = vmatpush.bf16.msra.mxu0 %v4687
  %4959 = vmatpush.bf16.msra.mxu0 %v4686
  %4960 = vmatpush.bf16.msra.mxu0 %v4685
  %4961 = vmatpush.bf16.msra.mxu0 %v4684
  %4962 = vmatpush.bf16.msra.mxu0 %v4683
  %4963 = vmatpush.bf16.msra.mxu0 %v4682
  %4964 = vmatmul.bf16.gmra.mxu0 %v3871
  %v4965 = vpop.f32.mrf.mxu0
  %v4966 = vadd.f32 %v4952, %v4965
  %v4967 = vpop.f32.mrf.mxu0
  %v4968 = vadd.f32 %v4954, %v4967
  %4969 = vdwg.mxu0
  %4970 = vmatpush.bf16.msra.mxu0 %v4697
  %4971 = vmatpush.bf16.msra.mxu0 %v4696
  %4972 = vmatpush.bf16.msra.mxu0 %v4695
  %4973 = vmatpush.bf16.msra.mxu0 %v4694
  %4974 = vmatpush.bf16.msra.mxu0 %v4693
  %4975 = vmatpush.bf16.msra.mxu0 %v4692
  %4976 = vmatpush.bf16.msra.mxu0 %v4691
  %4977 = vmatpush.bf16.msra.mxu0 %v4690
  %4978 = vmatmul.bf16.gmra.mxu0 %v3872
  %v4979 = vpop.f32.mrf.mxu0
  %v4980 = vadd.f32 %v4966, %v4979
  %v4981 = vpop.f32.mrf.mxu0
  %v4982 = vadd.f32 %v4968, %v4981
  %4983 = vdwg.mxu0
  %4984 = vmatpush.bf16.msra.mxu0 %v4705
  %4985 = vmatpush.bf16.msra.mxu0 %v4704
  %4986 = vmatpush.bf16.msra.mxu0 %v4703
  %4987 = vmatpush.bf16.msra.mxu0 %v4702
  %4988 = vmatpush.bf16.msra.mxu0 %v4701
  %4989 = vmatpush.bf16.msra.mxu0 %v4700
  %4990 = vmatpush.bf16.msra.mxu0 %v4699
  %4991 = vmatpush.bf16.msra.mxu0 %v4698
  %4992 = vmatmul.bf16.gmra.mxu0 %v3873
  %v4993 = vpop.f32.mrf.mxu0
  %v4994 = vadd.f32 %v4980, %v4993
  %v4995 = vpop.f32.mrf.mxu0
  %v4996 = vadd.f32 %v4982, %v4995
  %4997 = vdwg.mxu0
  %4998 = vmatpush.bf16.msra.mxu0 %v4713
  %4999 = vmatpush.bf16.msra.mxu0 %v4712
  %5000 = vmatpush.bf16.msra.mxu0 %v4711
  %5001 = vmatpush.bf16.msra.mxu0 %v4710
  %5002 = vmatpush.bf16.msra.mxu0 %v4709
  %5003 = vmatpush.bf16.msra.mxu0 %v4708
  %5004 = vmatpush.bf16.msra.mxu0 %v4707
  %5005 = vmatpush.bf16.msra.mxu0 %v4706
  %5006 = vmatmul.bf16.gmra.mxu0 %v3874
  %v5007 = vpop.f32.mrf.mxu0
  %v5008 = vadd.f32 %v4994, %v5007
  %v5009 = vpop.f32.mrf.mxu0
  %v5010 = vadd.f32 %v4996, %v5009
  %5011 = vdwg.mxu0
  %5012 = vmatpush.bf16.msra.mxu0 %v4721
  %5013 = vmatpush.bf16.msra.mxu0 %v4720
  %5014 = vmatpush.bf16.msra.mxu0 %v4719
  %5015 = vmatpush.bf16.msra.mxu0 %v4718
  %5016 = vmatpush.bf16.msra.mxu0 %v4717
  %5017 = vmatpush.bf16.msra.mxu0 %v4716
  %5018 = vmatpush.bf16.msra.mxu0 %v4715
  %5019 = vmatpush.bf16.msra.mxu0 %v4714
  %5020 = vmatmul.bf16.gmra.mxu0 %v3875
  %v5021 = vpop.f32.mrf.mxu0
  %v5022 = vadd.f32 %v5008, %v5021
  %v5023 = vpop.f32.mrf.mxu0
  %v5024 = vadd.f32 %v5010, %v5023
  %5025 = vdwg.mxu0
  %5026 = vmatpush.bf16.msra.mxu0 %v4729
  %5027 = vmatpush.bf16.msra.mxu0 %v4728
  %5028 = vmatpush.bf16.msra.mxu0 %v4727
  %5029 = vmatpush.bf16.msra.mxu0 %v4726
  %5030 = vmatpush.bf16.msra.mxu0 %v4725
  %5031 = vmatpush.bf16.msra.mxu0 %v4724
  %5032 = vmatpush.bf16.msra.mxu0 %v4723
  %5033 = vmatpush.bf16.msra.mxu0 %v4722
  %5034 = vmatmul.bf16.gmra.mxu0 %v3876
  %v5035 = vpop.f32.mrf.mxu0
  %v5036 = vadd.f32 %v5022, %v5035
  %v5037 = vpop.f32.mrf.mxu0
  %v5038 = vadd.f32 %v5024, %v5037
  %5039 = vdwg.mxu0
  %5040 = vmatpush.bf16.msra.mxu0 %v4737
  %5041 = vmatpush.bf16.msra.mxu0 %v4736
  %5042 = vmatpush.bf16.msra.mxu0 %v4735
  %5043 = vmatpush.bf16.msra.mxu0 %v4734
  %5044 = vmatpush.bf16.msra.mxu0 %v4733
  %5045 = vmatpush.bf16.msra.mxu0 %v4732
  %5046 = vmatpush.bf16.msra.mxu0 %v4731
  %5047 = vmatpush.bf16.msra.mxu0 %v4730
  %5048 = vmatmul.bf16.gmra.mxu0 %v3877
  %v5049 = vpop.f32.mrf.mxu0
  %v5050 = vadd.f32 %v5036, %v5049
  %v5051 = vpop.f32.mrf.mxu0
  %v5052 = vadd.f32 %v5038, %v5051
  %5053 = vdwg.mxu0
  %5054 = vmatpush.bf16.msra.mxu0 %v4745
  %5055 = vmatpush.bf16.msra.mxu0 %v4744
  %5056 = vmatpush.bf16.msra.mxu0 %v4743
  %5057 = vmatpush.bf16.msra.mxu0 %v4742
  %5058 = vmatpush.bf16.msra.mxu0 %v4741
  %5059 = vmatpush.bf16.msra.mxu0 %v4740
  %5060 = vmatpush.bf16.msra.mxu0 %v4739
  %5061 = vmatpush.bf16.msra.mxu0 %v4738
  %5062 = vmatmul.bf16.gmra.mxu0 %v3878
  %v5063 = vpop.f32.mrf.mxu0
  %v5064 = vadd.f32 %v5050, %v5063
  %v5065 = vpop.f32.mrf.mxu0
  %v5066 = vadd.f32 %v5052, %v5065
  %5067 = vdwg.mxu0
  %5068 = vmatpush.bf16.msra.mxu0 %v4753
  %5069 = vmatpush.bf16.msra.mxu0 %v4752
  %5070 = vmatpush.bf16.msra.mxu0 %v4751
  %5071 = vmatpush.bf16.msra.mxu0 %v4750
  %5072 = vmatpush.bf16.msra.mxu0 %v4749
  %5073 = vmatpush.bf16.msra.mxu0 %v4748
  %5074 = vmatpush.bf16.msra.mxu0 %v4747
  %5075 = vmatpush.bf16.msra.mxu0 %v4746
  %5076 = vmatmul.bf16.gmra.mxu0 %v3879
  %v5077 = vpop.f32.mrf.mxu0
  %v5078 = vadd.f32 %v5064, %v5077
  %v5079 = vpop.f32.mrf.mxu0
  %v5080 = vadd.f32 %v5066, %v5079
  %5081 = vdwg.mxu0
  %5082 = vmatpush.bf16.msra.mxu0 %v4761
  %5083 = vmatpush.bf16.msra.mxu0 %v4760
  %5084 = vmatpush.bf16.msra.mxu0 %v4759
  %5085 = vmatpush.bf16.msra.mxu0 %v4758
  %5086 = vmatpush.bf16.msra.mxu0 %v4757
  %5087 = vmatpush.bf16.msra.mxu0 %v4756
  %5088 = vmatpush.bf16.msra.mxu0 %v4755
  %5089 = vmatpush.bf16.msra.mxu0 %v4754
  %5090 = vmatmul.bf16.gmra.mxu0 %v3880
  %v5091 = vpop.f32.mrf.mxu0
  %v5092 = vadd.f32 %v5078, %v5091
  %v5093 = vpop.f32.mrf.mxu0
  %v5094 = vadd.f32 %v5080, %v5093
  %5095 = vdwg.mxu0
  %5096 = vmatpush.bf16.msra.mxu0 %v4769
  %5097 = vmatpush.bf16.msra.mxu0 %v4768
  %5098 = vmatpush.bf16.msra.mxu0 %v4767
  %5099 = vmatpush.bf16.msra.mxu0 %v4766
  %5100 = vmatpush.bf16.msra.mxu0 %v4765
  %5101 = vmatpush.bf16.msra.mxu0 %v4764
  %5102 = vmatpush.bf16.msra.mxu0 %v4763
  %5103 = vmatpush.bf16.msra.mxu0 %v4762
  %5104 = vmatmul.bf16.gmra.mxu0 %v3881
  %v5105 = vpop.f32.mrf.mxu0
  %v5106 = vadd.f32 %v5092, %v5105
  %v5107 = vpop.f32.mrf.mxu0
  %v5108 = vadd.f32 %v5094, %v5107
  %5109 = vdwg.mxu0
  %5110 = vmatpush.bf16.msra.mxu0 %v4777
  %5111 = vmatpush.bf16.msra.mxu0 %v4776
  %5112 = vmatpush.bf16.msra.mxu0 %v4775
  %5113 = vmatpush.bf16.msra.mxu0 %v4774
  %5114 = vmatpush.bf16.msra.mxu0 %v4773
  %5115 = vmatpush.bf16.msra.mxu0 %v4772
  %5116 = vmatpush.bf16.msra.mxu0 %v4771
  %5117 = vmatpush.bf16.msra.mxu0 %v4770
  %5118 = vmatmul.bf16.gmra.mxu0 %v3882
  %v5119 = vpop.f32.mrf.mxu0
  %v5120 = vadd.f32 %v5106, %v5119
  %v5121 = vpop.f32.mrf.mxu0
  %v5122 = vadd.f32 %v5108, %v5121
  %5123 = vdwg.mxu0
  %5124 = vmatpush.bf16.msra.mxu0 %v4785
  %5125 = vmatpush.bf16.msra.mxu0 %v4784
  %5126 = vmatpush.bf16.msra.mxu0 %v4783
  %5127 = vmatpush.bf16.msra.mxu0 %v4782
  %5128 = vmatpush.bf16.msra.mxu0 %v4781
  %5129 = vmatpush.bf16.msra.mxu0 %v4780
  %5130 = vmatpush.bf16.msra.mxu0 %v4779
  %5131 = vmatpush.bf16.msra.mxu0 %v4778
  %5132 = vmatmul.bf16.gmra.mxu0 %v3883
  %v5133 = vpop.f32.mrf.mxu0
  %v5134 = vadd.f32 %v5120, %v5133
  %v5135 = vpop.f32.mrf.mxu0
  %v5136 = vadd.f32 %v5122, %v5135
  %5137 = vdwg.mxu0
  %s5138 = scalar_lea.vmem %s13, 1
  %v5139 = vld [vmem:[%s5138] sm:$0x1]
  %s5140 = scalar_lea.vmem %s14, 1
  %v5141 = vld [vmem:[%s5140] sm:$0x1]
  %v5142 = vadd.f32 %v3184, %v5134
  %v5143 = vadd.f32 %v3185, %v5136
  %v5144 = vsel %vm196, %v5142, 0.0
  %5145 = vadd.xlane.f32.xlu0 %v5144
  %v5146 = vpop.xlane.xlu0 %5145
  %v5147 = vsel %vm196, %v5143, 0.0
  %5148 = vadd.xlane.f32.xlu0 %v5147
  %v5149 = vpop.xlane.xlu0 %5148
  %v5150 = vmul.f32 %v5146, %v614
  %v5151 = vmul.f32 %v5149, %v614
  %v5152 = vsub.f32 %v5142, %v5150
  %v5153 = vsub.f32 %v5143, %v5151
  %v5154 = vmul.f32 %v5152, %v5152
  %v5155 = vmul.f32 %v5153, %v5153
  %v5156 = vsel %vm196, %v5154, 0.0
  %5157 = vadd.xlane.f32.xlu0 %v5156
  %v5158 = vpop.xlane.xlu0 %5157
  %v5159 = vsel %vm196, %v5155, 0.0
  %5160 = vadd.xlane.f32.xlu0 %v5159
  %v5161 = vpop.xlane.xlu0 %5160
  %v5162 = vmul.f32 %v5158, %v614
  %v5163 = vmul.f32 %v5161, %v614
  %v5164 = vadd.f32 %v5162, 1e-05
  %v5165 = vadd.f32 %v5163, 1e-05
  %v5166 = vrsqrt.pop %v5164
  %v5167 = vmul.f32 %v5166, %v5164
  %v5168 = vmul.f32 %v5167, %v5166
  %v5169 = vmul.f32 0.5, %v5168
  %v5170 = vsub.f32 1.5, %v5169
  %v5171 = vmul.f32 %v5166, %v5170
  %vm5172 = vweird.f32 %v5164
  %vm5173 = vweird.f32 %v5166
  %vm5174 = vmor %vm5172, %vm5173
  %v5175 = vsel %vm5174, %v5166, %v5171
  %v5176 = vrsqrt.pop %v5165
  %v5177 = vmul.f32 %v5176, %v5165
  %v5178 = vmul.f32 %v5177, %v5176
  %v5179 = vmul.f32 0.5, %v5178
  %v5180 = vsub.f32 1.5, %v5179
  %v5181 = vmul.f32 %v5176, %v5180
  %vm5182 = vweird.f32 %v5165
  %vm5183 = vweird.f32 %v5176
  %vm5184 = vmor %vm5182, %vm5183
  %v5185 = vsel %vm5184, %v5176, %v5181
  %v5186 = vmul.f32 %v5152, %v5175
  %v5187 = vmul.f32 %v5153, %v5185
  %v5189 = vperm.slane %v5139, 0
  %v5191 = vmul.f32 %v5186, %v5189
  %v5192 = vmul.f32 %v5187, %v5189
  %v5194 = vperm.slane %v5141, 0
  %v5196 = vadd.f32 %v5191, %v5194
  %v5197 = vadd.f32 %v5192, %v5194
  %v5198 = vpack.c.bf16 %v5197, %v5196
  %v5199 = vld [vmem:[%s15] sm:$0xf]
  %v5200 = vld [vmem:[%s15 + $0x4] sm:$0xf]
  %v5201 = vld [vmem:[%s15 + $0x8] sm:$0xf]
  %v5202 = vld [vmem:[%s15 + $0xc] sm:$0xf]
  %v5203 = vld [vmem:[%s15 + $0x10] sm:$0xf]
  %v5204 = vld [vmem:[%s15 + $0x14] sm:$0xf]
  %v5205 = vld [vmem:[%s15 + $0x18] sm:$0xf]
  %v5206 = vld [vmem:[%s15 + $0x1c] sm:$0xf]
  %v5207 = vld [vmem:[%s16] sm:$0x1]
  %v5209 = vperm.slane %v5207, 0
  %v5219 = vunpack.c.l.b16 %v5199
  %v5220 = vunpack.c.l.b16 %v5200
  %v5221 = vunpack.c.l.b16 %v5201
  %v5222 = vunpack.c.l.b16 %v5202
  %v5223 = vunpack.c.l.b16 %v5203
  %v5224 = vunpack.c.l.b16 %v5204
  %v5225 = vunpack.c.l.b16 %v5205
  %v5226 = vunpack.c.l.b16 %v5206
  %v5227 = vpack.c.b16 %v5220, %v5219
  %v5228 = vpack.c.b16 %v5222, %v5221
  %v5229 = vpack.c.b16 %v5224, %v5223
  %v5230 = vpack.c.b16 %v5226, %v5225
  %v5236 = vsel %vm196, %v5198, 0
  %5238 = vmatpush.bf16.msra.mxu0 0
  %5239 = vmatpush.bf16.msra.mxu0 0
  %5240 = vmatpush.bf16.msra.mxu0 0
  %5241 = vmatpush.bf16.msra.mxu0 0
  %5242 = vmatpush.bf16.msra.mxu0 %v5230
  %5243 = vmatpush.bf16.msra.mxu0 %v5229
  %5244 = vmatpush.bf16.msra.mxu0 %v5228
  %5245 = vmatpush.bf16.msra.mxu0 %v5227
  %5246 = vmatmul.bf16.gmra.mxu0 %v5236
  %v5247 = vpop.f32.mrf.mxu0
  %v5248 = vadd.f32 %v5209, %v5247
  %v5249 = vpop.f32.mrf.mxu0
  %v5250 = vadd.f32 %v5209, %v5249
  %5251 = vdwg.mxu0
  %v5252 = vld [vmem:[%s17] sm:$0xf]
  %v5253 = vld [vmem:[%s17 + $0x4] sm:$0xf]
  %v5254 = vld [vmem:[%s17 + $0x8] sm:$0xf]
  %v5255 = vld [vmem:[%s17 + $0xc] sm:$0xf]
  %v5260 = vunpack.c.l.b16 %v5252
  %v5261 = vunpack.c.l.b16 %v5253
  %v5262 = vunpack.c.l.b16 %v5254
  %v5263 = vunpack.c.l.b16 %v5255
  %v5264 = vpack.c.b16 %v5261, %v5260
  %v5265 = vpack.c.b16 %v5263, %v5262
  %v5269 = vsel %vm538, 0, 0
  %5271 = vmatpush.bf16.msra.mxu0 0
  %5272 = vmatpush.bf16.msra.mxu0 0
  %5273 = vmatpush.bf16.msra.mxu0 0
  %5274 = vmatpush.bf16.msra.mxu0 0
  %5275 = vmatpush.bf16.msra.mxu0 0
  %5276 = vmatpush.bf16.msra.mxu0 0
  %5277 = vmatpush.bf16.msra.mxu0 %v5265
  %5278 = vmatpush.bf16.msra.mxu0 %v5264
  %5279 = vmatmul.bf16.gmra.mxu0 %v5269
  %v5280 = vpop.f32.mrf.mxu0
  %v5281 = vadd.f32 0.0, %v5280
  %v5282 = vpop.f32.mrf.mxu0
  %5283 = vdwg.mxu0
  %v5284 = vadd.f32 %v5248, %v5281
  %v5285 = vxor.u32 %v5284, 2147483648
  %v5286 = vmul.f32 %v5285, 1.442695
  %v5287 = vpow.pop %v5286
  %v5288 = vadd.f32 %v5287, 1.0
  %v5289 = vrcp.pop %v5288
  %v5290 = vmul.f32 %v5288, %v5289
  %v5291 = vsub.f32 1.0, %v5290
  %v5292 = vmul.f32 %v5289, %v5291
  %v5293 = vadd.f32 %v5289, %v5292
  %vm5294 = vweird.f32 %v5288
  %vm5295 = vweird.f32 %v5289
  %vm5296 = vmor %vm5294, %vm5295
  %v5297 = vsel %vm5296, %v5289, %v5293
  %v5298 = vand.u32 2147483647, %v5288
  %vm5299 = vcmp.eq.f32.partialorder %v5298, 8.507059e+37
  %v5300 = vand.u32 %v5288, 2147483648
  %v5301 = vor.u32 1.1754944e-38, %v5300
  %v5302 = vsel %vm5299, %v5301, %v5297
  %v5303 = vmul.f32 1.0, %v5302
  %v5304 = vtanh.pop %v5284
  %v5305 = vmul.f32 %v5303, 0.0
  %5307 = vrot.lane.b32.xlu0 %v5304, 64
  %v5308 = vpop.permute.xlu0 %5307
  %v5310 = vmul.f32 %v5303, %v5308
  %5312 = vrot.lane.b32.xlu0 %v5310, 32
  %v5313 = vpop.permute.xlu0 %5312
  %v5315 = vadd.f32 %v5305, %v5313
  %v5316 = vtanh.pop %v5315
  %5318 = vrot.lane.b32.xlu0 %v5316, 64
  %v5319 = vpop.permute.xlu0 %5318
  %v5321 = vmul.f32 %v5303, %v5319
  %v5322 = vpack.c.bf16 %v5321, %v5321
  %5324 = vrot.lane.b32.xlu0 %v5322, 32
  %v5325 = vpop.permute.xlu0 %5324
  %v5327 = vsel %vm538, %v5325, 0
  %5329 = vmatpush.bf16.msra.mxu0 0
  %5330 = vmatpush.bf16.msra.mxu0 0
  %5331 = vmatpush.bf16.msra.mxu0 0
  %5332 = vmatpush.bf16.msra.mxu0 0
  %5333 = vmatpush.bf16.msra.mxu0 0
  %5334 = vmatpush.bf16.msra.mxu0 0
  %5335 = vmatpush.bf16.msra.mxu0 %v5265
  %5336 = vmatpush.bf16.msra.mxu0 %v5264
  %5337 = vmatmul.bf16.gmra.mxu0 %v5327
  %v5338 = vpop.f32.mrf.mxu0
  %v5339 = vadd.f32 0.0, %v5338
  %v5340 = vpop.f32.mrf.mxu0
  %5341 = vdwg.mxu0
  %v5343 = vrot.slane %v5339, 6
  %v5345 = vadd.f32 %v5248, %v5343
  %v5346 = vxor.u32 %v5345, 2147483648
  %v5347 = vmul.f32 %v5346, 1.442695
  %v5348 = vpow.pop %v5347
  %v5349 = vadd.f32 %v5348, 1.0
  %v5350 = vrcp.pop %v5349
  %v5351 = vmul.f32 %v5349, %v5350
  %v5352 = vsub.f32 1.0, %v5351
  %v5353 = vmul.f32 %v5350, %v5352
  %v5354 = vadd.f32 %v5350, %v5353
  %vm5355 = vweird.f32 %v5349
  %vm5356 = vweird.f32 %v5350
  %vm5357 = vmor %vm5355, %vm5356
  %v5358 = vsel %vm5357, %v5350, %v5354
  %v5359 = vand.u32 2147483647, %v5349
  %vm5360 = vcmp.eq.f32.partialorder %v5359, 8.507059e+37
  %v5361 = vand.u32 %v5349, 2147483648
  %v5362 = vor.u32 1.1754944e-38, %v5361
  %v5363 = vsel %vm5360, %v5362, %v5358
  %v5364 = vmul.f32 1.0, %v5363
  %v5365 = vtanh.pop %v5345
  %v5367 = vrot.slane %v5315, 6
  %v5369 = vmul.f32 %v5364, %v5367
  %5371 = vrot.lane.b32.xlu0 %v5365, 64
  %v5372 = vpop.permute.xlu0 %5371
  %v5374 = vmul.f32 %v5364, %v5372
  %5376 = vrot.lane.b32.xlu0 %v5374, 32
  %v5377 = vpop.permute.xlu0 %5376
  %v5379 = vadd.f32 %v5369, %v5377
  %v5380 = vtanh.pop %v5379
  %5382 = vrot.lane.b32.xlu0 %v5380, 64
  %v5383 = vpop.permute.xlu0 %5382
  %v5385 = vmul.f32 %v5364, %v5383
  %v5386 = vpack.c.bf16 %v5385, %v5385
  %v5388 = vrot.slane %v5386, 1
  %5389 = vrot.lane.b32.xlu0 %v5388, 32
  %v5390 = vpop.permute.xlu0 %5389
  %v5392 = vsel %vm538, %v5390, 0
  %5394 = vmatpush.bf16.msra.mxu0 0
  %5395 = vmatpush.bf16.msra.mxu0 0
  %5396 = vmatpush.bf16.msra.mxu0 0
  %5397 = vmatpush.bf16.msra.mxu0 0
  %5398 = vmatpush.bf16.msra.mxu0 0
  %5399 = vmatpush.bf16.msra.mxu0 0
  %5400 = vmatpush.bf16.msra.mxu0 %v5265
  %5401 = vmatpush.bf16.msra.mxu0 %v5264
  %5402 = vmatmul.bf16.gmra.mxu0 %v5392
  %v5403 = vpop.f32.mrf.mxu0
  %v5404 = vadd.f32 0.0, %v5403
  %v5405 = vpop.f32.mrf.mxu0
  %5406 = vdwg.mxu0
  %v5408 = vrot.slane %v5404, 4
  %v5410 = vadd.f32 %v5248, %v5408
  %v5411 = vxor.u32 %v5410, 2147483648
  %v5412 = vmul.f32 %v5411, 1.442695
  %v5413 = vpow.pop %v5412
  %v5414 = vadd.f32 %v5413, 1.0
  %v5415 = vrcp.pop %v5414
  %v5416 = vmul.f32 %v5414, %v5415
  %v5417 = vsub.f32 1.0, %v5416
  %v5418 = vmul.f32 %v5415, %v5417
  %v5419 = vadd.f32 %v5415, %v5418
  %vm5420 = vweird.f32 %v5414
  %vm5421 = vweird.f32 %v5415
  %vm5422 = vmor %vm5420, %vm5421
  %v5423 = vsel %vm5422, %v5415, %v5419
  %v5424 = vand.u32 2147483647, %v5414
  %vm5425 = vcmp.eq.f32.partialorder %v5424, 8.507059e+37
  %v5426 = vand.u32 %v5414, 2147483648
  %v5427 = vor.u32 1.1754944e-38, %v5426
  %v5428 = vsel %vm5425, %v5427, %v5423
  %v5429 = vmul.f32 1.0, %v5428
  %v5430 = vtanh.pop %v5410
  %v5432 = vrot.slane %v5379, 6
  %v5434 = vmul.f32 %v5429, %v5432
  %5436 = vrot.lane.b32.xlu0 %v5430, 64
  %v5437 = vpop.permute.xlu0 %5436
  %v5439 = vmul.f32 %v5429, %v5437
  %5441 = vrot.lane.b32.xlu0 %v5439, 32
  %v5442 = vpop.permute.xlu0 %5441
  %v5444 = vadd.f32 %v5434, %v5442
  %v5445 = vtanh.pop %v5444
  %5447 = vrot.lane.b32.xlu0 %v5445, 64
  %v5448 = vpop.permute.xlu0 %5447
  %v5450 = vmul.f32 %v5429, %v5448
  %v5451 = vpack.c.bf16 %v5450, %v5450
  %v5453 = vrot.slane %v5451, 2
  %5454 = vrot.lane.b32.xlu0 %v5453, 32
  %v5455 = vpop.permute.xlu0 %5454
  %v5457 = vsel %vm538, %v5455, 0
  %5459 = vmatpush.bf16.msra.mxu0 0
  %5460 = vmatpush.bf16.msra.mxu0 0
  %5461 = vmatpush.bf16.msra.mxu0 0
  %5462 = vmatpush.bf16.msra.mxu0 0
  %5463 = vmatpush.bf16.msra.mxu0 0
  %5464 = vmatpush.bf16.msra.mxu0 0
  %5465 = vmatpush.bf16.msra.mxu0 %v5265
  %5466 = vmatpush.bf16.msra.mxu0 %v5264
  %5467 = vmatmul.bf16.gmra.mxu0 %v5457
  %v5468 = vpop.f32.mrf.mxu0
  %v5469 = vadd.f32 0.0, %v5468
  %v5470 = vpop.f32.mrf.mxu0
  %5471 = vdwg.mxu0
  %v5473 = vrot.slane %v5469, 2
  %v5475 = vadd.f32 %v5248, %v5473
  %v5476 = vxor.u32 %v5475, 2147483648
  %v5477 = vmul.f32 %v5476, 1.442695
  %v5478 = vpow.pop %v5477
  %v5479 = vadd.f32 %v5478, 1.0
  %v5480 = vrcp.pop %v5479
  %v5481 = vmul.f32 %v5479, %v5480
  %v5482 = vsub.f32 1.0, %v5481
  %v5483 = vmul.f32 %v5480, %v5482
  %v5484 = vadd.f32 %v5480, %v5483
  %vm5485 = vweird.f32 %v5479
  %vm5486 = vweird.f32 %v5480
  %vm5487 = vmor %vm5485, %vm5486
  %v5488 = vsel %vm5487, %v5480, %v5484
  %v5489 = vand.u32 2147483647, %v5479
  %vm5490 = vcmp.eq.f32.partialorder %v5489, 8.507059e+37
  %v5491 = vand.u32 %v5479, 2147483648
  %v5492 = vor.u32 1.1754944e-38, %v5491
  %v5493 = vsel %vm5490, %v5492, %v5488
  %v5494 = vmul.f32 1.0, %v5493
  %v5495 = vtanh.pop %v5475
  %v5497 = vrot.slane %v5444, 6
  %v5499 = vmul.f32 %v5494, %v5497
  %5501 = vrot.lane.b32.xlu0 %v5495, 64
  %v5502 = vpop.permute.xlu0 %5501
  %v5504 = vmul.f32 %v5494, %v5502
  %5506 = vrot.lane.b32.xlu0 %v5504, 32
  %v5507 = vpop.permute.xlu0 %5506
  %v5509 = vadd.f32 %v5499, %v5507
  %v5510 = vtanh.pop %v5509
  %5512 = vrot.lane.b32.xlu0 %v5510, 64
  %v5513 = vpop.permute.xlu0 %5512
  %v5515 = vmul.f32 %v5494, %v5513
  %v5516 = vpack.c.bf16 %v5515, %v5515
  %v5518 = vrot.slane %v5516, 3
  %5519 = vrot.lane.b32.xlu0 %v5518, 32
  %v5520 = vpop.permute.xlu0 %5519
  %v5522 = vsel %vm538, %v5520, 0
  %5524 = vmatpush.bf16.msra.mxu0 0
  %5525 = vmatpush.bf16.msra.mxu0 0
  %5526 = vmatpush.bf16.msra.mxu0 0
  %5527 = vmatpush.bf16.msra.mxu0 0
  %5528 = vmatpush.bf16.msra.mxu0 0
  %5529 = vmatpush.bf16.msra.mxu0 0
  %5530 = vmatpush.bf16.msra.mxu0 %v5265
  %5531 = vmatpush.bf16.msra.mxu0 %v5264
  %5532 = vmatmul.bf16.gmra.mxu0 %v5522
  %v5533 = vpop.f32.mrf.mxu0
  %v5534 = vadd.f32 0.0, %v5533
  %v5535 = vpop.f32.mrf.mxu0
  %5536 = vdwg.mxu0
  %v5537 = vadd.f32 %v5250, %v5534
  %v5538 = vxor.u32 %v5537, 2147483648
  %v5539 = vmul.f32 %v5538, 1.442695
  %v5540 = vpow.pop %v5539
  %v5541 = vadd.f32 %v5540, 1.0
  %v5542 = vrcp.pop %v5541
  %v5543 = vmul.f32 %v5541, %v5542
  %v5544 = vsub.f32 1.0, %v5543
  %v5545 = vmul.f32 %v5542, %v5544
  %v5546 = vadd.f32 %v5542, %v5545
  %vm5547 = vweird.f32 %v5541
  %vm5548 = vweird.f32 %v5542
  %vm5549 = vmor %vm5547, %vm5548
  %v5550 = vsel %vm5549, %v5542, %v5546
  %v5551 = vand.u32 2147483647, %v5541
  %vm5552 = vcmp.eq.f32.partialorder %v5551, 8.507059e+37
  %v5553 = vand.u32 %v5541, 2147483648
  %v5554 = vor.u32 1.1754944e-38, %v5553
  %v5555 = vsel %vm5552, %v5554, %v5550
  %v5556 = vmul.f32 1.0, %v5555
  %v5557 = vtanh.pop %v5537
  %v5559 = vrot.slane %v5509, 6
  %v5561 = vmul.f32 %v5556, %v5559
  %5563 = vrot.lane.b32.xlu0 %v5557, 64
  %v5564 = vpop.permute.xlu0 %5563
  %v5566 = vmul.f32 %v5556, %v5564
  %5568 = vrot.lane.b32.xlu0 %v5566, 32
  %v5569 = vpop.permute.xlu0 %5568
  %v5571 = vadd.f32 %v5561, %v5569
  %v5572 = vtanh.pop %v5571
  %5574 = vrot.lane.b32.xlu0 %v5572, 64
  %v5575 = vpop.permute.xlu0 %5574
  %v5577 = vmul.f32 %v5556, %v5575
  %v5578 = vpack.c.bf16 %v5577, %v5577
  %5580 = vrot.lane.b32.xlu0 %v5578, 32
  %v5581 = vpop.permute.xlu0 %5580
  %v5583 = vsel %vm538, %v5581, 0
  %5585 = vmatpush.bf16.msra.mxu0 0
  %5586 = vmatpush.bf16.msra.mxu0 0
  %5587 = vmatpush.bf16.msra.mxu0 0
  %5588 = vmatpush.bf16.msra.mxu0 0
  %5589 = vmatpush.bf16.msra.mxu0 0
  %5590 = vmatpush.bf16.msra.mxu0 0
  %5591 = vmatpush.bf16.msra.mxu0 %v5265
  %5592 = vmatpush.bf16.msra.mxu0 %v5264
  %5593 = vmatmul.bf16.gmra.mxu0 %v5583
  %v5594 = vpop.f32.mrf.mxu0
  %v5595 = vadd.f32 0.0, %v5594
  %v5596 = vpop.f32.mrf.mxu0
  %5597 = vdwg.mxu0
  %v5599 = vrot.slane %v5595, 6
  %v5601 = vadd.f32 %v5250, %v5599
  %v5602 = vxor.u32 %v5601, 2147483648
  %v5603 = vmul.f32 %v5602, 1.442695
  %v5604 = vpow.pop %v5603
  %v5605 = vadd.f32 %v5604, 1.0
  %v5606 = vrcp.pop %v5605
  %v5607 = vmul.f32 %v5605, %v5606
  %v5608 = vsub.f32 1.0, %v5607
  %v5609 = vmul.f32 %v5606, %v5608
  %v5610 = vadd.f32 %v5606, %v5609
  %vm5611 = vweird.f32 %v5605
  %vm5612 = vweird.f32 %v5606
  %vm5613 = vmor %vm5611, %vm5612
  %v5614 = vsel %vm5613, %v5606, %v5610
  %v5615 = vand.u32 2147483647, %v5605
  %vm5616 = vcmp.eq.f32.partialorder %v5615, 8.507059e+37
  %v5617 = vand.u32 %v5605, 2147483648
  %v5618 = vor.u32 1.1754944e-38, %v5617
  %v5619 = vsel %vm5616, %v5618, %v5614
  %v5620 = vmul.f32 1.0, %v5619
  %v5621 = vtanh.pop %v5601
  %v5623 = vrot.slane %v5571, 6
  %v5625 = vmul.f32 %v5620, %v5623
  %5627 = vrot.lane.b32.xlu0 %v5621, 64
  %v5628 = vpop.permute.xlu0 %5627
  %v5630 = vmul.f32 %v5620, %v5628
  %5632 = vrot.lane.b32.xlu0 %v5630, 32
  %v5633 = vpop.permute.xlu0 %5632
  %v5635 = vadd.f32 %v5625, %v5633
  %v5636 = vtanh.pop %v5635
  %5638 = vrot.lane.b32.xlu0 %v5636, 64
  %v5639 = vpop.permute.xlu0 %5638
  %v5641 = vmul.f32 %v5620, %v5639
  %v5642 = vpack.c.bf16 %v5641, %v5641
  %v5644 = vrot.slane %v5642, 1
  %5645 = vrot.lane.b32.xlu0 %v5644, 32
  %v5646 = vpop.permute.xlu0 %5645
  %v5648 = vsel %vm538, %v5646, 0
  %5650 = vmatpush.bf16.msra.mxu0 0
  %5651 = vmatpush.bf16.msra.mxu0 0
  %5652 = vmatpush.bf16.msra.mxu0 0
  %5653 = vmatpush.bf16.msra.mxu0 0
  %5654 = vmatpush.bf16.msra.mxu0 0
  %5655 = vmatpush.bf16.msra.mxu0 0
  %5656 = vmatpush.bf16.msra.mxu0 %v5265
  %5657 = vmatpush.bf16.msra.mxu0 %v5264
  %5658 = vmatmul.bf16.gmra.mxu0 %v5648
  %v5659 = vpop.f32.mrf.mxu0
  %v5660 = vadd.f32 0.0, %v5659
  %v5661 = vpop.f32.mrf.mxu0
  %5662 = vdwg.mxu0
  %v5664 = vrot.slane %v5660, 4
  %v5666 = vadd.f32 %v5250, %v5664
  %v5667 = vxor.u32 %v5666, 2147483648
  %v5668 = vmul.f32 %v5667, 1.442695
  %v5669 = vpow.pop %v5668
  %v5670 = vadd.f32 %v5669, 1.0
  %v5671 = vrcp.pop %v5670
  %v5672 = vmul.f32 %v5670, %v5671
  %v5673 = vsub.f32 1.0, %v5672
  %v5674 = vmul.f32 %v5671, %v5673
  %v5675 = vadd.f32 %v5671, %v5674
  %vm5676 = vweird.f32 %v5670
  %vm5677 = vweird.f32 %v5671
  %vm5678 = vmor %vm5676, %vm5677
  %v5679 = vsel %vm5678, %v5671, %v5675
  %v5680 = vand.u32 2147483647, %v5670
  %vm5681 = vcmp.eq.f32.partialorder %v5680, 8.507059e+37
  %v5682 = vand.u32 %v5670, 2147483648
  %v5683 = vor.u32 1.1754944e-38, %v5682
  %v5684 = vsel %vm5681, %v5683, %v5679
  %v5685 = vmul.f32 1.0, %v5684
  %v5686 = vtanh.pop %v5666
  %v5688 = vrot.slane %v5635, 6
  %v5690 = vmul.f32 %v5685, %v5688
  %5692 = vrot.lane.b32.xlu0 %v5686, 64
  %v5693 = vpop.permute.xlu0 %5692
  %v5695 = vmul.f32 %v5685, %v5693
  %5697 = vrot.lane.b32.xlu0 %v5695, 32
  %v5698 = vpop.permute.xlu0 %5697
  %v5700 = vadd.f32 %v5690, %v5698
  %v5701 = vtanh.pop %v5700
  %5703 = vrot.lane.b32.xlu0 %v5701, 64
  %v5704 = vpop.permute.xlu0 %5703
  %v5706 = vmul.f32 %v5685, %v5704
  %v5707 = vpack.c.bf16 %v5706, %v5706
  %v5709 = vrot.slane %v5707, 2
  %5710 = vrot.lane.b32.xlu0 %v5709, 32
  %v5711 = vpop.permute.xlu0 %5710
  %v5713 = vsel %vm538, %v5711, 0
  %5715 = vmatpush.bf16.msra.mxu0 0
  %5716 = vmatpush.bf16.msra.mxu0 0
  %5717 = vmatpush.bf16.msra.mxu0 0
  %5718 = vmatpush.bf16.msra.mxu0 0
  %5719 = vmatpush.bf16.msra.mxu0 0
  %5720 = vmatpush.bf16.msra.mxu0 0
  %5721 = vmatpush.bf16.msra.mxu0 %v5265
  %5722 = vmatpush.bf16.msra.mxu0 %v5264
  %5723 = vmatmul.bf16.gmra.mxu0 %v5713
  %v5724 = vpop.f32.mrf.mxu0
  %v5725 = vadd.f32 0.0, %v5724
  %v5726 = vpop.f32.mrf.mxu0
  %5727 = vdwg.mxu0
  %v5729 = vrot.slane %v5725, 2
  %v5731 = vadd.f32 %v5250, %v5729
  %v5732 = vxor.u32 %v5731, 2147483648
  %v5733 = vmul.f32 %v5732, 1.442695
  %v5734 = vpow.pop %v5733
  %v5735 = vadd.f32 %v5734, 1.0
  %v5736 = vrcp.pop %v5735
  %v5737 = vmul.f32 %v5735, %v5736
  %v5738 = vsub.f32 1.0, %v5737
  %v5739 = vmul.f32 %v5736, %v5738
  %v5740 = vadd.f32 %v5736, %v5739
  %vm5741 = vweird.f32 %v5735
  %vm5742 = vweird.f32 %v5736
  %vm5743 = vmor %vm5741, %vm5742
  %v5744 = vsel %vm5743, %v5736, %v5740
  %v5745 = vand.u32 2147483647, %v5735
  %vm5746 = vcmp.eq.f32.partialorder %v5745, 8.507059e+37
  %v5747 = vand.u32 %v5735, 2147483648
  %v5748 = vor.u32 1.1754944e-38, %v5747
  %v5749 = vsel %vm5746, %v5748, %v5744
  %v5750 = vmul.f32 1.0, %v5749
  %v5751 = vtanh.pop %v5731
  %v5753 = vrot.slane %v5700, 6
  %v5755 = vmul.f32 %v5750, %v5753
  %5757 = vrot.lane.b32.xlu0 %v5751, 64
  %v5758 = vpop.permute.xlu0 %5757
  %v5760 = vmul.f32 %v5750, %v5758
  %5762 = vrot.lane.b32.xlu0 %v5760, 32
  %v5763 = vpop.permute.xlu0 %5762
  %v5765 = vadd.f32 %v5755, %v5763
  %v5766 = vtanh.pop %v5765
  %5768 = vrot.lane.b32.xlu0 %v5766, 64
  %v5769 = vpop.permute.xlu0 %5768
  %v5771 = vmul.f32 %v5750, %v5769
  %v5772 = vpack.c.bf16 %v5771, %v5771
  %v5773 = vld [vmem:[%s18] sm:$0xf]
  %v5774 = vld [vmem:[%s18 + $0x4] sm:$0xf]
  %v5775 = vld [vmem:[%s18 + $0x8] sm:$0xf]
  %v5776 = vld [vmem:[%s18 + $0xc] sm:$0xf]
  %v5777 = vld [vmem:[#allocation2] sm:$0x1]
  %v5779 = vperm.slane %v5777, 0
  %v5782 = vrot.slane %v5772, 3
  %5783 = vrot.lane.b32.xlu0 %v5782, 32
  %v5784 = vpop.permute.xlu0 %5783
  %v5789 = vunpack.c.l.b16 %v5773
  %v5790 = vunpack.c.l.b16 %v5774
  %v5791 = vunpack.c.l.b16 %v5775
  %v5792 = vunpack.c.l.b16 %v5776
  %v5793 = vpack.c.b16 %v5790, %v5789
  %v5794 = vpack.c.b16 %v5792, %v5791
  %v5798 = vsel %vm538, %v5784, 0
  %5800 = vmatpush.bf16.msra.mxu0 0
  %5801 = vmatpush.bf16.msra.mxu0 0
  %5802 = vmatpush.bf16.msra.mxu0 0
  %5803 = vmatpush.bf16.msra.mxu0 0
  %5804 = vmatpush.bf16.msra.mxu0 0
  %5805 = vmatpush.bf16.msra.mxu0 0
  %5806 = vmatpush.bf16.msra.mxu0 %v5794
  %5807 = vmatpush.bf16.msra.mxu0 %v5793
  %5808 = vmatmul.bf16.gmra.mxu0 %v5798
  %v5809 = vpop.f32.mrf.mxu0
  %v5810 = vadd.f32 %v5779, %v5809
  %v5811 = vpop.f32.mrf.mxu0
  %5812 = vdwg.mxu0
  %vm5813 = vcmask 1024
  %5814 = vst.msk [vmem:[%s20] sm:$0x3] %vm5813, %v5810
  // Predicated region
  $region82: #{hybrid_forward.1} parent=0 // pred_check
    _
  $region83: #{hybrid_forward.1} parent=0 // pred_check_branch
    %5816 = sbr.rel (0) target = $region85
  $region84: #{hybrid_forward.1} parent=0 // pred_region
    _
  $region85: #{hybrid_forward.1} parent=0 // pred_fallthru
    _
  // Predicated region
  $region86: #{hybrid_forward.1} parent=0 // pred_check
    _
  $region87: #{hybrid_forward.1} parent=0 // pred_check_branch
    %5818 = sbr.rel (0) target = $region89
  $region88: #{hybrid_forward.1} parent=0 // pred_region
    _
  $region89: #{hybrid_forward.1} parent=0 // pred_fallthru
    _

</llo_original>
